<compile_context>
chip_gen: v5e
topology: v5e:2x2
jax: 0.10.0
libtpu: 0.0.40
codegen_flags: <defaults>
</compile_context>

<pallas_src>
import functools

import jax
import jax.numpy as jnp
from jax.experimental import pallas as pl
from jax.experimental.pallas import tpu as pltpu


# ---------------------------------------------------------------------------
# Chip-adaptive configuration
# ---------------------------------------------------------------------------
def _vmem_capacity_bytes():
    try:
        return int(getattr(pltpu.get_tpu_info(), "vmem_capacity_bytes",
                           64 * 1024 * 1024))
    except Exception:
        return 64 * 1024 * 1024


_VMEM_CAP = _vmem_capacity_bytes()
_SMALL_VMEM = _VMEM_CAP <= 80 * 1024 * 1024         # v7x: 64 MiB per TensorCore
VMEM_LIMIT_BYTES = 48 * 1024 * 1024 if _SMALL_VMEM else 100 * 1024 * 1024
ROW_TILE_TARGET = 256 if _SMALL_VMEM else 512       # matmul-style row kernels
BN_TILE_TARGET = 512 if _SMALL_VMEM else 1024       # pure elementwise BN kernel
N_TILE_TARGET = 32 if _SMALL_VMEM else 64           # fused knn/gamma kernel
Q_TILE_TARGET = 256 if _SMALL_VMEM else 512         # SA attention query tile

# bf16 MXU operands; accumulation stays f32.  Flip to jnp.float32 for bit parity.
MXU_DTYPE = jnp.bfloat16
# attn ([B,N,K,F]) is the largest HBM write of the forward; emit it in bf16.
# Flip to jnp.float32 for exact dtype parity with the reference.
ATTN_DTYPE = jnp.bfloat16


def _mm(a, b):
    return jnp.dot(a.astype(MXU_DTYPE), b.astype(MXU_DTYPE),
                   preferred_element_type=jnp.float32)


def _dg(a, b, dims):
    return jax.lax.dot_general(a.astype(MXU_DTYPE), b.astype(MXU_DTYPE), dims,
                               preferred_element_type=jnp.float32)


def _pick_tile(m, target):
    """Largest multiple-of-8 divisor of m that is <= target (or m itself)."""
    if m <= target:
        return m
    t = (target // 8) * 8
    while t >= 8:
        if m % t == 0:
            return t
        t -= 8
    # TODO(synk): pad + mask the last block instead of falling back to the full
    # extent (a huge prime-ish M would otherwise blow the per-kernel VMEM limit).
    return m


def _cparams(semantics):
    return pltpu.CompilerParams(dimension_semantics=semantics,
                                vmem_limit_bytes=VMEM_LIMIT_BYTES)


# TODO(synk): constant-index weight/bias BlockSpecs below are still double-buffered by
# default; pipeline_mode=pl.Buffered(1) on them would free VMEM for bigger row tiles.


# ----------------------------------------------------------------------------
# Kernel 1: x = fc1(feat)  and  qkv = feat @ (W1@Wqkv) + b1@Wqkv   (folded fc1)
# ----------------------------------------------------------------------------
def _fc1_qkv_kernel(f_ref, w1_ref, b1_ref, wqkv_ref, bqkv_ref, x_ref, qkv_ref):
    f = f_ref[...]
    x_ref[...] = _mm(f, w1_ref[...]) + b1_ref[...]
    # q/k/v projection folded with fc1: exact up to fp reassociation, ~Fm/d_points
    # fewer FLOPs and no chained matmul dependency.
    qkv_ref[...] = _mm(f, wqkv_ref[...]) + bqkv_ref[...]


def fc1_qkv(feat, w1, b1, wqkv_folded, bqkv_folded):
    M, dp = feat.shape
    Fm = w1.shape[1]
    tm = _pick_tile(M, ROW_TILE_TARGET)
    return pl.pallas_call(
        _fc1_qkv_kernel,
        out_shape=(jax.ShapeDtypeStruct((M, Fm), jnp.float32),
                   jax.ShapeDtypeStruct((M, 3 * Fm), jnp.float32)),
        grid=(M // tm,),
        in_specs=[
            pl.BlockSpec((tm, dp), lambda i: (i, 0)),
            pl.BlockSpec((dp, Fm), lambda i: (0, 0)),
            pl.BlockSpec((1, Fm), lambda i: (0, 0)),
            pl.BlockSpec((dp, 3 * Fm), lambda i: (0, 0)),
            pl.BlockSpec((1, 3 * Fm), lambda i: (0, 0)),
        ],
        out_specs=(pl.BlockSpec((tm, Fm), lambda i: (i, 0)),
                   pl.BlockSpec((tm, 3 * Fm), lambda i: (i, 0))),
        compiler_params=_cparams(("parallel",)),
    )(feat, w1, b1.reshape(1, Fm), wqkv_folded, bqkv_folded.reshape(1, 3 * Fm))


# ----------------------------------------------------------------------------
# Kernel 2: fused fb-MLP + fc_gamma-MLP + log_softmax(K) + weighted reduction
# ----------------------------------------------------------------------------
def _gamma_attn_kernel(q_ref, kg_ref, vg_ref, raw_ref,
                       fw1_ref, fb1_ref, fw2_ref, fb2_ref,
                       gw1_ref, gb1_ref, gw2_ref, gb2_ref,
                       attn_ref, res_ref, *, scale):
    _, tn, k, f = kg_ref.shape
    c3 = raw_ref.shape[-1]
    # fb(knn_features) — intermediate never leaves VMEM.
    # TODO(synk): when K is not a multiple of 8 these (tn,K,*)<->(tn*K,*) reshapes cost
    # a sublane relayout per step; pad K to a multiple of 8 at gather time (and mask
    # padded neighbours in the softmax) at real model sizes.
    raw = raw_ref[0].reshape(tn * k, c3)
    h = jnp.maximum(_mm(raw, fw1_ref[...]) + fb1_ref[...], 0.0)
    kf = (_mm(h, fw2_ref[...]) + fb2_ref[...]).reshape(tn, k, f)
    # fc_gamma(q[:, :, None] - k + knn_f)
    pre = q_ref[0][:, None, :] - kg_ref[0] + kf
    h2 = jnp.maximum(_mm(pre.reshape(tn * k, f), gw1_ref[...]) + gb1_ref[...], 0.0)
    g = (_mm(h2, gw2_ref[...]) + gb2_ref[...]).reshape(tn, k, f)
    # log_softmax over the K neighbours (dim=-2)
    s = g * scale
    m = jnp.max(s, axis=1, keepdims=True)
    e = jnp.exp(s - m)
    lse = jnp.log(jnp.sum(e, axis=1, keepdims=True))
    lsm = s - m - lse
    attn_ref[0] = lsm.astype(attn_ref.dtype)
    # einsum('bmnf,bmnf->bmf', attn, v + knn_f)  (uses the log-softmax values directly)
    res_ref[0] = jnp.sum(lsm * (vg_ref[0] + kf), axis=1)


def gamma_attention(q, kg, vg, knn_raw, fw1, fb1, fw2, fb2, gw1, gb1, gw2, gb2):
    B, N, Fm = q.shape
    K = kg.shape[2]
    C3 = knn_raw.shape[-1]
    tn = _pick_tile(N, N_TILE_TARGET)
    scale = 1.0 / (float(Fm) ** 0.5)
    kernel = functools.partial(_gamma_attn_kernel, scale=scale)
    const2 = lambda b, n: (0, 0)
    return pl.pallas_call(
        kernel,
        out_shape=(jax.ShapeDtypeStruct((B, N, K, Fm), ATTN_DTYPE),
                   jax.ShapeDtypeStruct((B, N, Fm), jnp.float32)),
        grid=(B, N // tn),
        in_specs=[
            pl.BlockSpec((1, tn, Fm), lambda b, n: (b, n, 0)),
            pl.BlockSpec((1, tn, K, Fm), lambda b, n: (b, n, 0, 0)),
            pl.BlockSpec((1, tn, K, Fm), lambda b, n: (b, n, 0, 0)),
            pl.BlockSpec((1, tn, K, C3), lambda b, n: (b, n, 0, 0)),
            pl.BlockSpec((C3, Fm), const2), pl.BlockSpec((1, Fm), const2),
            pl.BlockSpec((Fm, Fm), const2), pl.BlockSpec((1, Fm), const2),
            pl.BlockSpec((Fm, Fm), const2), pl.BlockSpec((1, Fm), const2),
            pl.BlockSpec((Fm, Fm), const2), pl.BlockSpec((1, Fm), const2),
        ],
        out_specs=(pl.BlockSpec((1, tn, K, Fm), lambda b, n: (b, n, 0, 0)),
                   pl.BlockSpec((1, tn, Fm), lambda b, n: (b, n, 0))),
        compiler_params=_cparams(("parallel", "parallel")),
    )(q, kg, vg, knn_raw,
      fw1, fb1.reshape(1, Fm), fw2, fb2.reshape(1, Fm),
      gw1, gb1.reshape(1, Fm), gw2, gb2.reshape(1, Fm))


# ----------------------------------------------------------------------------
# Kernel 3: linear (+ optional residual subtraction) with per-tile BN partials
#           (row axis fully parallel — no serializing accumulator)
# ----------------------------------------------------------------------------
def _linear_stats_kernel(x_ref, w_ref, b_ref, y_ref, ps_ref, pq_ref):
    y = _mm(x_ref[...], w_ref[...]) + b_ref[...]
    y_ref[...] = y
    ps_ref[...] = jnp.sum(y, axis=0, keepdims=True)
    pq_ref[...] = jnp.sum(y * y, axis=0, keepdims=True)


def _diff_linear_stats_kernel(x_ref, s_ref, w_ref, b_ref, y_ref, ps_ref, pq_ref):
    y = _mm(x_ref[...] - s_ref[...], w_ref[...]) + b_ref[...]
    y_ref[...] = y
    ps_ref[...] = jnp.sum(y, axis=0, keepdims=True)
    pq_ref[...] = jnp.sum(y * y, axis=0, keepdims=True)


def linear_stats(x, w, b, sub=None):
    """y = (x [- sub]) @ w + b; also returns per-row-tile partial sum / sumsq of y."""
    M, Cin = x.shape
    Cout = w.shape[1]
    tm = _pick_tile(M, ROW_TILE_TARGET)
    T = M // tm
    out_shape = (jax.ShapeDtypeStruct((M, Cout), jnp.float32),
                 jax.ShapeDtypeStruct((T, Cout), jnp.float32),
                 jax.ShapeDtypeStruct((T, Cout), jnp.float32))
    out_specs = (pl.BlockSpec((tm, Cout), lambda i: (i, 0)),
                 pl.BlockSpec((1, Cout), lambda i: (i, 0)),
                 pl.BlockSpec((1, Cout), lambda i: (i, 0)))
    cp = _cparams(("parallel",))
    if sub is None:
        return pl.pallas_call(
            _linear_stats_kernel, out_shape=out_shape, grid=(T,),
            in_specs=[pl.BlockSpec((tm, Cin), lambda i: (i, 0)),
                      pl.BlockSpec((Cin, Cout), lambda i: (0, 0)),
                      pl.BlockSpec((1, Cout), lambda i: (0, 0))],
            out_specs=out_specs, compiler_params=cp,
        )(x, w, b.reshape(1, Cout))
    return pl.pallas_call(
        _diff_linear_stats_kernel, out_shape=out_shape, grid=(T,),
        in_specs=[pl.BlockSpec((tm, Cin), lambda i: (i, 0)),
                  pl.BlockSpec((tm, Cin), lambda i: (i, 0)),
                  pl.BlockSpec((Cin, Cout), lambda i: (0, 0)),
                  pl.BlockSpec((1, Cout), lambda i: (0, 0))],
        out_specs=out_specs, compiler_params=cp,
    )(x, sub, w, b.reshape(1, Cout))


def _bn_scale_shift(psum, pssq, gamma, beta, inv_n, eps):
    """Reduce per-tile partials and return per-channel scale/shift (training-mode BN)."""
    mean = jnp.sum(psum, axis=0, keepdims=True) * inv_n
    ex2 = jnp.sum(pssq, axis=0, keepdims=True) * inv_n
    var = jnp.maximum(ex2 - mean * mean, 0.0)       # clamp: E[x^2]-E[x]^2 can go < 0
    scale = jax.lax.rsqrt(var + eps) * gamma
    shift = beta - mean * scale
    return scale, shift


# ----------------------------------------------------------------------------
# Kernel 4: BN normalize + ReLU + residual add
# ----------------------------------------------------------------------------
def _bn_apply_kernel(y_ref, r_ref, g_ref, b_ref, ps_ref, pq_ref, o_ref, *, inv_n, eps):
    scale, shift = _bn_scale_shift(ps_ref[...], pq_ref[...], g_ref[...], b_ref[...],
                                   inv_n, eps)
    o_ref[...] = r_ref[...] + jnp.maximum(y_ref[...] * scale + shift, 0.0)


def bn_apply(y, residual, gamma, beta, psum, pssq, eps=1e-5):
    M, C = y.shape
    T = psum.shape[0]
    tm = _pick_tile(M, BN_TILE_TARGET)
    kernel = functools.partial(_bn_apply_kernel, inv_n=1.0 / float(M), eps=eps)
    return pl.pallas_call(
        kernel,
        out_shape=jax.ShapeDtypeStruct((M, C), jnp.float32),
        grid=(M // tm,),
        in_specs=[pl.BlockSpec((tm, C), lambda i: (i, 0)),
                  pl.BlockSpec((tm, C), lambda i: (i, 0)),
                  pl.BlockSpec((1, C), lambda i: (0, 0)),
                  pl.BlockSpec((1, C), lambda i: (0, 0)),
                  pl.BlockSpec((T, C), lambda i: (0, 0)),
                  pl.BlockSpec((T, C), lambda i: (0, 0))],
        out_specs=pl.BlockSpec((tm, C), lambda i: (i, 0)),
        compiler_params=_cparams(("parallel",)),
    )(y, residual, gamma.reshape(1, C), beta.reshape(1, C), psum, pssq)


# ----------------------------------------------------------------------------
# Kernel 5: fused (BN normalize + ReLU + residual) -> SA q_conv & v_conv projections
# ----------------------------------------------------------------------------
def _bn_sa_qv_kernel(y_ref, x_ref, g_ref, b_ref, ps_ref, pq_ref,
                     wq_ref, wv_ref, bv_ref, r_ref, xq_ref, xv_ref, *, inv_n, eps):
    scale, shift = _bn_scale_shift(ps_ref[...], pq_ref[...], g_ref[...], b_ref[...],
                                   inv_n, eps)
    r = x_ref[...] + jnp.maximum(y_ref[...] * scale + shift, 0.0)
    r_ref[...] = r
    xq_ref[...] = _mm(r, wq_ref[...])               # q_conv / k_conv: weight-tied, no bias
    xv_ref[...] = _mm(r, wv_ref[...]) + bv_ref[...]


def bn_sa_qv(y, x_rows, gamma, beta, psum, pssq, wq, wv, bv, eps=1e-5):
    M, C = y.shape
    C4 = wq.shape[1]
    T = psum.shape[0]
    tm = _pick_tile(M, ROW_TILE_TARGET)
    kernel = functools.partial(_bn_sa_qv_kernel, inv_n=1.0 / float(M), eps=eps)
    return pl.pallas_call(
        kernel,
        out_shape=(jax.ShapeDtypeStruct((M, C), jnp.float32),
                   jax.ShapeDtypeStruct((M, C4), jnp.float32),
                   jax.ShapeDtypeStruct((M, C), jnp.float32)),
        grid=(M // tm,),
        in_specs=[pl.BlockSpec((tm, C), lambda i: (i, 0)),
                  pl.BlockSpec((tm, C), lambda i: (i, 0)),
                  pl.BlockSpec((1, C), lambda i: (0, 0)),
                  pl.BlockSpec((1, C), lambda i: (0, 0)),
                  pl.BlockSpec((T, C), lambda i: (0, 0)),
                  pl.BlockSpec((T, C), lambda i: (0, 0)),
                  pl.BlockSpec((C, C4), lambda i: (0, 0)),
                  pl.BlockSpec((C, C), lambda i: (0, 0)),
                  pl.BlockSpec((1, C), lambda i: (0, 0))],
        out_specs=(pl.BlockSpec((tm, C), lambda i: (i, 0)),
                   pl.BlockSpec((tm, C4), lambda i: (i, 0)),
                   pl.BlockSpec((tm, C), lambda i: (i, 0))),
        compiler_params=_cparams(("parallel",)),
    )(y, x_rows, gamma.reshape(1, C), beta.reshape(1, C), psum, pssq,
      wq, wv, bv.reshape(1, C))


# ----------------------------------------------------------------------------
# Kernel 6: SA attention, tiled over query blocks (no full NxN matrix in VMEM)
#   energy_tile = xq_tile @ xq_full^T  (weight-tied q/k), exact row softmax,
#   numerator accumulated in the resident output block, column-sum denominator
#   in a VMEM scratch; final xr = num / (1e-9 + colsum).
# ----------------------------------------------------------------------------
def _sa_attn_kernel(xq_t_ref, xq_f_ref, xv_t_ref, xr_ref, den_acc):
    qi = pl.program_id(1)

    @pl.when(qi == 0)
    def _():
        xr_ref[...] = jnp.zeros_like(xr_ref)
        den_acc[...] = jnp.zeros_like(den_acc)

    xq_t = xq_t_ref[0]                               # (tq, C4)
    xq_f = xq_f_ref[0]                               # (N,  C4)
    energy = _dg(xq_t, xq_f, (((1,), (1,)), ((), ())))   # (tq, N)
    m = jnp.max(energy, axis=-1, keepdims=True)
    e = jnp.exp(energy - m)
    attention = e / jnp.sum(e, axis=-1, keepdims=True)   # softmax(dim=-1), exact per row

    # denominator: column sums over queries (dim=1 in torch), kept f32 and (N,1)-laid
    ones_col = jnp.ones((attention.shape[0], 1), jnp.float32)
    den_acc[...] += jax.lax.dot_general(
        attention, ones_col, (((0,), (0,)), ((), ())),
        preferred_element_type=jnp.float32)              # (N, 1)
    # numerator: xr[n, c] += sum_q A[q, n] * xv[q, c]
    xr_ref[0] += _dg(attention, xv_t_ref[0], (((0,), (0,)), ((), ())))   # (N, C)

    @pl.when(qi == pl.num_programs(1) - 1)
    def _():
        xr_ref[0] = xr_ref[0] * (1.0 / (1e-9 + den_acc[...]))


def sa_attention(xq, xv):
    B, N, C4 = xq.shape
    C = xv.shape[-1]
    tq = _pick_tile(N, Q_TILE_TARGET)
    return pl.pallas_call(
        _sa_attn_kernel,
        out_shape=jax.ShapeDtypeStruct((B, N, C), jnp.float32),
        grid=(B, N // tq),
        in_specs=[pl.BlockSpec((1, tq, C4), lambda b, q: (b, q, 0)),
                  pl.BlockSpec((1, N, C4), lambda b, q: (b, 0, 0)),
                  pl.BlockSpec((1, tq, C), lambda b, q: (b, q, 0))],
        out_specs=pl.BlockSpec((1, N, C), lambda b, q: (b, 0, 0)),
        scratch_shapes=[pltpu.VMEM((N, 1), jnp.float32)],
        compiler_params=_cparams(("parallel", "arbitrary")),
    )(xq, xq, xv)


# ----------------------------------------------------------------------------
# Glue (gather + parameters)
# ----------------------------------------------------------------------------
def index_points(points, idx):
    # points: [B, N, C], idx: [B, M, K] -> [B, M, K, C]
    # TODO(synk): neighbour gather stays an XLA gather; an in-kernel dynamic gather has
    # no robust Pallas lowering for arbitrary [B,N,K] index tensors.
    B = points.shape[0]
    batch = jnp.arange(B)[:, None, None]
    return points[batch, idx]


def init_params(key, d_points, d_model):
    ks = jax.random.split(key, 24)
    w = lambda k, shape: 0.1 * jax.random.normal(k, shape, jnp.float32)
    p = {}
    p["fc1_w"] = w(ks[0], (d_points, d_model)); p["fc1_b"] = w(ks[1], (d_model,))
    p["fc2_w"] = w(ks[2], (d_model, d_model)); p["fc2_b"] = w(ks[3], (d_model,))
    p["bn_g"] = 1.0 + w(ks[4], (d_model,));    p["bn_b"] = w(ks[5], (d_model,))
    p["fb_w1"] = w(ks[6], (d_points * 3, d_model)); p["fb_b1"] = w(ks[7], (d_model,))
    p["fb_w2"] = w(ks[8], (d_model, d_model));      p["fb_b2"] = w(ks[9], (d_model,))
    p["gamma_w1"] = w(ks[10], (d_model, d_model)); p["gamma_b1"] = w(ks[11], (d_model,))
    p["gamma_w2"] = w(ks[12], (d_model, d_model)); p["gamma_b2"] = w(ks[13], (d_model,))
    wq = w(ks[14], (d_model, d_model))
    wk = w(ks[15], (d_model, d_model))
    wv = w(ks[16], (d_model, d_model))
    p["w_qkv"] = jnp.concatenate([wq, wk, wv], axis=1)   # lane-dense fused q/k/v weight
    # SA_Layer params (q_conv weight == k_conv weight, both bias-free)
    p["sa_qk_w"] = w(ks[17], (d_model, d_model // 4))
    p["sa_v_w"] = w(ks[18], (d_model, d_model)); p["sa_v_b"] = w(ks[19], (d_model,))
    p["sa_t_w"] = w(ks[20], (d_model, d_model)); p["sa_t_b"] = w(ks[21], (d_model,))
    p["sa_bn_g"] = 1.0 + w(ks[22], (d_model,));  p["sa_bn_b"] = w(ks[23], (d_model,))
    # TODO(synk): fc_delta exists in __init__ but is never used in forward(); not created.
    return p


def gt_forward(p, features, knn_features, knn_idx):
    # features: [B, N, d_points]; knn_features: [B, 3*d_points, N, K] (torch channel-first)
    B, N, d_points = features.shape
    Fm = p["fc1_w"].shape[1]

    # single layout change of the raw knn features (torch's permute(0, 2, 3, 1))
    knn_raw = jnp.transpose(knn_features, (0, 2, 3, 1))          # [B, N, K, 3*d_points]

    # fold fc1 into the bias-free q/k/v projection (exact up to fp reassociation)
    wqkv_folded = jnp.dot(p["fc1_w"], p["w_qkv"])                # (d_points, 3*Fm)
    bqkv_folded = jnp.dot(p["fc1_b"], p["w_qkv"])                # (3*Fm,)

    # x = fc1(features); fused (folded) q/k/v projection
    feat_rows = features.reshape(B * N, d_points)
    x_rows, qkv_rows = fc1_qkv(feat_rows, p["fc1_w"], p["fc1_b"],
                               wqkv_folded, bqkv_folded)
    q = qkv_rows[:, :Fm].reshape(B, N, Fm)
    k = qkv_rows[:, Fm:2 * Fm].reshape(B, N, Fm)
    v = qkv_rows[:, 2 * Fm:].reshape(B, N, Fm)
    kg = index_points(k, knn_idx)                                # [B, N, K, Fm]
    vg = index_points(v, knn_idx)                                # [B, N, K, Fm]

    # fused: fb(knn), fc_gamma(q - k + knn_f), log_softmax over K, weighted sum
    attn, res = gamma_attention(
        q, kg, vg, knn_raw,
        p["fb_w1"], p["fb_b1"], p["fb_w2"], p["fb_b2"],
        p["gamma_w1"], p["gamma_b1"], p["gamma_w2"], p["gamma_b2"])

    # res = relu(bn(fc2(res))) + x, fused straight into the SA q/v projections
    y, s1, ss1 = linear_stats(res.reshape(B * N, Fm), p["fc2_w"], p["fc2_b"])
    r_rows, xq_rows, xv_rows = bn_sa_qv(y, x_rows, p["bn_g"], p["bn_b"], s1, ss1,
                                        p["sa_qk_w"], p["sa_v_w"], p["sa_v_b"])

    # ---- SA_Layer attention + trans_conv/BN/residual (row layout) ----
    xr_rows = sa_attention(xq_rows.reshape(B, N, Fm // 4),
                           xv_rows.reshape(B, N, Fm)).reshape(B * N, Fm)
    t, s2, ss2 = linear_stats(r_rows, p["sa_t_w"], p["sa_t_b"], sub=xr_rows)  # trans_conv(x - x_r)
    out_rows = bn_apply(t, r_rows, p["sa_bn_g"], p["sa_bn_b"], s2, ss2)       # x + relu(bn(.))

    return out_rows.reshape(B, N, Fm), attn


if __name__ == "__main__":
    # K chosen as a multiple of 8 (sublane-friendly neighbour count, see perf notes).
    B, N, K = 2, 16, 8
    d_points, d_model = 4, 32

    key = jax.random.PRNGKey(0)
    k1, k2, k3, k4 = jax.random.split(key, 4)
    features = jax.random.normal(k1, (B, N, d_points), jnp.float32)
    knn_features = jax.random.normal(k2, (B, d_points * 3, N, K), jnp.float32)
    knn_idx = jax.random.randint(k3, (B, N, K), 0, N)
    params = init_params(k4, d_points, d_model)

    out, attn = jax.jit(gt_forward)(params, features, knn_features, knn_idx)
    jax.block_until_ready((out, attn))

    assert out.shape == (B, N, d_model)
    assert attn.shape == (B, N, K, d_model)
    assert bool(jnp.all(jnp.isfinite(out.astype(jnp.float32))))
    assert bool(jnp.all(jnp.isfinite(attn.astype(jnp.float32))))
    print("KERNEL_OK")
</pallas_src>

<mosaic_0001>
module attributes {stable_mosaic.version = 11 : i64} {
  func.func @_fc1_qkv_kernel(%arg0: i32, %arg1: memref<32x4xf32, #tpu.memory_space<vmem>>, %arg2: memref<4x32xf32, #tpu.memory_space<vmem>>, %arg3: memref<1x32xf32, #tpu.memory_space<vmem>>, %arg4: memref<4x96xf32, #tpu.memory_space<vmem>>, %arg5: memref<1x96xf32, #tpu.memory_space<vmem>>, %arg6: memref<32x32xf32, #tpu.memory_space<vmem>>, %arg7: memref<32x96xf32, #tpu.memory_space<vmem>>) attributes {dimension_semantics = [#tpu.dimension_semantics<parallel>], iteration_bounds = array<i64: 1>, scalar_prefetch = 0 : i64, scratch_operands = 0 : i64, tpu.core_type = #tpu.core_type<tc>, window_params = [{transform_indices = @transform_0, window_bounds = array<i64: 32, 4>}, {pipeline_mode = #tpu.pipeline_mode<synchronous>, transform_indices = @transform_1, window_bounds = array<i64: 4, 32>}, {pipeline_mode = #tpu.pipeline_mode<synchronous>, transform_indices = @transform_2, window_bounds = array<i64: 1, 32>}, {pipeline_mode = #tpu.pipeline_mode<synchronous>, transform_indices = @transform_3, window_bounds = array<i64: 4, 96>}, {pipeline_mode = #tpu.pipeline_mode<synchronous>, transform_indices = @transform_4, window_bounds = array<i64: 1, 96>}, {transform_indices = @transform_5, window_bounds = array<i64: 32, 32>}, {transform_indices = @transform_6, window_bounds = array<i64: 32, 96>}]} {
    %c0 = arith.constant 0 : index
    %c0_0 = arith.constant 0 : index
    %0 = vector.load %arg1[%c0, %c0_0] : memref<32x4xf32, #tpu.memory_space<vmem>>, vector<32x4xf32>
    %c0_1 = arith.constant 0 : index
    %c0_2 = arith.constant 0 : index
    %1 = vector.load %arg2[%c0_1, %c0_2] : memref<4x32xf32, #tpu.memory_space<vmem>>, vector<4x32xf32>
    %2 = arith.truncf %0 : vector<32x4xf32> to vector<32x4xbf16>
    %3 = arith.truncf %1 : vector<4x32xf32> to vector<4x32xbf16>
    %cst = arith.constant dense<0.000000e+00> : vector<32x32xf32>
    %4 = tpu.matmul %2, %3, %cst {dimension_numbers = #tpu.dot_dimension_numbers<[1], [0], [0], [1], [0, 0, 1, 1], [], []>} : vector<32x4xbf16>, vector<4x32xbf16>, vector<32x32xf32> -> vector<32x32xf32>
    %c0_3 = arith.constant 0 : index
    %c0_4 = arith.constant 0 : index
    %5 = vector.load %arg3[%c0_3, %c0_4] : memref<1x32xf32, #tpu.memory_space<vmem>>, vector<1x32xf32>
    %6 = vector.broadcast %5 : vector<1x32xf32> to vector<32x32xf32>
    %7 = arith.addf %4, %6 : vector<32x32xf32>
    %c0_5 = arith.constant 0 : index
    %c0_6 = arith.constant 0 : index
    %8 = vector.load %arg6[%c0_5, %c0_6] : memref<32x32xf32, #tpu.memory_space<vmem>>, vector<32x32xf32>
    tpu.vector_store %arg6[%c0_5, %c0_6], %7 {strides = array<i32>} : memref<32x32xf32, #tpu.memory_space<vmem>>, vector<32x32xf32>,
    %c0_7 = arith.constant 0 : index
    %c0_8 = arith.constant 0 : index
    %9 = vector.load %arg4[%c0_7, %c0_8] : memref<4x96xf32, #tpu.memory_space<vmem>>, vector<4x96xf32>
    %10 = arith.truncf %0 : vector<32x4xf32> to vector<32x4xbf16>
    %11 = arith.truncf %9 : vector<4x96xf32> to vector<4x96xbf16>
    %cst_9 = arith.constant dense<0.000000e+00> : vector<32x96xf32>
    %12 = tpu.matmul %10, %11, %cst_9 {dimension_numbers = #tpu.dot_dimension_numbers<[1], [0], [0], [1], [0, 0, 1, 1], [], []>} : vector<32x4xbf16>, vector<4x96xbf16>, vector<32x96xf32> -> vector<32x96xf32>
    %c0_10 = arith.constant 0 : index
    %c0_11 = arith.constant 0 : index
    %13 = vector.load %arg5[%c0_10, %c0_11] : memref<1x96xf32, #tpu.memory_space<vmem>>, vector<1x96xf32>
    %14 = vector.broadcast %13 : vector<1x96xf32> to vector<32x96xf32>
    %15 = arith.addf %12, %14 : vector<32x96xf32>
    %c0_12 = arith.constant 0 : index
    %c0_13 = arith.constant 0 : index
    %16 = vector.load %arg7[%c0_12, %c0_13] : memref<32x96xf32, #tpu.memory_space<vmem>>, vector<32x96xf32>
    tpu.vector_store %arg7[%c0_12, %c0_13], %15 {strides = array<i32>} : memref<32x96xf32, #tpu.memory_space<vmem>>, vector<32x96xf32>,
    return
  }
  func.func @transform_0(%arg0: i32) -> (i32, i32) {
    %c0_i32 = arith.constant 0 : i32
    %c0_i32_0 = arith.constant 0 : i32
    return %arg0, %c0_i32 : i32, i32
  }
  func.func @transform_1(%arg0: i32) -> (i32, i32) {
    %c0_i32 = arith.constant 0 : i32
    %c0_i32_0 = arith.constant 0 : i32
    %c0_i32_1 = arith.constant 0 : i32
    return %c0_i32, %c0_i32_0 : i32, i32
  }
  func.func @transform_2(%arg0: i32) -> (i32, i32) {
    %c0_i32 = arith.constant 0 : i32
    %c0_i32_0 = arith.constant 0 : i32
    %c0_i32_1 = arith.constant 0 : i32
    return %c0_i32, %c0_i32_0 : i32, i32
  }
  func.func @transform_3(%arg0: i32) -> (i32, i32) {
    %c0_i32 = arith.constant 0 : i32
    %c0_i32_0 = arith.constant 0 : i32
    %c0_i32_1 = arith.constant 0 : i32
    return %c0_i32, %c0_i32_0 : i32, i32
  }
  func.func @transform_4(%arg0: i32) -> (i32, i32) {
    %c0_i32 = arith.constant 0 : i32
    %c0_i32_0 = arith.constant 0 : i32
    %c0_i32_1 = arith.constant 0 : i32
    return %c0_i32, %c0_i32_0 : i32, i32
  }
  func.func @transform_5(%arg0: i32) -> (i32, i32) {
    %c0_i32 = arith.constant 0 : i32
    %c0_i32_0 = arith.constant 0 : i32
    return %arg0, %c0_i32 : i32, i32
  }
  func.func @transform_6(%arg0: i32) -> (i32, i32) {
    %c0_i32 = arith.constant 0 : i32
    %c0_i32_0 = arith.constant 0 : i32
    return %arg0, %c0_i32 : i32, i32
  }
}

module attributes {stable_mosaic.version = 11 : i64} {
  func.func @_gamma_attn_kernel(%arg0: i32, %arg1: i32, %arg2: memref<1x16x32xf32, #tpu.memory_space<vmem>>, %arg3: memref<1x16x8x32xf32, #tpu.memory_space<vmem>>, %arg4: memref<1x16x8x32xf32, #tpu.memory_space<vmem>>, %arg5: memref<1x16x8x12xf32, #tpu.memory_space<vmem>>, %arg6: memref<12x32xf32, #tpu.memory_space<vmem>>, %arg7: memref<1x32xf32, #tpu.memory_space<vmem>>, %arg8: memref<32x32xf32, #tpu.memory_space<vmem>>, %arg9: memref<1x32xf32, #tpu.memory_space<vmem>>, %arg10: memref<32x32xf32, #tpu.memory_space<vmem>>, %arg11: memref<1x32xf32, #tpu.memory_space<vmem>>, %arg12: memref<32x32xf32, #tpu.memory_space<vmem>>, %arg13: memref<1x32xf32, #tpu.memory_space<vmem>>, %arg14: memref<1x16x8x32xbf16, #tpu.memory_space<vmem>>, %arg15: memref<1x16x32xf32, #tpu.memory_space<vmem>>) attributes {dimension_semantics = [#tpu.dimension_semantics<parallel>, #tpu.dimension_semantics<parallel>], iteration_bounds = array<i64: 2, 1>, scalar_prefetch = 0 : i64, scratch_operands = 0 : i64, tpu.core_type = #tpu.core_type<tc>, window_params = [{transform_indices = @transform_0, window_bounds = array<i64: 1, 16, 32>}, {transform_indices = @transform_1, window_bounds = array<i64: 1, 16, 8, 32>}, {transform_indices = @transform_2, window_bounds = array<i64: 1, 16, 8, 32>}, {transform_indices = @transform_3, window_bounds = array<i64: 1, 16, 8, 12>}, {pipeline_mode = #tpu.pipeline_mode<synchronous>, transform_indices = @transform_4, window_bounds = array<i64: 12, 32>}, {pipeline_mode = #tpu.pipeline_mode<synchronous>, transform_indices = @transform_5, window_bounds = array<i64: 1, 32>}, {pipeline_mode = #tpu.pipeline_mode<synchronous>, transform_indices = @transform_6, window_bounds = array<i64: 32, 32>}, {pipeline_mode = #tpu.pipeline_mode<synchronous>, transform_indices = @transform_7, window_bounds = array<i64: 1, 32>}, {pipeline_mode = #tpu.pipeline_mode<synchronous>, transform_indices = @transform_8, window_bounds = array<i64: 32, 32>}, {pipeline_mode = #tpu.pipeline_mode<synchronous>, transform_indices = @transform_9, window_bounds = array<i64: 1, 32>}, {pipeline_mode = #tpu.pipeline_mode<synchronous>, transform_indices = @transform_10, window_bounds = array<i64: 32, 32>}, {pipeline_mode = #tpu.pipeline_mode<synchronous>, transform_indices = @transform_11, window_bounds = array<i64: 1, 32>}, {transform_indices = @transform_12, window_bounds = array<i64: 1, 16, 8, 32>}, {transform_indices = @transform_13, window_bounds = array<i64: 1, 16, 32>}]} {
    %c0 = arith.constant 0 : index
    %c0_0 = arith.constant 0 : index
    %c0_1 = arith.constant 0 : index
    %c0_2 = arith.constant 0 : index
    %0 = vector.load %arg5[%c0, %c0_0, %c0_1, %c0_2] : memref<1x16x8x12xf32, #tpu.memory_space<vmem>>, vector<1x16x8x12xf32>
    %1 = vector.shape_cast %0 : vector<1x16x8x12xf32> to vector<16x8x12xf32>
    %2 = vector.shape_cast %1 : vector<16x8x12xf32> to vector<128x12xf32>
    %c0_3 = arith.constant 0 : index
    %c0_4 = arith.constant 0 : index
    %3 = vector.load %arg6[%c0_3, %c0_4] : memref<12x32xf32, #tpu.memory_space<vmem>>, vector<12x32xf32>
    %4 = arith.truncf %2 : vector<128x12xf32> to vector<128x12xbf16>
    %5 = arith.truncf %3 : vector<12x32xf32> to vector<12x32xbf16>
    %cst = arith.constant dense<0.000000e+00> : vector<128x32xf32>
    %6 = tpu.matmul %4, %5, %cst {dimension_numbers = #tpu.dot_dimension_numbers<[1], [0], [0], [1], [0, 0, 1, 1], [], []>} : vector<128x12xbf16>, vector<12x32xbf16>, vector<128x32xf32> -> vector<128x32xf32>
    %c0_5 = arith.constant 0 : index
    %c0_6 = arith.constant 0 : index
    %7 = vector.load %arg7[%c0_5, %c0_6] : memref<1x32xf32, #tpu.memory_space<vmem>>, vector<1x32xf32>
    %8 = vector.broadcast %7 : vector<1x32xf32> to vector<128x32xf32>
    %9 = arith.addf %6, %8 : vector<128x32xf32>
    %cst_7 = arith.constant 0.000000e+00 : f32
    %10 = vector.broadcast %cst_7 : f32 to vector<128x32xf32>
    %11 = arith.maximumf %9, %10 : vector<128x32xf32>
    %c0_8 = arith.constant 0 : index
    %c0_9 = arith.constant 0 : index
    %12 = vector.load %arg8[%c0_8, %c0_9] : memref<32x32xf32, #tpu.memory_space<vmem>>, vector<32x32xf32>
    %13 = arith.truncf %11 : vector<128x32xf32> to vector<128x32xbf16>
    %14 = arith.truncf %12 : vector<32x32xf32> to vector<32x32xbf16>
    %cst_10 = arith.constant dense<0.000000e+00> : vector<128x32xf32>
    %15 = tpu.matmul %13, %14, %cst_10 {dimension_numbers = #tpu.dot_dimension_numbers<[1], [0], [0], [1], [0, 0, 1, 1], [], []>} : vector<128x32xbf16>, vector<32x32xbf16>, vector<128x32xf32> -> vector<128x32xf32>
    %c0_11 = arith.constant 0 : index
    %c0_12 = arith.constant 0 : index
    %16 = vector.load %arg9[%c0_11, %c0_12] : memref<1x32xf32, #tpu.memory_space<vmem>>, vector<1x32xf32>
    %17 = vector.broadcast %16 : vector<1x32xf32> to vector<128x32xf32>
    %18 = arith.addf %15, %17 : vector<128x32xf32>
    %19 = vector.shape_cast %18 : vector<128x32xf32> to vector<16x8x32xf32>
    %c0_13 = arith.constant 0 : index
    %c0_14 = arith.constant 0 : index
    %c0_15 = arith.constant 0 : index
    %20 = vector.load %arg2[%c0_13, %c0_14, %c0_15] : memref<1x16x32xf32, #tpu.memory_space<vmem>>, vector<1x16x32xf32>
    %21 = vector.shape_cast %20 : vector<1x16x32xf32> to vector<16x32xf32>
    %22 = vector.shape_cast %21 : vector<16x32xf32> to vector<16x1x32xf32>
    %c0_16 = arith.constant 0 : index
    %c0_17 = arith.constant 0 : index
    %c0_18 = arith.constant 0 : index
    %c0_19 = arith.constant 0 : index
    %23 = vector.load %arg3[%c0_16, %c0_17, %c0_18, %c0_19] : memref<1x16x8x32xf32, #tpu.memory_space<vmem>>, vector<1x16x8x32xf32>
    %24 = vector.shape_cast %23 : vector<1x16x8x32xf32> to vector<16x8x32xf32>
    %25 = vector.broadcast %22 : vector<16x1x32xf32> to vector<16x8x32xf32>
    %26 = arith.subf %25, %24 : vector<16x8x32xf32>
    %27 = arith.addf %26, %19 : vector<16x8x32xf32>
    %28 = vector.shape_cast %27 : vector<16x8x32xf32> to vector<128x32xf32>
    %c0_20 = arith.constant 0 : index
    %c0_21 = arith.constant 0 : index
    %29 = vector.load %arg10[%c0_20, %c0_21] : memref<32x32xf32, #tpu.memory_space<vmem>>, vector<32x32xf32>
    %30 = arith.truncf %28 : vector<128x32xf32> to vector<128x32xbf16>
    %31 = arith.truncf %29 : vector<32x32xf32> to vector<32x32xbf16>
    %cst_22 = arith.constant dense<0.000000e+00> : vector<128x32xf32>
    %32 = tpu.matmul %30, %31, %cst_22 {dimension_numbers = #tpu.dot_dimension_numbers<[1], [0], [0], [1], [0, 0, 1, 1], [], []>} : vector<128x32xbf16>, vector<32x32xbf16>, vector<128x32xf32> -> vector<128x32xf32>
    %c0_23 = arith.constant 0 : index
    %c0_24 = arith.constant 0 : index
    %33 = vector.load %arg11[%c0_23, %c0_24] : memref<1x32xf32, #tpu.memory_space<vmem>>, vector<1x32xf32>
    %34 = vector.broadcast %33 : vector<1x32xf32> to vector<128x32xf32>
    %35 = arith.addf %32, %34 : vector<128x32xf32>
    %cst_25 = arith.constant 0.000000e+00 : f32
    %36 = vector.broadcast %cst_25 : f32 to vector<128x32xf32>
    %37 = arith.maximumf %35, %36 : vector<128x32xf32>
    %c0_26 = arith.constant 0 : index
    %c0_27 = arith.constant 0 : index
    %38 = vector.load %arg12[%c0_26, %c0_27] : memref<32x32xf32, #tpu.memory_space<vmem>>, vector<32x32xf32>
    %39 = arith.truncf %37 : vector<128x32xf32> to vector<128x32xbf16>
    %40 = arith.truncf %38 : vector<32x32xf32> to vector<32x32xbf16>
    %cst_28 = arith.constant dense<0.000000e+00> : vector<128x32xf32>
    %41 = tpu.matmul %39, %40, %cst_28 {dimension_numbers = #tpu.dot_dimension_numbers<[1], [0], [0], [1], [0, 0, 1, 1], [], []>} : vector<128x32xbf16>, vector<32x32xbf16>, vector<128x32xf32> -> vector<128x32xf32>
    %c0_29 = arith.constant 0 : index
    %c0_30 = arith.constant 0 : index
    %42 = vector.load %arg13[%c0_29, %c0_30] : memref<1x32xf32, #tpu.memory_space<vmem>>, vector<1x32xf32>
    %43 = vector.broadcast %42 : vector<1x32xf32> to vector<128x32xf32>
    %44 = arith.addf %41, %43 : vector<128x32xf32>
    %45 = vector.shape_cast %44 : vector<128x32xf32> to vector<16x8x32xf32>
    %cst_31 = arith.constant 0.176776692 : f32
    %46 = vector.broadcast %cst_31 : f32 to vector<16x8x32xf32>
    %47 = arith.mulf %45, %46 : vector<16x8x32xf32>
    %cst_32 = arith.constant dense<0xFF800000> : vector<16x32xf32>
    %48 = vector.multi_reduction <maximumf>, %47, %cst_32 [1] : vector<16x8x32xf32> to vector<16x32xf32>
    %49 = vector.shape_cast %48 : vector<16x32xf32> to vector<16x1x32xf32>
    %50 = vector.broadcast %49 : vector<16x1x32xf32> to vector<16x8x32xf32>
    %51 = arith.subf %47, %50 : vector<16x8x32xf32>
    %52 = math.exp %51 : vector<16x8x32xf32>
    %cst_33 = arith.constant dense<0.000000e+00> : vector<16x32xf32>
    %53 = vector.multi_reduction <add>, %52, %cst_33 [1] : vector<16x8x32xf32> to vector<16x32xf32>
    %54 = vector.shape_cast %53 : vector<16x32xf32> to vector<16x1x32xf32>
    %55 = math.log %54 : vector<16x1x32xf32>
    %56 = vector.broadcast %49 : vector<16x1x32xf32> to vector<16x8x32xf32>
    %57 = arith.subf %47, %56 : vector<16x8x32xf32>
    %58 = vector.broadcast %55 : vector<16x1x32xf32> to vector<16x8x32xf32>
    %59 = arith.subf %57, %58 : vector<16x8x32xf32>
    %60 = arith.truncf %59 : vector<16x8x32xf32> to vector<16x8x32xbf16>
    %c0_34 = arith.constant 0 : index
    %c0_35 = arith.constant 0 : index
    %c0_36 = arith.constant 0 : index
    %c0_37 = arith.constant 0 : index
    %61 = vector.load %arg14[%c0_34, %c0_35, %c0_36, %c0_37] : memref<1x16x8x32xbf16, #tpu.memory_space<vmem>>, vector<1x16x8x32xbf16>
    %62 = vector.shape_cast %61 : vector<1x16x8x32xbf16> to vector<16x8x32xbf16>
    %63 = vector.shape_cast %60 : vector<16x8x32xbf16> to vector<1x16x8x32xbf16>
    tpu.vector_store %arg14[%c0_34, %c0_35, %c0_36, %c0_37], %63 {strides = array<i32>} : memref<1x16x8x32xbf16, #tpu.memory_space<vmem>>, vector<1x16x8x32xbf16>,
    %c0_38 = arith.constant 0 : index
    %c0_39 = arith.constant 0 : index
    %c0_40 = arith.constant 0 : index
    %c0_41 = arith.constant 0 : index
    %64 = vector.load %arg4[%c0_38, %c0_39, %c0_40, %c0_41] : memref<1x16x8x32xf32, #tpu.memory_space<vmem>>, vector<1x16x8x32xf32>
    %65 = vector.shape_cast %64 : vector<1x16x8x32xf32> to vector<16x8x32xf32>
    %66 = arith.addf %65, %19 : vector<16x8x32xf32>
    %67 = arith.mulf %59, %66 : vector<16x8x32xf32>
    %cst_42 = arith.constant dense<0.000000e+00> : vector<16x32xf32>
    %68 = vector.multi_reduction <add>, %67, %cst_42 [1] : vector<16x8x32xf32> to vector<16x32xf32>
    %c0_43 = arith.constant 0 : index
    %c0_44 = arith.constant 0 : index
    %c0_45 = arith.constant 0 : index
    %69 = vector.load %arg15[%c0_43, %c0_44, %c0_45] : memref<1x16x32xf32, #tpu.memory_space<vmem>>, vector<1x16x32xf32>
    %70 = vector.shape_cast %69 : vector<1x16x32xf32> to vector<16x32xf32>
    %71 = vector.shape_cast %68 : vector<16x32xf32> to vector<1x16x32xf32>
    tpu.vector_store %arg15[%c0_43, %c0_44, %c0_45], %71 {strides = array<i32>} : memref<1x16x32xf32, #tpu.memory_space<vmem>>, vector<1x16x32xf32>,
    return
  }
  func.func @transform_0(%arg0: i32, %arg1: i32) -> (i32, i32, i32) {
    %c0_i32 = arith.constant 0 : i32
    %c0_i32_0 = arith.constant 0 : i32
    return %arg0, %arg1, %c0_i32 : i32, i32, i32
  }
  func.func @transform_1(%arg0: i32, %arg1: i32) -> (i32, i32, i32, i32) {
    %c0_i32 = arith.constant 0 : i32
    %c0_i32_0 = arith.constant 0 : i32
    %c0_i32_1 = arith.constant 0 : i32
    return %arg0, %arg1, %c0_i32, %c0_i32_0 : i32, i32, i32, i32
  }
  func.func @transform_2(%arg0: i32, %arg1: i32) -> (i32, i32, i32, i32) {
    %c0_i32 = arith.constant 0 : i32
    %c0_i32_0 = arith.constant 0 : i32
    %c0_i32_1 = arith.constant 0 : i32
    return %arg0, %arg1, %c0_i32, %c0_i32_0 : i32, i32, i32, i32
  }
  func.func @transform_3(%arg0: i32, %arg1: i32) -> (i32, i32, i32, i32) {
    %c0_i32 = arith.constant 0 : i32
    %c0_i32_0 = arith.constant 0 : i32
    %c0_i32_1 = arith.constant 0 : i32
    return %arg0, %arg1, %c0_i32, %c0_i32_0 : i32, i32, i32, i32
  }
  func.func @transform_4(%arg0: i32, %arg1: i32) -> (i32, i32) {
    %c0_i32 = arith.constant 0 : i32
    %c0_i32_0 = arith.constant 0 : i32
    %c0_i32_1 = arith.constant 0 : i32
    return %c0_i32, %c0_i32_0 : i32, i32
  }
  func.func @transform_5(%arg0: i32, %arg1: i32) -> (i32, i32) {
    %c0_i32 = arith.constant 0 : i32
    %c0_i32_0 = arith.constant 0 : i32
    %c0_i32_1 = arith.constant 0 : i32
    return %c0_i32, %c0_i32_0 : i32, i32
  }
  func.func @transform_6(%arg0: i32, %arg1: i32) -> (i32, i32) {
    %c0_i32 = arith.constant 0 : i32
    %c0_i32_0 = arith.constant 0 : i32
    %c0_i32_1 = arith.constant 0 : i32
    return %c0_i32, %c0_i32_0 : i32, i32
  }
  func.func @transform_7(%arg0: i32, %arg1: i32) -> (i32, i32) {
    %c0_i32 = arith.constant 0 : i32
    %c0_i32_0 = arith.constant 0 : i32
    %c0_i32_1 = arith.constant 0 : i32
    return %c0_i32, %c0_i32_0 : i32, i32
  }
  func.func @transform_8(%arg0: i32, %arg1: i32) -> (i32, i32) {
    %c0_i32 = arith.constant 0 : i32
    %c0_i32_0 = arith.constant 0 : i32
    %c0_i32_1 = arith.constant 0 : i32
    return %c0_i32, %c0_i32_0 : i32, i32
  }
  func.func @transform_9(%arg0: i32, %arg1: i32) -> (i32, i32) {
    %c0_i32 = arith.constant 0 : i32
    %c0_i32_0 = arith.constant 0 : i32
    %c0_i32_1 = arith.constant 0 : i32
    return %c0_i32, %c0_i32_0 : i32, i32
  }
  func.func @transform_10(%arg0: i32, %arg1: i32) -> (i32, i32) {
    %c0_i32 = arith.constant 0 : i32
    %c0_i32_0 = arith.constant 0 : i32
    %c0_i32_1 = arith.constant 0 : i32
    return %c0_i32, %c0_i32_0 : i32, i32
  }
  func.func @transform_11(%arg0: i32, %arg1: i32) -> (i32, i32) {
    %c0_i32 = arith.constant 0 : i32
    %c0_i32_0 = arith.constant 0 : i32
    %c0_i32_1 = arith.constant 0 : i32
    return %c0_i32, %c0_i32_0 : i32, i32
  }
  func.func @transform_12(%arg0: i32, %arg1: i32) -> (i32, i32, i32, i32) {
    %c0_i32 = arith.constant 0 : i32
    %c0_i32_0 = arith.constant 0 : i32
    %c0_i32_1 = arith.constant 0 : i32
    return %arg0, %arg1, %c0_i32, %c0_i32_0 : i32, i32, i32, i32
  }
  func.func @transform_13(%arg0: i32, %arg1: i32) -> (i32, i32, i32) {
    %c0_i32 = arith.constant 0 : i32
    %c0_i32_0 = arith.constant 0 : i32
    return %arg0, %arg1, %c0_i32 : i32, i32, i32
  }
}

module attributes {stable_mosaic.version = 11 : i64} {
  func.func @_bn_sa_qv_kernel(%arg0: i32, %arg1: memref<32x32xf32, #tpu.memory_space<vmem>>, %arg2: memref<32x32xf32, #tpu.memory_space<vmem>>, %arg3: memref<1x32xf32, #tpu.memory_space<vmem>>, %arg4: memref<1x32xf32, #tpu.memory_space<vmem>>, %arg5: memref<1x32xf32, #tpu.memory_space<vmem>>, %arg6: memref<1x32xf32, #tpu.memory_space<vmem>>, %arg7: memref<32x8xf32, #tpu.memory_space<vmem>>, %arg8: memref<32x32xf32, #tpu.memory_space<vmem>>, %arg9: memref<1x32xf32, #tpu.memory_space<vmem>>, %arg10: memref<32x32xf32, #tpu.memory_space<vmem>>, %arg11: memref<32x8xf32, #tpu.memory_space<vmem>>, %arg12: memref<32x32xf32, #tpu.memory_space<vmem>>) attributes {dimension_semantics = [#tpu.dimension_semantics<parallel>], iteration_bounds = array<i64: 1>, scalar_prefetch = 0 : i64, scratch_operands = 0 : i64, tpu.core_type = #tpu.core_type<tc>, window_params = [{transform_indices = @transform_0, window_bounds = array<i64: 32, 32>}, {transform_indices = @transform_1, window_bounds = array<i64: 32, 32>}, {pipeline_mode = #tpu.pipeline_mode<synchronous>, transform_indices = @transform_2, window_bounds = array<i64: 1, 32>}, {pipeline_mode = #tpu.pipeline_mode<synchronous>, transform_indices = @transform_3, window_bounds = array<i64: 1, 32>}, {pipeline_mode = #tpu.pipeline_mode<synchronous>, transform_indices = @transform_4, window_bounds = array<i64: 1, 32>}, {pipeline_mode = #tpu.pipeline_mode<synchronous>, transform_indices = @transform_5, window_bounds = array<i64: 1, 32>}, {pipeline_mode = #tpu.pipeline_mode<synchronous>, transform_indices = @transform_6, window_bounds = array<i64: 32, 8>}, {pipeline_mode = #tpu.pipeline_mode<synchronous>, transform_indices = @transform_7, window_bounds = array<i64: 32, 32>}, {pipeline_mode = #tpu.pipeline_mode<synchronous>, transform_indices = @transform_8, window_bounds = array<i64: 1, 32>}, {transform_indices = @transform_9, window_bounds = array<i64: 32, 32>}, {transform_indices = @transform_10, window_bounds = array<i64: 32, 8>}, {transform_indices = @transform_11, window_bounds = array<i64: 32, 32>}]} {
    %c0 = arith.constant 0 : index
    %c0_0 = arith.constant 0 : index
    %0 = vector.load %arg5[%c0, %c0_0] : memref<1x32xf32, #tpu.memory_space<vmem>>, vector<1x32xf32>
    %c0_1 = arith.constant 0 : index
    %c0_2 = arith.constant 0 : index
    %1 = vector.load %arg6[%c0_1, %c0_2] : memref<1x32xf32, #tpu.memory_space<vmem>>, vector<1x32xf32>
    %c0_3 = arith.constant 0 : index
    %c0_4 = arith.constant 0 : index
    %2 = vector.load %arg3[%c0_3, %c0_4] : memref<1x32xf32, #tpu.memory_space<vmem>>, vector<1x32xf32>
    %c0_5 = arith.constant 0 : index
    %c0_6 = arith.constant 0 : index
    %3 = vector.load %arg4[%c0_5, %c0_6] : memref<1x32xf32, #tpu.memory_space<vmem>>, vector<1x32xf32>
    %cst = arith.constant dense<0.000000e+00> : vector<32xf32>
    %4 = vector.multi_reduction <add>, %0, %cst [0] : vector<1x32xf32> to vector<32xf32>
    %5 = vector.shape_cast %4 : vector<32xf32> to vector<1x32xf32>
    %cst_7 = arith.constant 3.125000e-02 : f32
    %6 = vector.broadcast %cst_7 : f32 to vector<1x32xf32>
    %7 = arith.mulf %5, %6 : vector<1x32xf32>
    %cst_8 = arith.constant dense<0.000000e+00> : vector<32xf32>
    %8 = vector.multi_reduction <add>, %1, %cst_8 [0] : vector<1x32xf32> to vector<32xf32>
    %9 = vector.shape_cast %8 : vector<32xf32> to vector<1x32xf32>
    %cst_9 = arith.constant 3.125000e-02 : f32
    %10 = vector.broadcast %cst_9 : f32 to vector<1x32xf32>
    %11 = arith.mulf %9, %10 : vector<1x32xf32>
    %12 = arith.mulf %7, %7 : vector<1x32xf32>
    %13 = arith.subf %11, %12 : vector<1x32xf32>
    %cst_10 = arith.constant 0.000000e+00 : f32
    %14 = vector.broadcast %cst_10 : f32 to vector<1x32xf32>
    %15 = arith.maximumf %13, %14 : vector<1x32xf32>
    %cst_11 = arith.constant 9.99999974E-6 : f32
    %16 = vector.broadcast %cst_11 : f32 to vector<1x32xf32>
    %17 = arith.addf %15, %16 : vector<1x32xf32>
    %18 = math.rsqrt %17 : vector<1x32xf32>
    %19 = arith.mulf %18, %2 : vector<1x32xf32>
    %20 = arith.mulf %7, %19 : vector<1x32xf32>
    %21 = arith.subf %3, %20 : vector<1x32xf32>
    %c0_12 = arith.constant 0 : index
    %c0_13 = arith.constant 0 : index
    %22 = vector.load %arg2[%c0_12, %c0_13] : memref<32x32xf32, #tpu.memory_space<vmem>>, vector<32x32xf32>
    %c0_14 = arith.constant 0 : index
    %c0_15 = arith.constant 0 : index
    %23 = vector.load %arg1[%c0_14, %c0_15] : memref<32x32xf32, #tpu.memory_space<vmem>>, vector<32x32xf32>
    %24 = vector.broadcast %19 : vector<1x32xf32> to vector<32x32xf32>
    %25 = arith.mulf %23, %24 : vector<32x32xf32>
    %26 = vector.broadcast %21 : vector<1x32xf32> to vector<32x32xf32>
    %27 = arith.addf %25, %26 : vector<32x32xf32>
    %cst_16 = arith.constant 0.000000e+00 : f32
    %28 = vector.broadcast %cst_16 : f32 to vector<32x32xf32>
    %29 = arith.maximumf %27, %28 : vector<32x32xf32>
    %30 = arith.addf %22, %29 : vector<32x32xf32>
    %c0_17 = arith.constant 0 : index
    %c0_18 = arith.constant 0 : index
    %31 = vector.load %arg10[%c0_17, %c0_18] : memref<32x32xf32, #tpu.memory_space<vmem>>, vector<32x32xf32>
    tpu.vector_store %arg10[%c0_17, %c0_18], %30 {strides = array<i32>} : memref<32x32xf32, #tpu.memory_space<vmem>>, vector<32x32xf32>,
    %c0_19 = arith.constant 0 : index
    %c0_20 = arith.constant 0 : index
    %32 = vector.load %arg7[%c0_19, %c0_20] : memref<32x8xf32, #tpu.memory_space<vmem>>, vector<32x8xf32>
    %33 = arith.truncf %30 : vector<32x32xf32> to vector<32x32xbf16>
    %34 = arith.truncf %32 : vector<32x8xf32> to vector<32x8xbf16>
    %cst_21 = arith.constant dense<0.000000e+00> : vector<32x8xf32>
    %35 = tpu.matmul %33, %34, %cst_21 {dimension_numbers = #tpu.dot_dimension_numbers<[1], [0], [0], [1], [0, 0, 1, 1], [], []>} : vector<32x32xbf16>, vector<32x8xbf16>, vector<32x8xf32> -> vector<32x8xf32>
    %c0_22 = arith.constant 0 : index
    %c0_23 = arith.constant 0 : index
    %36 = vector.load %arg11[%c0_22, %c0_23] : memref<32x8xf32, #tpu.memory_space<vmem>>, vector<32x8xf32>
    tpu.vector_store %arg11[%c0_22, %c0_23], %35 {strides = array<i32>} : memref<32x8xf32, #tpu.memory_space<vmem>>, vector<32x8xf32>,
    %c0_24 = arith.constant 0 : index
    %c0_25 = arith.constant 0 : index
    %37 = vector.load %arg8[%c0_24, %c0_25] : memref<32x32xf32, #tpu.memory_space<vmem>>, vector<32x32xf32>
    %38 = arith.truncf %30 : vector<32x32xf32> to vector<32x32xbf16>
    %39 = arith.truncf %37 : vector<32x32xf32> to vector<32x32xbf16>
    %cst_26 = arith.constant dense<0.000000e+00> : vector<32x32xf32>
    %40 = tpu.matmul %38, %39, %cst_26 {dimension_numbers = #tpu.dot_dimension_numbers<[1], [0], [0], [1], [0, 0, 1, 1], [], []>} : vector<32x32xbf16>, vector<32x32xbf16>, vector<32x32xf32> -> vector<32x32xf32>
    %c0_27 = arith.constant 0 : index
    %c0_28 = arith.constant 0 : index
    %41 = vector.load %arg9[%c0_27, %c0_28] : memref<1x32xf32, #tpu.memory_space<vmem>>, vector<1x32xf32>
    %42 = vector.broadcast %41 : vector<1x32xf32> to vector<32x32xf32>
    %43 = arith.addf %40, %42 : vector<32x32xf32>
    %c0_29 = arith.constant 0 : index
    %c0_30 = arith.constant 0 : index
    %44 = vector.load %arg12[%c0_29, %c0_30] : memref<32x32xf32, #tpu.memory_space<vmem>>, vector<32x32xf32>
    tpu.vector_store %arg12[%c0_29, %c0_30], %43 {strides = array<i32>} : memref<32x32xf32, #tpu.memory_space<vmem>>, vector<32x32xf32>,
    return
  }
  func.func @transform_0(%arg0: i32) -> (i32, i32) {
    %c0_i32 = arith.constant 0 : i32
    %c0_i32_0 = arith.constant 0 : i32
    return %arg0, %c0_i32 : i32, i32
  }
  func.func @transform_1(%arg0: i32) -> (i32, i32) {
    %c0_i32 = arith.constant 0 : i32
    %c0_i32_0 = arith.constant 0 : i32
    return %arg0, %c0_i32 : i32, i32
  }
  func.func @transform_2(%arg0: i32) -> (i32, i32) {
    %c0_i32 = arith.constant 0 : i32
    %c0_i32_0 = arith.constant 0 : i32
    %c0_i32_1 = arith.constant 0 : i32
    return %c0_i32, %c0_i32_0 : i32, i32
  }
  func.func @transform_3(%arg0: i32) -> (i32, i32) {
    %c0_i32 = arith.constant 0 : i32
    %c0_i32_0 = arith.constant 0 : i32
    %c0_i32_1 = arith.constant 0 : i32
    return %c0_i32, %c0_i32_0 : i32, i32
  }
  func.func @transform_4(%arg0: i32) -> (i32, i32) {
    %c0_i32 = arith.constant 0 : i32
    %c0_i32_0 = arith.constant 0 : i32
    %c0_i32_1 = arith.constant 0 : i32
    return %c0_i32, %c0_i32_0 : i32, i32
  }
  func.func @transform_5(%arg0: i32) -> (i32, i32) {
    %c0_i32 = arith.constant 0 : i32
    %c0_i32_0 = arith.constant 0 : i32
    %c0_i32_1 = arith.constant 0 : i32
    return %c0_i32, %c0_i32_0 : i32, i32
  }
  func.func @transform_6(%arg0: i32) -> (i32, i32) {
    %c0_i32 = arith.constant 0 : i32
    %c0_i32_0 = arith.constant 0 : i32
    %c0_i32_1 = arith.constant 0 : i32
    return %c0_i32, %c0_i32_0 : i32, i32
  }
  func.func @transform_7(%arg0: i32) -> (i32, i32) {
    %c0_i32 = arith.constant 0 : i32
    %c0_i32_0 = arith.constant 0 : i32
    %c0_i32_1 = arith.constant 0 : i32
    return %c0_i32, %c0_i32_0 : i32, i32
  }
  func.func @transform_8(%arg0: i32) -> (i32, i32) {
    %c0_i32 = arith.constant 0 : i32
    %c0_i32_0 = arith.constant 0 : i32
    %c0_i32_1 = arith.constant 0 : i32
    return %c0_i32, %c0_i32_0 : i32, i32
  }
  func.func @transform_9(%arg0: i32) -> (i32, i32) {
    %c0_i32 = arith.constant 0 : i32
    %c0_i32_0 = arith.constant 0 : i32
    return %arg0, %c0_i32 : i32, i32
  }
  func.func @transform_10(%arg0: i32) -> (i32, i32) {
    %c0_i32 = arith.constant 0 : i32
    %c0_i32_0 = arith.constant 0 : i32
    return %arg0, %c0_i32 : i32, i32
  }
  func.func @transform_11(%arg0: i32) -> (i32, i32) {
    %c0_i32 = arith.constant 0 : i32
    %c0_i32_0 = arith.constant 0 : i32
    return %arg0, %c0_i32 : i32, i32
  }
}

module attributes {stable_mosaic.version = 11 : i64} {
  func.func @_linear_stats_kernel(%arg0: i32, %arg1: memref<32x32xf32, #tpu.memory_space<vmem>>, %arg2: memref<32x32xf32, #tpu.memory_space<vmem>>, %arg3: memref<1x32xf32, #tpu.memory_space<vmem>>, %arg4: memref<32x32xf32, #tpu.memory_space<vmem>>, %arg5: memref<1x32xf32, #tpu.memory_space<vmem>>, %arg6: memref<1x32xf32, #tpu.memory_space<vmem>>) attributes {dimension_semantics = [#tpu.dimension_semantics<parallel>], iteration_bounds = array<i64: 1>, scalar_prefetch = 0 : i64, scratch_operands = 0 : i64, tpu.core_type = #tpu.core_type<tc>, window_params = [{transform_indices = @transform_0, window_bounds = array<i64: 32, 32>}, {pipeline_mode = #tpu.pipeline_mode<synchronous>, transform_indices = @transform_1, window_bounds = array<i64: 32, 32>}, {pipeline_mode = #tpu.pipeline_mode<synchronous>, transform_indices = @transform_2, window_bounds = array<i64: 1, 32>}, {transform_indices = @transform_3, window_bounds = array<i64: 32, 32>}, {transform_indices = @transform_4, window_bounds = array<i64: 1, 32>}, {transform_indices = @transform_5, window_bounds = array<i64: 1, 32>}]} {
    %c0 = arith.constant 0 : index
    %c0_0 = arith.constant 0 : index
    %0 = vector.load %arg1[%c0, %c0_0] : memref<32x32xf32, #tpu.memory_space<vmem>>, vector<32x32xf32>
    %c0_1 = arith.constant 0 : index
    %c0_2 = arith.constant 0 : index
    %1 = vector.load %arg2[%c0_1, %c0_2] : memref<32x32xf32, #tpu.memory_space<vmem>>, vector<32x32xf32>
    %2 = arith.truncf %0 : vector<32x32xf32> to vector<32x32xbf16>
    %3 = arith.truncf %1 : vector<32x32xf32> to vector<32x32xbf16>
    %cst = arith.constant dense<0.000000e+00> : vector<32x32xf32>
    %4 = tpu.matmul %2, %3, %cst {dimension_numbers = #tpu.dot_dimension_numbers<[1], [0], [0], [1], [0, 0, 1, 1], [], []>} : vector<32x32xbf16>, vector<32x32xbf16>, vector<32x32xf32> -> vector<32x32xf32>
    %c0_3 = arith.constant 0 : index
    %c0_4 = arith.constant 0 : index
    %5 = vector.load %arg3[%c0_3, %c0_4] : memref<1x32xf32, #tpu.memory_space<vmem>>, vector<1x32xf32>
    %6 = vector.broadcast %5 : vector<1x32xf32> to vector<32x32xf32>
    %7 = arith.addf %4, %6 : vector<32x32xf32>
    %c0_5 = arith.constant 0 : index
    %c0_6 = arith.constant 0 : index
    %8 = vector.load %arg4[%c0_5, %c0_6] : memref<32x32xf32, #tpu.memory_space<vmem>>, vector<32x32xf32>
    tpu.vector_store %arg4[%c0_5, %c0_6], %7 {strides = array<i32>} : memref<32x32xf32, #tpu.memory_space<vmem>>, vector<32x32xf32>,
    %cst_7 = arith.constant dense<0.000000e+00> : vector<32xf32>
    %9 = vector.multi_reduction <add>, %7, %cst_7 [0] : vector<32x32xf32> to vector<32xf32>
    %10 = vector.shape_cast %9 : vector<32xf32> to vector<1x32xf32>
    %c0_8 = arith.constant 0 : index
    %c0_9 = arith.constant 0 : index
    %11 = vector.load %arg5[%c0_8, %c0_9] : memref<1x32xf32, #tpu.memory_space<vmem>>, vector<1x32xf32>
    tpu.vector_store %arg5[%c0_8, %c0_9], %10 {strides = array<i32>} : memref<1x32xf32, #tpu.memory_space<vmem>>, vector<1x32xf32>,
    %12 = arith.mulf %7, %7 : vector<32x32xf32>
    %cst_10 = arith.constant dense<0.000000e+00> : vector<32xf32>
    %13 = vector.multi_reduction <add>, %12, %cst_10 [0] : vector<32x32xf32> to vector<32xf32>
    %14 = vector.shape_cast %13 : vector<32xf32> to vector<1x32xf32>
    %c0_11 = arith.constant 0 : index
    %c0_12 = arith.constant 0 : index
    %15 = vector.load %arg6[%c0_11, %c0_12] : memref<1x32xf32, #tpu.memory_space<vmem>>, vector<1x32xf32>
    tpu.vector_store %arg6[%c0_11, %c0_12], %14 {strides = array<i32>} : memref<1x32xf32, #tpu.memory_space<vmem>>, vector<1x32xf32>,
    return
  }
  func.func @transform_0(%arg0: i32) -> (i32, i32) {
    %c0_i32 = arith.constant 0 : i32
    %c0_i32_0 = arith.constant 0 : i32
    return %arg0, %c0_i32 : i32, i32
  }
  func.func @transform_1(%arg0: i32) -> (i32, i32) {
    %c0_i32 = arith.constant 0 : i32
    %c0_i32_0 = arith.constant 0 : i32
    %c0_i32_1 = arith.constant 0 : i32
    return %c0_i32, %c0_i32_0 : i32, i32
  }
  func.func @transform_2(%arg0: i32) -> (i32, i32) {
    %c0_i32 = arith.constant 0 : i32
    %c0_i32_0 = arith.constant 0 : i32
    %c0_i32_1 = arith.constant 0 : i32
    return %c0_i32, %c0_i32_0 : i32, i32
  }
  func.func @transform_3(%arg0: i32) -> (i32, i32) {
    %c0_i32 = arith.constant 0 : i32
    %c0_i32_0 = arith.constant 0 : i32
    return %arg0, %c0_i32 : i32, i32
  }
  func.func @transform_4(%arg0: i32) -> (i32, i32) {
    %c0_i32 = arith.constant 0 : i32
    %c0_i32_0 = arith.constant 0 : i32
    return %arg0, %c0_i32 : i32, i32
  }
  func.func @transform_5(%arg0: i32) -> (i32, i32) {
    %c0_i32 = arith.constant 0 : i32
    %c0_i32_0 = arith.constant 0 : i32
    return %arg0, %c0_i32 : i32, i32
  }
}

module attributes {stable_mosaic.version = 11 : i64} {
  func.func @_diff_linear_stats_kernel(%arg0: i32, %arg1: memref<32x32xf32, #tpu.memory_space<vmem>>, %arg2: memref<32x32xf32, #tpu.memory_space<vmem>>, %arg3: memref<32x32xf32, #tpu.memory_space<vmem>>, %arg4: memref<1x32xf32, #tpu.memory_space<vmem>>, %arg5: memref<32x32xf32, #tpu.memory_space<vmem>>, %arg6: memref<1x32xf32, #tpu.memory_space<vmem>>, %arg7: memref<1x32xf32, #tpu.memory_space<vmem>>) attributes {dimension_semantics = [#tpu.dimension_semantics<parallel>], iteration_bounds = array<i64: 1>, scalar_prefetch = 0 : i64, scratch_operands = 0 : i64, tpu.core_type = #tpu.core_type<tc>, window_params = [{transform_indices = @transform_0, window_bounds = array<i64: 32, 32>}, {transform_indices = @transform_1, window_bounds = array<i64: 32, 32>}, {pipeline_mode = #tpu.pipeline_mode<synchronous>, transform_indices = @transform_2, window_bounds = array<i64: 32, 32>}, {pipeline_mode = #tpu.pipeline_mode<synchronous>, transform_indices = @transform_3, window_bounds = array<i64: 1, 32>}, {transform_indices = @transform_4, window_bounds = array<i64: 32, 32>}, {transform_indices = @transform_5, window_bounds = array<i64: 1, 32>}, {transform_indices = @transform_6, window_bounds = array<i64: 1, 32>}]} {
    %c0 = arith.constant 0 : index
    %c0_0 = arith.constant 0 : index
    %0 = vector.load %arg1[%c0, %c0_0] : memref<32x32xf32, #tpu.memory_space<vmem>>, vector<32x32xf32>
    %c0_1 = arith.constant 0 : index
    %c0_2 = arith.constant 0 : index
    %1 = vector.load %arg2[%c0_1, %c0_2] : memref<32x32xf32, #tpu.memory_space<vmem>>, vector<32x32xf32>
    %2 = arith.subf %0, %1 : vector<32x32xf32>
    %c0_3 = arith.constant 0 : index
    %c0_4 = arith.constant 0 : index
    %3 = vector.load %arg3[%c0_3, %c0_4] : memref<32x32xf32, #tpu.memory_space<vmem>>, vector<32x32xf32>
    %4 = arith.truncf %2 : vector<32x32xf32> to vector<32x32xbf16>
    %5 = arith.truncf %3 : vector<32x32xf32> to vector<32x32xbf16>
    %cst = arith.constant dense<0.000000e+00> : vector<32x32xf32>
    %6 = tpu.matmul %4, %5, %cst {dimension_numbers = #tpu.dot_dimension_numbers<[1], [0], [0], [1], [0, 0, 1, 1], [], []>} : vector<32x32xbf16>, vector<32x32xbf16>, vector<32x32xf32> -> vector<32x32xf32>
    %c0_5 = arith.constant 0 : index
    %c0_6 = arith.constant 0 : index
    %7 = vector.load %arg4[%c0_5, %c0_6] : memref<1x32xf32, #tpu.memory_space<vmem>>, vector<1x32xf32>
    %8 = vector.broadcast %7 : vector<1x32xf32> to vector<32x32xf32>
    %9 = arith.addf %6, %8 : vector<32x32xf32>
    %c0_7 = arith.constant 0 : index
    %c0_8 = arith.constant 0 : index
    %10 = vector.load %arg5[%c0_7, %c0_8] : memref<32x32xf32, #tpu.memory_space<vmem>>, vector<32x32xf32>
    tpu.vector_store %arg5[%c0_7, %c0_8], %9 {strides = array<i32>} : memref<32x32xf32, #tpu.memory_space<vmem>>, vector<32x32xf32>,
    %cst_9 = arith.constant dense<0.000000e+00> : vector<32xf32>
    %11 = vector.multi_reduction <add>, %9, %cst_9 [0] : vector<32x32xf32> to vector<32xf32>
    %12 = vector.shape_cast %11 : vector<32xf32> to vector<1x32xf32>
    %c0_10 = arith.constant 0 : index
    %c0_11 = arith.constant 0 : index
    %13 = vector.load %arg6[%c0_10, %c0_11] : memref<1x32xf32, #tpu.memory_space<vmem>>, vector<1x32xf32>
    tpu.vector_store %arg6[%c0_10, %c0_11], %12 {strides = array<i32>} : memref<1x32xf32, #tpu.memory_space<vmem>>, vector<1x32xf32>,
    %14 = arith.mulf %9, %9 : vector<32x32xf32>
    %cst_12 = arith.constant dense<0.000000e+00> : vector<32xf32>
    %15 = vector.multi_reduction <add>, %14, %cst_12 [0] : vector<32x32xf32> to vector<32xf32>
    %16 = vector.shape_cast %15 : vector<32xf32> to vector<1x32xf32>
    %c0_13 = arith.constant 0 : index
    %c0_14 = arith.constant 0 : index
    %17 = vector.load %arg7[%c0_13, %c0_14] : memref<1x32xf32, #tpu.memory_space<vmem>>, vector<1x32xf32>
    tpu.vector_store %arg7[%c0_13, %c0_14], %16 {strides = array<i32>} : memref<1x32xf32, #tpu.memory_space<vmem>>, vector<1x32xf32>,
    return
  }
  func.func @transform_0(%arg0: i32) -> (i32, i32) {
    %c0_i32 = arith.constant 0 : i32
    %c0_i32_0 = arith.constant 0 : i32
    return %arg0, %c0_i32 : i32, i32
  }
  func.func @transform_1(%arg0: i32) -> (i32, i32) {
    %c0_i32 = arith.constant 0 : i32
    %c0_i32_0 = arith.constant 0 : i32
    return %arg0, %c0_i32 : i32, i32
  }
  func.func @transform_2(%arg0: i32) -> (i32, i32) {
    %c0_i32 = arith.constant 0 : i32
    %c0_i32_0 = arith.constant 0 : i32
    %c0_i32_1 = arith.constant 0 : i32
    return %c0_i32, %c0_i32_0 : i32, i32
  }
  func.func @transform_3(%arg0: i32) -> (i32, i32) {
    %c0_i32 = arith.constant 0 : i32
    %c0_i32_0 = arith.constant 0 : i32
    %c0_i32_1 = arith.constant 0 : i32
    return %c0_i32, %c0_i32_0 : i32, i32
  }
  func.func @transform_4(%arg0: i32) -> (i32, i32) {
    %c0_i32 = arith.constant 0 : i32
    %c0_i32_0 = arith.constant 0 : i32
    return %arg0, %c0_i32 : i32, i32
  }
  func.func @transform_5(%arg0: i32) -> (i32, i32) {
    %c0_i32 = arith.constant 0 : i32
    %c0_i32_0 = arith.constant 0 : i32
    return %arg0, %c0_i32 : i32, i32
  }
  func.func @transform_6(%arg0: i32) -> (i32, i32) {
    %c0_i32 = arith.constant 0 : i32
    %c0_i32_0 = arith.constant 0 : i32
    return %arg0, %c0_i32 : i32, i32
  }
}

module attributes {stable_mosaic.version = 11 : i64} {
  func.func @_sa_attn_kernel(%arg0: i32, %arg1: i32, %arg2: memref<1x16x8xf32, #tpu.memory_space<vmem>>, %arg3: memref<1x16x8xf32, #tpu.memory_space<vmem>>, %arg4: memref<1x16x32xf32, #tpu.memory_space<vmem>>, %arg5: memref<1x16x32xf32, #tpu.memory_space<vmem>>, %arg6: memref<16x1xf32, #tpu.memory_space<vmem>>) attributes {dimension_semantics = [#tpu.dimension_semantics<parallel>, #tpu.dimension_semantics<arbitrary>], iteration_bounds = array<i64: 2, 1>, scalar_prefetch = 0 : i64, scratch_operands = 1 : i64, tpu.core_type = #tpu.core_type<tc>, window_params = [{transform_indices = @transform_0, window_bounds = array<i64: 1, 16, 8>}, {transform_indices = @transform_1, window_bounds = array<i64: 1, 16, 8>}, {transform_indices = @transform_2, window_bounds = array<i64: 1, 16, 32>}, {transform_indices = @transform_3, window_bounds = array<i64: 1, 16, 32>}]} {
    %c0_i32 = arith.constant 0 : i32
    %0 = arith.cmpi eq, %arg1, %c0_i32 : i32
    %1 = arith.extui %0 : i1 to i32
    %c0_i32_0 = arith.constant 0 : i32
    %2 = arith.cmpi ne, %1, %c0_i32_0 : i32
    scf.if %2 {
      %cst_26 = arith.constant 0.000000e+00 : f32
      %38 = vector.broadcast %cst_26 : f32 to vector<1x16x32xf32>
      %c0_27 = arith.constant 0 : index
      %c0_28 = arith.constant 0 : index
      %c0_29 = arith.constant 0 : index
      %39 = vector.load %arg5[%c0_27, %c0_28, %c0_29] : memref<1x16x32xf32, #tpu.memory_space<vmem>>, vector<1x16x32xf32>
      tpu.vector_store %arg5[%c0_27, %c0_28, %c0_29], %38 {strides = array<i32>} : memref<1x16x32xf32, #tpu.memory_space<vmem>>, vector<1x16x32xf32>,
      %cst_30 = arith.constant 0.000000e+00 : f32
      %40 = vector.broadcast %cst_30 : f32 to vector<16x1xf32>
      %c0_31 = arith.constant 0 : index
      %c0_32 = arith.constant 0 : index
      %41 = vector.load %arg6[%c0_31, %c0_32] : memref<16x1xf32, #tpu.memory_space<vmem>>, vector<16x1xf32>
      tpu.vector_store %arg6[%c0_31, %c0_32], %40 {strides = array<i32>} : memref<16x1xf32, #tpu.memory_space<vmem>>, vector<16x1xf32>,
    } else {
    }
    %c0 = arith.constant 0 : index
    %c0_1 = arith.constant 0 : index
    %c0_2 = arith.constant 0 : index
    %3 = vector.load %arg2[%c0, %c0_1, %c0_2] : memref<1x16x8xf32, #tpu.memory_space<vmem>>, vector<1x16x8xf32>
    %4 = vector.shape_cast %3 : vector<1x16x8xf32> to vector<16x8xf32>
    %c0_3 = arith.constant 0 : index
    %c0_4 = arith.constant 0 : index
    %c0_5 = arith.constant 0 : index
    %5 = vector.load %arg3[%c0_3, %c0_4, %c0_5] : memref<1x16x8xf32, #tpu.memory_space<vmem>>, vector<1x16x8xf32>
    %6 = vector.shape_cast %5 : vector<1x16x8xf32> to vector<16x8xf32>
    %7 = arith.truncf %4 : vector<16x8xf32> to vector<16x8xbf16>
    %8 = arith.truncf %6 : vector<16x8xf32> to vector<16x8xbf16>
    %cst = arith.constant dense<0.000000e+00> : vector<16x16xf32>
    %9 = tpu.matmul %7, %8, %cst {dimension_numbers = #tpu.dot_dimension_numbers<[1], [1], [0], [0], [0, 0, 1, 0], [], []>} : vector<16x8xbf16>, vector<16x8xbf16>, vector<16x16xf32> -> vector<16x16xf32>
    %cst_6 = arith.constant dense<0xFF800000> : vector<16xf32>
    %10 = vector.multi_reduction <maximumf>, %9, %cst_6 [1] : vector<16x16xf32> to vector<16xf32>
    %11 = vector.shape_cast %10 : vector<16xf32> to vector<16x1xf32>
    %12 = vector.broadcast %11 : vector<16x1xf32> to vector<16x16xf32>
    %13 = arith.subf %9, %12 : vector<16x16xf32>
    %14 = math.exp %13 : vector<16x16xf32>
    %cst_7 = arith.constant dense<0.000000e+00> : vector<16xf32>
    %15 = vector.multi_reduction <add>, %14, %cst_7 [1] : vector<16x16xf32> to vector<16xf32>
    %16 = vector.shape_cast %15 : vector<16xf32> to vector<16x1xf32>
    %17 = vector.broadcast %16 : vector<16x1xf32> to vector<16x16xf32>
    %18 = arith.divf %14, %17 : vector<16x16xf32>
    %cst_8 = arith.constant 1.000000e+00 : f32
    %19 = vector.broadcast %cst_8 : f32 to vector<16x1xf32>
    %c0_9 = arith.constant 0 : index
    %c0_10 = arith.constant 0 : index
    %20 = vector.load %arg6[%c0_9, %c0_10] : memref<16x1xf32, #tpu.memory_space<vmem>>, vector<16x1xf32>
    %cst_11 = arith.constant dense<0.000000e+00> : vector<16x1xf32>
    %21 = tpu.matmul %18, %19, %cst_11 {dimension_numbers = #tpu.dot_dimension_numbers<[0], [0], [1], [1], [0, 1, 1, 1], [], []>} : vector<16x16xf32>, vector<16x1xf32>, vector<16x1xf32> -> vector<16x1xf32>
    %22 = arith.addf %20, %21 : vector<16x1xf32>
    %c0_12 = arith.constant 0 : index
    %c0_13 = arith.constant 0 : index
    %23 = vector.load %arg6[%c0_12, %c0_13] : memref<16x1xf32, #tpu.memory_space<vmem>>, vector<16x1xf32>
    tpu.vector_store %arg6[%c0_12, %c0_13], %22 {strides = array<i32>} : memref<16x1xf32, #tpu.memory_space<vmem>>, vector<16x1xf32>,
    %c0_14 = arith.constant 0 : index
    %c0_15 = arith.constant 0 : index
    %c0_16 = arith.constant 0 : index
    %24 = vector.load %arg5[%c0_14, %c0_15, %c0_16] : memref<1x16x32xf32, #tpu.memory_space<vmem>>, vector<1x16x32xf32>
    %25 = vector.shape_cast %24 : vector<1x16x32xf32> to vector<16x32xf32>
    %c0_17 = arith.constant 0 : index
    %c0_18 = arith.constant 0 : index
    %c0_19 = arith.constant 0 : index
    %26 = vector.load %arg4[%c0_17, %c0_18, %c0_19] : memref<1x16x32xf32, #tpu.memory_space<vmem>>, vector<1x16x32xf32>
    %27 = vector.shape_cast %26 : vector<1x16x32xf32> to vector<16x32xf32>
    %28 = arith.truncf %18 : vector<16x16xf32> to vector<16x16xbf16>
    %29 = arith.truncf %27 : vector<16x32xf32> to vector<16x32xbf16>
    %cst_20 = arith.constant dense<0.000000e+00> : vector<16x32xf32>
    %30 = tpu.matmul %28, %29, %cst_20 {dimension_numbers = #tpu.dot_dimension_numbers<[0], [0], [1], [1], [0, 1, 1, 1], [], []>} : vector<16x16xbf16>, vector<16x32xbf16>, vector<16x32xf32> -> vector<16x32xf32>
    %31 = arith.addf %25, %30 : vector<16x32xf32>
    %c0_21 = arith.constant 0 : index
    %c0_22 = arith.constant 0 : index
    %c0_23 = arith.constant 0 : index
    %32 = vector.load %arg5[%c0_21, %c0_22, %c0_23] : memref<1x16x32xf32, #tpu.memory_space<vmem>>, vector<1x16x32xf32>
    %33 = vector.shape_cast %32 : vector<1x16x32xf32> to vector<16x32xf32>
    %34 = vector.shape_cast %31 : vector<16x32xf32> to vector<1x16x32xf32>
    tpu.vector_store %arg5[%c0_21, %c0_22, %c0_23], %34 {strides = array<i32>} : memref<1x16x32xf32, #tpu.memory_space<vmem>>, vector<1x16x32xf32>,
    %c0_i32_24 = arith.constant 0 : i32
    %35 = arith.cmpi eq, %arg1, %c0_i32_24 : i32
    %36 = arith.extui %35 : i1 to i32
    %c0_i32_25 = arith.constant 0 : i32
    %37 = arith.cmpi ne, %36, %c0_i32_25 : i32
    scf.if %37 {
      %c0_26 = arith.constant 0 : index
      %c0_27 = arith.constant 0 : index
      %c0_28 = arith.constant 0 : index
      %38 = vector.load %arg5[%c0_26, %c0_27, %c0_28] : memref<1x16x32xf32, #tpu.memory_space<vmem>>, vector<1x16x32xf32>
      %39 = vector.shape_cast %38 : vector<1x16x32xf32> to vector<16x32xf32>
      %c0_29 = arith.constant 0 : index
      %c0_30 = arith.constant 0 : index
      %40 = vector.load %arg6[%c0_29, %c0_30] : memref<16x1xf32, #tpu.memory_space<vmem>>, vector<16x1xf32>
      %cst_31 = arith.constant 9.99999971E-10 : f32
      %41 = vector.broadcast %cst_31 : f32 to vector<16x1xf32>
      %42 = arith.addf %41, %40 : vector<16x1xf32>
      %cst_32 = arith.constant 1.000000e+00 : f32
      %43 = vector.broadcast %cst_32 : f32 to vector<16x1xf32>
      %44 = arith.divf %43, %42 : vector<16x1xf32>
      %45 = vector.broadcast %44 : vector<16x1xf32> to vector<16x32xf32>
      %46 = arith.mulf %39, %45 : vector<16x32xf32>
      %c0_33 = arith.constant 0 : index
      %c0_34 = arith.constant 0 : index
      %c0_35 = arith.constant 0 : index
      %47 = vector.load %arg5[%c0_33, %c0_34, %c0_35] : memref<1x16x32xf32, #tpu.memory_space<vmem>>, vector<1x16x32xf32>
      %48 = vector.shape_cast %47 : vector<1x16x32xf32> to vector<16x32xf32>
      %49 = vector.shape_cast %46 : vector<16x32xf32> to vector<1x16x32xf32>
      tpu.vector_store %arg5[%c0_33, %c0_34, %c0_35], %49 {strides = array<i32>} : memref<1x16x32xf32, #tpu.memory_space<vmem>>, vector<1x16x32xf32>,
    } else {
    }
    return
  }
  func.func @transform_0(%arg0: i32, %arg1: i32) -> (i32, i32, i32) {
    %c0_i32 = arith.constant 0 : i32
    %c0_i32_0 = arith.constant 0 : i32
    return %arg0, %arg1, %c0_i32 : i32, i32, i32
  }
  func.func @transform_1(%arg0: i32, %arg1: i32) -> (i32, i32, i32) {
    %c0_i32 = arith.constant 0 : i32
    %c0_i32_0 = arith.constant 0 : i32
    %c0_i32_1 = arith.constant 0 : i32
    return %arg0, %c0_i32, %c0_i32_0 : i32, i32, i32
  }
  func.func @transform_2(%arg0: i32, %arg1: i32) -> (i32, i32, i32) {
    %c0_i32 = arith.constant 0 : i32
    %c0_i32_0 = arith.constant 0 : i32
    return %arg0, %arg1, %c0_i32 : i32, i32, i32
  }
  func.func @transform_3(%arg0: i32, %arg1: i32) -> (i32, i32, i32) {
    %c0_i32 = arith.constant 0 : i32
    %c0_i32_0 = arith.constant 0 : i32
    %c0_i32_1 = arith.constant 0 : i32
    return %arg0, %c0_i32, %c0_i32_0 : i32, i32, i32
  }
}

module attributes {stable_mosaic.version = 11 : i64} {
  func.func @_bn_apply_kernel(%arg0: i32, %arg1: memref<32x32xf32, #tpu.memory_space<vmem>>, %arg2: memref<32x32xf32, #tpu.memory_space<vmem>>, %arg3: memref<1x32xf32, #tpu.memory_space<vmem>>, %arg4: memref<1x32xf32, #tpu.memory_space<vmem>>, %arg5: memref<1x32xf32, #tpu.memory_space<vmem>>, %arg6: memref<1x32xf32, #tpu.memory_space<vmem>>, %arg7: memref<32x32xf32, #tpu.memory_space<vmem>>) attributes {dimension_semantics = [#tpu.dimension_semantics<parallel>], iteration_bounds = array<i64: 1>, scalar_prefetch = 0 : i64, scratch_operands = 0 : i64, tpu.core_type = #tpu.core_type<tc>, window_params = [{transform_indices = @transform_0, window_bounds = array<i64: 32, 32>}, {transform_indices = @transform_1, window_bounds = array<i64: 32, 32>}, {pipeline_mode = #tpu.pipeline_mode<synchronous>, transform_indices = @transform_2, window_bounds = array<i64: 1, 32>}, {pipeline_mode = #tpu.pipeline_mode<synchronous>, transform_indices = @transform_3, window_bounds = array<i64: 1, 32>}, {pipeline_mode = #tpu.pipeline_mode<synchronous>, transform_indices = @transform_4, window_bounds = array<i64: 1, 32>}, {pipeline_mode = #tpu.pipeline_mode<synchronous>, transform_indices = @transform_5, window_bounds = array<i64: 1, 32>}, {transform_indices = @transform_6, window_bounds = array<i64: 32, 32>}]} {
    %c0 = arith.constant 0 : index
    %c0_0 = arith.constant 0 : index
    %0 = vector.load %arg5[%c0, %c0_0] : memref<1x32xf32, #tpu.memory_space<vmem>>, vector<1x32xf32>
    %c0_1 = arith.constant 0 : index
    %c0_2 = arith.constant 0 : index
    %1 = vector.load %arg6[%c0_1, %c0_2] : memref<1x32xf32, #tpu.memory_space<vmem>>, vector<1x32xf32>
    %c0_3 = arith.constant 0 : index
    %c0_4 = arith.constant 0 : index
    %2 = vector.load %arg3[%c0_3, %c0_4] : memref<1x32xf32, #tpu.memory_space<vmem>>, vector<1x32xf32>
    %c0_5 = arith.constant 0 : index
    %c0_6 = arith.constant 0 : index
    %3 = vector.load %arg4[%c0_5, %c0_6] : memref<1x32xf32, #tpu.memory_space<vmem>>, vector<1x32xf32>
    %cst = arith.constant dense<0.000000e+00> : vector<32xf32>
    %4 = vector.multi_reduction <add>, %0, %cst [0] : vector<1x32xf32> to vector<32xf32>
    %5 = vector.shape_cast %4 : vector<32xf32> to vector<1x32xf32>
    %cst_7 = arith.constant 3.125000e-02 : f32
    %6 = vector.broadcast %cst_7 : f32 to vector<1x32xf32>
    %7 = arith.mulf %5, %6 : vector<1x32xf32>
    %cst_8 = arith.constant dense<0.000000e+00> : vector<32xf32>
    %8 = vector.multi_reduction <add>, %1, %cst_8 [0] : vector<1x32xf32> to vector<32xf32>
    %9 = vector.shape_cast %8 : vector<32xf32> to vector<1x32xf32>
    %cst_9 = arith.constant 3.125000e-02 : f32
    %10 = vector.broadcast %cst_9 : f32 to vector<1x32xf32>
    %11 = arith.mulf %9, %10 : vector<1x32xf32>
    %12 = arith.mulf %7, %7 : vector<1x32xf32>
    %13 = arith.subf %11, %12 : vector<1x32xf32>
    %cst_10 = arith.constant 0.000000e+00 : f32
    %14 = vector.broadcast %cst_10 : f32 to vector<1x32xf32>
    %15 = arith.maximumf %13, %14 : vector<1x32xf32>
    %cst_11 = arith.constant 9.99999974E-6 : f32
    %16 = vector.broadcast %cst_11 : f32 to vector<1x32xf32>
    %17 = arith.addf %15, %16 : vector<1x32xf32>
    %18 = math.rsqrt %17 : vector<1x32xf32>
    %19 = arith.mulf %18, %2 : vector<1x32xf32>
    %20 = arith.mulf %7, %19 : vector<1x32xf32>
    %21 = arith.subf %3, %20 : vector<1x32xf32>
    %c0_12 = arith.constant 0 : index
    %c0_13 = arith.constant 0 : index
    %22 = vector.load %arg2[%c0_12, %c0_13] : memref<32x32xf32, #tpu.memory_space<vmem>>, vector<32x32xf32>
    %c0_14 = arith.constant 0 : index
    %c0_15 = arith.constant 0 : index
    %23 = vector.load %arg1[%c0_14, %c0_15] : memref<32x32xf32, #tpu.memory_space<vmem>>, vector<32x32xf32>
    %24 = vector.broadcast %19 : vector<1x32xf32> to vector<32x32xf32>
    %25 = arith.mulf %23, %24 : vector<32x32xf32>
    %26 = vector.broadcast %21 : vector<1x32xf32> to vector<32x32xf32>
    %27 = arith.addf %25, %26 : vector<32x32xf32>
    %cst_16 = arith.constant 0.000000e+00 : f32
    %28 = vector.broadcast %cst_16 : f32 to vector<32x32xf32>
    %29 = arith.maximumf %27, %28 : vector<32x32xf32>
    %30 = arith.addf %22, %29 : vector<32x32xf32>
    %c0_17 = arith.constant 0 : index
    %c0_18 = arith.constant 0 : index
    %31 = vector.load %arg7[%c0_17, %c0_18] : memref<32x32xf32, #tpu.memory_space<vmem>>, vector<32x32xf32>
    tpu.vector_store %arg7[%c0_17, %c0_18], %30 {strides = array<i32>} : memref<32x32xf32, #tpu.memory_space<vmem>>, vector<32x32xf32>,
    return
  }
  func.func @transform_0(%arg0: i32) -> (i32, i32) {
    %c0_i32 = arith.constant 0 : i32
    %c0_i32_0 = arith.constant 0 : i32
    return %arg0, %c0_i32 : i32, i32
  }
  func.func @transform_1(%arg0: i32) -> (i32, i32) {
    %c0_i32 = arith.constant 0 : i32
    %c0_i32_0 = arith.constant 0 : i32
    return %arg0, %c0_i32 : i32, i32
  }
  func.func @transform_2(%arg0: i32) -> (i32, i32) {
    %c0_i32 = arith.constant 0 : i32
    %c0_i32_0 = arith.constant 0 : i32
    %c0_i32_1 = arith.constant 0 : i32
    return %c0_i32, %c0_i32_0 : i32, i32
  }
  func.func @transform_3(%arg0: i32) -> (i32, i32) {
    %c0_i32 = arith.constant 0 : i32
    %c0_i32_0 = arith.constant 0 : i32
    %c0_i32_1 = arith.constant 0 : i32
    return %c0_i32, %c0_i32_0 : i32, i32
  }
  func.func @transform_4(%arg0: i32) -> (i32, i32) {
    %c0_i32 = arith.constant 0 : i32
    %c0_i32_0 = arith.constant 0 : i32
    %c0_i32_1 = arith.constant 0 : i32
    return %c0_i32, %c0_i32_0 : i32, i32
  }
  func.func @transform_5(%arg0: i32) -> (i32, i32) {
    %c0_i32 = arith.constant 0 : i32
    %c0_i32_0 = arith.constant 0 : i32
    %c0_i32_1 = arith.constant 0 : i32
    return %c0_i32, %c0_i32_0 : i32, i32
  }
  func.func @transform_6(%arg0: i32) -> (i32, i32) {
    %c0_i32 = arith.constant 0 : i32
    %c0_i32_0 = arith.constant 0 : i32
    return %arg0, %c0_i32 : i32, i32
  }
}

</mosaic_0001>

<llo_original>
// kernel: gt_forward.7
$region0: #{gt_forward.7}
  #allocation0 [shape = 'u32[]', space=smem, size = 0x4, offset = 0x4, fixed_abs, tag = 'smem constant byte address 0x4 - core index']
  #allocation1 [shape = 'u32[72,128]{1,0:T(1,128)}', space=vmem, size = 0x9000, scoped, tag = 'internal scratch']
  %s0 = inlined_call_operand.vmem [shape: f32[32,4], index: 0, kind: input, shape index: {}]
  %s1 = inlined_call_operand.vmem [shape: f32[4,32], index: 1, kind: input, shape index: {}]
  %s2 = inlined_call_operand.vmem [shape: f32[1,32], index: 2, kind: input, shape index: {}]
  %s3 = inlined_call_operand.vmem [shape: f32[4,96], index: 3, kind: input, shape index: {}]
  %s4 = inlined_call_operand.vmem [shape: f32[1,96], index: 4, kind: input, shape index: {}]
  %s5 = inlined_call_operand.vmem [shape: f32[32,32], index: 5, kind: output, shape index: {0}]
  %s6 = inlined_call_operand.vmem [shape: f32[32,96], index: 6, kind: output, shape index: {1}]
  %7 = xla_tuple %s5, %s6
  %s8 = sld [smem:[#allocation0]]
  $region38: #{gt_forward.7} parent=0
    _
  %s10 = ssub.s32 1, %s8
  %s11 = scalar_select 0, %s10, %s8
  // Predicated region
  $region2: #{gt_forward.7} parent=0 // pred_check
    _
  $region3: #{gt_forward.7} parent=0 // pred_check_branch
    %13 = sbr.rel (0) target = $region5
  $region4: #{gt_forward.7} parent=0 // pred_region
    _
  $region5: #{gt_forward.7} parent=0 // pred_fallthru
    _
  // Predicated region
  $region6: #{gt_forward.7} parent=0 // pred_check
    _
  $region7: #{gt_forward.7} parent=0 // pred_check_branch
    %15 = sbr.rel (0) target = $region9
  $region8: #{gt_forward.7} parent=0 // pred_region
    _
  $region9: #{gt_forward.7} parent=0 // pred_fallthru
    _
  // Predicated region
  $region10: #{gt_forward.7} parent=0 // pred_check
    _
  $region11: #{gt_forward.7} parent=0 // pred_check_branch
    %17 = sbr.rel (0) target = $region13
  $region12: #{gt_forward.7} parent=0 // pred_region
    _
  $region13: #{gt_forward.7} parent=0 // pred_fallthru
    _
  // Predicated region
  $region14: #{gt_forward.7} parent=0 // pred_check
    _
  $region15: #{gt_forward.7} parent=0 // pred_check_branch
    %19 = sbr.rel (0) target = $region17
  $region16: #{gt_forward.7} parent=0 // pred_region
    _
  $region17: #{gt_forward.7} parent=0 // pred_fallthru
    _
  // Predicated region
  $region18: #{gt_forward.7} parent=0 // pred_check
    _
  $region19: #{gt_forward.7} parent=0 // pred_check_branch
    %21 = sbr.rel (0) target = $region21
  $region20: #{gt_forward.7} parent=0 // pred_region
    _
  $region21: #{gt_forward.7} parent=0 // pred_fallthru
    _
  %v23 = vld [vmem:[%s0] sm:$0xff]
  %v24 = vld [vmem:[%s0 + $0x8] sm:$0xff]
  %v25 = vld [vmem:[%s0 + $0x10] sm:$0xff]
  %v26 = vld [vmem:[%s0 + $0x18] sm:$0xff]
  %v27 = vld [vmem:[%s1] sm:$0xf]
  %v28 = vpack.c.bf16 %v24, %v23
  %v29 = vpack.c.bf16 %v26, %v25
  %v30 = vpack.c.bf16 %v27, %v27
  %v31 = vld [vmem:[%s2] sm:$0x1]
  %v33 = vperm.slane %v31, 0
  %vm35 = vcmask 31744
  %v37 = vsel %vm35, %v28, 0
  %v40 = vsel %vm35, %v29, 0
  %vm42 = vcmask 1041408
  %v44 = vsel %vm42, %v30, 0
  %46 = vmatpush.bf16.msra.mxu0 0
  %47 = vmatpush.bf16.msra.mxu0 0
  %48 = vmatpush.bf16.msra.mxu0 0
  %49 = vmatpush.bf16.msra.mxu0 0
  %50 = vmatpush.bf16.msra.mxu0 0
  %51 = vmatpush.bf16.msra.mxu0 0
  %52 = vmatpush.bf16.msra.mxu0 0
  %53 = vmatpush.bf16.msra.mxu0 %v44
  %54 = vmatmul.bf16.gmra.mxu0 %v37
  %v55 = vpop.f32.mrf.mxu0
  %v56 = vadd.f32 %v33, %v55
  %v57 = vpop.f32.mrf.mxu0
  %v58 = vadd.f32 %v33, %v57
  %59 = vmatmul.bf16.gmra.mxu0 %v40
  %v60 = vpop.f32.mrf.mxu0
  %v61 = vadd.f32 %v33, %v60
  %v62 = vpop.f32.mrf.mxu0
  %v63 = vadd.f32 %v33, %v62
  %64 = vdwg.mxu0
  %vm65 = vcmask 261120
  %66 = vst.msk [vmem:[%s5] sm:$0xff] %vm65, %v56
  %67 = vst.msk [vmem:[%s5 + $0x8] sm:$0xff] %vm65, %v58
  %68 = vst.msk [vmem:[%s5 + $0x10] sm:$0xff] %vm65, %v61
  %69 = vst.msk [vmem:[%s5 + $0x18] sm:$0xff] %vm65, %v63
  %v70 = vld [vmem:[%s3] sm:$0xf]
  %v71 = vpack.c.bf16 %v70, %v70
  %v72 = vld [vmem:[%s4] sm:$0x1]
  %v74 = vperm.slane %v72, 0
  %v77 = vsel %vm42, %v71, 0
  %79 = vmatpush.bf16.msra.mxu0 0
  %80 = vmatpush.bf16.msra.mxu0 0
  %81 = vmatpush.bf16.msra.mxu0 0
  %82 = vmatpush.bf16.msra.mxu0 0
  %83 = vmatpush.bf16.msra.mxu0 0
  %84 = vmatpush.bf16.msra.mxu0 0
  %85 = vmatpush.bf16.msra.mxu0 0
  %86 = vmatpush.bf16.msra.mxu0 %v77
  %87 = vmatmul.bf16.gmra.mxu0 %v37
  %v88 = vpop.f32.mrf.mxu0
  %v89 = vadd.f32 %v74, %v88
  %v90 = vpop.f32.mrf.mxu0
  %v91 = vadd.f32 %v74, %v90
  %92 = vmatmul.bf16.gmra.mxu0 %v40
  %v93 = vpop.f32.mrf.mxu0
  %v94 = vadd.f32 %v74, %v93
  %v95 = vpop.f32.mrf.mxu0
  %v96 = vadd.f32 %v74, %v95
  %97 = vdwg.mxu0
  %vm98 = vcmask 785408
  %99 = vst.msk [vmem:[%s6] sm:$0xff] %vm98, %v89
  %100 = vst.msk [vmem:[%s6 + $0x8] sm:$0xff] %vm98, %v91
  %101 = vst.msk [vmem:[%s6 + $0x10] sm:$0xff] %vm98, %v94
  %102 = vst.msk [vmem:[%s6 + $0x18] sm:$0xff] %vm98, %v96
  // Predicated region
  $region22: #{gt_forward.7} parent=0 // pred_check
    _
  $region23: #{gt_forward.7} parent=0 // pred_check_branch
    %104 = sbr.rel (0) target = $region25
  $region24: #{gt_forward.7} parent=0 // pred_region
    _
  $region25: #{gt_forward.7} parent=0 // pred_fallthru
    _
  // Predicated region
  $region26: #{gt_forward.7} parent=0 // pred_check
    _
  $region27: #{gt_forward.7} parent=0 // pred_check_branch
    %106 = sbr.rel (0) target = $region29
  $region28: #{gt_forward.7} parent=0 // pred_region
    _
  $region29: #{gt_forward.7} parent=0 // pred_fallthru
    _
  // Predicated region
  $region30: #{gt_forward.7} parent=0 // pred_check
    _
  $region31: #{gt_forward.7} parent=0 // pred_check_branch
    %108 = sbr.rel (0) target = $region33
  $region32: #{gt_forward.7} parent=0 // pred_region
    _
  $region33: #{gt_forward.7} parent=0 // pred_fallthru
    _
  // Predicated region
  $region34: #{gt_forward.7} parent=0 // pred_check
    _
  $region35: #{gt_forward.7} parent=0 // pred_check_branch
    %110 = sbr.rel (0) target = $region37
  $region36: #{gt_forward.7} parent=0 // pred_region
    _
  $region37: #{gt_forward.7} parent=0 // pred_fallthru
    _

// kernel: gt_forward.10
$region0: #{gt_forward.10}
  #allocation0 [shape = 'u32[]', space=smem, size = 0x4, offset = 0x4, fixed_abs, tag = 'smem constant byte address 0x4 - core index']
  #allocation1 [shape = 'u32[72,128]{1,0:T(1,128)}', space=vmem, size = 0x9000, scoped, tag = 'internal scratch']
  %s0 = inlined_call_operand.vmem [shape: f32[32,32], index: 0, kind: input, shape index: {}]
  %s1 = inlined_call_operand.vmem [shape: f32[32,32], index: 1, kind: input, shape index: {}]
  %s2 = inlined_call_operand.vmem [shape: f32[1,32], index: 2, kind: input, shape index: {}]
  %s3 = inlined_call_operand.vmem [shape: f32[1,32], index: 3, kind: input, shape index: {}]
  %s4 = inlined_call_operand.vmem [shape: f32[1,32], index: 4, kind: input, shape index: {}]
  %s5 = inlined_call_operand.vmem [shape: f32[1,32], index: 5, kind: input, shape index: {}]
  %s6 = inlined_call_operand.vmem [shape: f32[32,8], index: 6, kind: input, shape index: {}]
  %s7 = inlined_call_operand.vmem [shape: f32[32,32], index: 7, kind: input, shape index: {}]
  %s8 = inlined_call_operand.vmem [shape: f32[1,32], index: 8, kind: input, shape index: {}]
  %s9 = inlined_call_operand.vmem [shape: f32[32,32], index: 9, kind: output, shape index: {0}]
  %s10 = inlined_call_operand.vmem [shape: f32[32,8], index: 10, kind: output, shape index: {1}]
  %s11 = inlined_call_operand.vmem [shape: f32[32,32], index: 11, kind: output, shape index: {2}]
  %12 = xla_tuple %s9, %s10, %s11
  %s13 = sld [smem:[#allocation0]]
  $region62: #{gt_forward.10} parent=0
    _
  %s15 = ssub.s32 1, %s13
  %s16 = scalar_select 0, %s15, %s13
  // Predicated region
  $region2: #{gt_forward.10} parent=0 // pred_check
    _
  $region3: #{gt_forward.10} parent=0 // pred_check_branch
    %18 = sbr.rel (0) target = $region5
  $region4: #{gt_forward.10} parent=0 // pred_region
    _
  $region5: #{gt_forward.10} parent=0 // pred_fallthru
    _
  // Predicated region
  $region6: #{gt_forward.10} parent=0 // pred_check
    _
  $region7: #{gt_forward.10} parent=0 // pred_check_branch
    %20 = sbr.rel (0) target = $region9
  $region8: #{gt_forward.10} parent=0 // pred_region
    _
  $region9: #{gt_forward.10} parent=0 // pred_fallthru
    _
  // Predicated region
  $region10: #{gt_forward.10} parent=0 // pred_check
    _
  $region11: #{gt_forward.10} parent=0 // pred_check_branch
    %22 = sbr.rel (0) target = $region13
  $region12: #{gt_forward.10} parent=0 // pred_region
    _
  $region13: #{gt_forward.10} parent=0 // pred_fallthru
    _
  // Predicated region
  $region14: #{gt_forward.10} parent=0 // pred_check
    _
  $region15: #{gt_forward.10} parent=0 // pred_check_branch
    %24 = sbr.rel (0) target = $region17
  $region16: #{gt_forward.10} parent=0 // pred_region
    _
  $region17: #{gt_forward.10} parent=0 // pred_fallthru
    _
  // Predicated region
  $region18: #{gt_forward.10} parent=0 // pred_check
    _
  $region19: #{gt_forward.10} parent=0 // pred_check_branch
    %26 = sbr.rel (0) target = $region21
  $region20: #{gt_forward.10} parent=0 // pred_region
    _
  $region21: #{gt_forward.10} parent=0 // pred_fallthru
    _
  // Predicated region
  $region22: #{gt_forward.10} parent=0 // pred_check
    _
  $region23: #{gt_forward.10} parent=0 // pred_check_branch
    %28 = sbr.rel (0) target = $region25
  $region24: #{gt_forward.10} parent=0 // pred_region
    _
  $region25: #{gt_forward.10} parent=0 // pred_fallthru
    _
  // Predicated region
  $region26: #{gt_forward.10} parent=0 // pred_check
    _
  $region27: #{gt_forward.10} parent=0 // pred_check_branch
    %30 = sbr.rel (0) target = $region29
  $region28: #{gt_forward.10} parent=0 // pred_region
    _
  $region29: #{gt_forward.10} parent=0 // pred_fallthru
    _
  // Predicated region
  $region30: #{gt_forward.10} parent=0 // pred_check
    _
  $region31: #{gt_forward.10} parent=0 // pred_check_branch
    %32 = sbr.rel (0) target = $region33
  $region32: #{gt_forward.10} parent=0 // pred_region
    _
  $region33: #{gt_forward.10} parent=0 // pred_fallthru
    _
  // Predicated region
  $region34: #{gt_forward.10} parent=0 // pred_check
    _
  $region35: #{gt_forward.10} parent=0 // pred_check_branch
    %34 = sbr.rel (0) target = $region37
  $region36: #{gt_forward.10} parent=0 // pred_region
    _
  $region37: #{gt_forward.10} parent=0 // pred_fallthru
    _
  %v36 = vld [vmem:[%s4] sm:$0x1]
  %v37 = vld [vmem:[%s5] sm:$0x1]
  %v38 = vld [vmem:[%s2] sm:$0x1]
  %v39 = vld [vmem:[%s3] sm:$0x1]
  %v40 = vadd.f32 %v36, 0.0
  %v41 = vmul.f32 %v40, 0.03125
  %v42 = vadd.f32 %v37, 0.0
  %v43 = vmul.f32 %v42, 0.03125
  %v44 = vmul.f32 %v41, %v41
  %v45 = vsub.f32 %v43, %v44
  %v46 = vmax.f32 %v45, 0.0
  %v47 = vadd.f32 %v46, 1e-05
  %v48 = vrsqrt.pop %v47
  %v49 = vmul.f32 %v48, %v47
  %v50 = vmul.f32 %v49, %v48
  %v51 = vmul.f32 0.5, %v50
  %v52 = vsub.f32 1.5, %v51
  %v53 = vmul.f32 %v48, %v52
  %vm54 = vweird.f32 %v47
  %vm55 = vweird.f32 %v48
  %vm56 = vmor %vm54, %vm55
  %v57 = vsel %vm56, %v48, %v53
  %v58 = vmul.f32 %v57, %v38
  %v59 = vmul.f32 %v41, %v58
  %v60 = vsub.f32 %v39, %v59
  %v61 = vld [vmem:[%s1] sm:$0xff]
  %v62 = vld [vmem:[%s1 + $0x8] sm:$0xff]
  %v63 = vld [vmem:[%s1 + $0x10] sm:$0xff]
  %v64 = vld [vmem:[%s1 + $0x18] sm:$0xff]
  %v65 = vld [vmem:[%s0] sm:$0xff]
  %v66 = vld [vmem:[%s0 + $0x8] sm:$0xff]
  %v67 = vld [vmem:[%s0 + $0x10] sm:$0xff]
  %v68 = vld [vmem:[%s0 + $0x18] sm:$0xff]
  %v70 = vperm.slane %v58, 0
  %v72 = vmul.f32 %v65, %v70
  %v73 = vmul.f32 %v66, %v70
  %v74 = vmul.f32 %v67, %v70
  %v75 = vmul.f32 %v68, %v70
  %v77 = vperm.slane %v60, 0
  %v79 = vadd.f32 %v72, %v77
  %v80 = vadd.f32 %v73, %v77
  %v81 = vadd.f32 %v74, %v77
  %v82 = vadd.f32 %v75, %v77
  %v83 = vmax.f32 %v79, 0.0
  %v84 = vmax.f32 %v80, 0.0
  %v85 = vmax.f32 %v81, 0.0
  %v86 = vmax.f32 %v82, 0.0
  %v87 = vadd.f32 %v61, %v83
  %v88 = vadd.f32 %v62, %v84
  %v89 = vadd.f32 %v63, %v85
  %v90 = vadd.f32 %v64, %v86
  %vm91 = vcmask 261120
  %92 = vst.msk [vmem:[%s9] sm:$0xff] %vm91, %v87
  %93 = vst.msk [vmem:[%s9 + $0x8] sm:$0xff] %vm91, %v88
  %94 = vst.msk [vmem:[%s9 + $0x10] sm:$0xff] %vm91, %v89
  %95 = vst.msk [vmem:[%s9 + $0x18] sm:$0xff] %vm91, %v90
  %v96 = vld [vmem:[%s6] sm:$0xff]
  %v97 = vld [vmem:[%s6 + $0x8] sm:$0xff]
  %v98 = vld [vmem:[%s6 + $0x10] sm:$0xff]
  %v99 = vld [vmem:[%s6 + $0x18] sm:$0xff]
  %v100 = vpack.c.bf16 %v88, %v87
  %v101 = vpack.c.bf16 %v90, %v89
  %v102 = vpack.c.bf16 %v97, %v96
  %v103 = vpack.c.bf16 %v99, %v98
  %v105 = vsel %vm91, %v100, 0
  %v108 = vsel %vm91, %v101, 0
  %110 = vmatpush.bf16.msra.mxu0 0
  %111 = vmatpush.bf16.msra.mxu0 0
  %112 = vmatpush.bf16.msra.mxu0 0
  %113 = vmatpush.bf16.msra.mxu0 0
  %114 = vmatpush.bf16.msra.mxu0 0
  %115 = vmatpush.bf16.msra.mxu0 0
  %116 = vmatpush.bf16.msra.mxu0 %v103
  %117 = vmatpush.bf16.msra.mxu0 %v102
  %118 = vmatmul.bf16.gmra.mxu0 %v105
  %v119 = vpop.f32.mrf.mxu0
  %v120 = vadd.f32 0.0, %v119
  %v121 = vpop.f32.mrf.mxu0
  %v122 = vadd.f32 0.0, %v121
  %123 = vmatmul.bf16.gmra.mxu0 %v108
  %v124 = vpop.f32.mrf.mxu0
  %v125 = vadd.f32 0.0, %v124
  %v126 = vpop.f32.mrf.mxu0
  %v127 = vadd.f32 0.0, %v126
  %128 = vdwg.mxu0
  %vm129 = vcmask 64512
  %130 = vst.msk [vmem:[%s10] sm:$0xff] %vm129, %v120
  %131 = vst.msk [vmem:[%s10 + $0x8] sm:$0xff] %vm129, %v122
  %132 = vst.msk [vmem:[%s10 + $0x10] sm:$0xff] %vm129, %v125
  %133 = vst.msk [vmem:[%s10 + $0x18] sm:$0xff] %vm129, %v127
  %v134 = vld [vmem:[%s7] sm:$0xff]
  %v135 = vld [vmem:[%s7 + $0x8] sm:$0xff]
  %v136 = vld [vmem:[%s7 + $0x10] sm:$0xff]
  %v137 = vld [vmem:[%s7 + $0x18] sm:$0xff]
  %v138 = vpack.c.bf16 %v135, %v134
  %v139 = vpack.c.bf16 %v137, %v136
  %v140 = vld [vmem:[%s8] sm:$0x1]
  %v142 = vperm.slane %v140, 0
  %144 = vmatpush.bf16.msra.mxu0 0
  %145 = vmatpush.bf16.msra.mxu0 0
  %146 = vmatpush.bf16.msra.mxu0 0
  %147 = vmatpush.bf16.msra.mxu0 0
  %148 = vmatpush.bf16.msra.mxu0 0
  %149 = vmatpush.bf16.msra.mxu0 0
  %150 = vmatpush.bf16.msra.mxu0 %v139
  %151 = vmatpush.bf16.msra.mxu0 %v138
  %152 = vmatmul.bf16.gmra.mxu0 %v105
  %v153 = vpop.f32.mrf.mxu0
  %v154 = vadd.f32 %v142, %v153
  %v155 = vpop.f32.mrf.mxu0
  %v156 = vadd.f32 %v142, %v155
  %157 = vmatmul.bf16.gmra.mxu0 %v108
  %v158 = vpop.f32.mrf.mxu0
  %v159 = vadd.f32 %v142, %v158
  %v160 = vpop.f32.mrf.mxu0
  %v161 = vadd.f32 %v142, %v160
  %162 = vdwg.mxu0
  %163 = vst.msk [vmem:[%s11] sm:$0xff] %vm91, %v154
  %164 = vst.msk [vmem:[%s11 + $0x8] sm:$0xff] %vm91, %v156
  %165 = vst.msk [vmem:[%s11 + $0x10] sm:$0xff] %vm91, %v159
  %166 = vst.msk [vmem:[%s11 + $0x18] sm:$0xff] %vm91, %v161
  // Predicated region
  $region38: #{gt_forward.10} parent=0 // pred_check
    _
  $region39: #{gt_forward.10} parent=0 // pred_check_branch
    %168 = sbr.rel (0) target = $region41
  $region40: #{gt_forward.10} parent=0 // pred_region
    _
  $region41: #{gt_forward.10} parent=0 // pred_fallthru
    _
  // Predicated region
  $region42: #{gt_forward.10} parent=0 // pred_check
    _
  $region43: #{gt_forward.10} parent=0 // pred_check_branch
    %170 = sbr.rel (0) target = $region45
  $region44: #{gt_forward.10} parent=0 // pred_region
    _
  $region45: #{gt_forward.10} parent=0 // pred_fallthru
    _
  // Predicated region
  $region46: #{gt_forward.10} parent=0 // pred_check
    _
  $region47: #{gt_forward.10} parent=0 // pred_check_branch
    %172 = sbr.rel (0) target = $region49
  $region48: #{gt_forward.10} parent=0 // pred_region
    _
  $region49: #{gt_forward.10} parent=0 // pred_fallthru
    _
  // Predicated region
  $region50: #{gt_forward.10} parent=0 // pred_check
    _
  $region51: #{gt_forward.10} parent=0 // pred_check_branch
    %174 = sbr.rel (0) target = $region53
  $region52: #{gt_forward.10} parent=0 // pred_region
    _
  $region53: #{gt_forward.10} parent=0 // pred_fallthru
    _
  // Predicated region
  $region54: #{gt_forward.10} parent=0 // pred_check
    _
  $region55: #{gt_forward.10} parent=0 // pred_check_branch
    %176 = sbr.rel (0) target = $region57
  $region56: #{gt_forward.10} parent=0 // pred_region
    _
  $region57: #{gt_forward.10} parent=0 // pred_fallthru
    _
  // Predicated region
  $region58: #{gt_forward.10} parent=0 // pred_check
    _
  $region59: #{gt_forward.10} parent=0 // pred_check_branch
    %178 = sbr.rel (0) target = $region61
  $region60: #{gt_forward.10} parent=0 // pred_region
    _
  $region61: #{gt_forward.10} parent=0 // pred_fallthru
    _

// kernel: gt_forward.9
$region0: #{gt_forward.9}
  #allocation0 [shape = 'u32[]', space=smem, size = 0x4, offset = 0x4, fixed_abs, tag = 'smem constant byte address 0x4 - core index']
  #allocation1 [shape = 'u32[72,128]{1,0:T(1,128)}', space=vmem, size = 0x9000, scoped, tag = 'internal scratch']
  %s0 = inlined_call_operand.vmem [shape: f32[32,32], index: 0, kind: input, shape index: {}]
  %s1 = inlined_call_operand.vmem [shape: f32[32,32], index: 1, kind: input, shape index: {}]
  %s2 = inlined_call_operand.vmem [shape: f32[1,32], index: 2, kind: input, shape index: {}]
  %s3 = inlined_call_operand.vmem [shape: f32[32,32], index: 3, kind: output, shape index: {0}]
  %s4 = inlined_call_operand.vmem [shape: f32[1,32], index: 4, kind: output, shape index: {1}]
  %s5 = inlined_call_operand.vmem [shape: f32[1,32], index: 5, kind: output, shape index: {2}]
  %6 = xla_tuple %s3, %s4, %s5
  %s7 = sld [smem:[#allocation0]]
  $region38: #{gt_forward.9} parent=0
    _
  %s9 = ssub.s32 1, %s7
  %s10 = scalar_select 0, %s9, %s7
  // Predicated region
  $region2: #{gt_forward.9} parent=0 // pred_check
    _
  $region3: #{gt_forward.9} parent=0 // pred_check_branch
    %12 = sbr.rel (0) target = $region5
  $region4: #{gt_forward.9} parent=0 // pred_region
    _
  $region5: #{gt_forward.9} parent=0 // pred_fallthru
    _
  // Predicated region
  $region6: #{gt_forward.9} parent=0 // pred_check
    _
  $region7: #{gt_forward.9} parent=0 // pred_check_branch
    %14 = sbr.rel (0) target = $region9
  $region8: #{gt_forward.9} parent=0 // pred_region
    _
  $region9: #{gt_forward.9} parent=0 // pred_fallthru
    _
  // Predicated region
  $region10: #{gt_forward.9} parent=0 // pred_check
    _
  $region11: #{gt_forward.9} parent=0 // pred_check_branch
    %16 = sbr.rel (0) target = $region13
  $region12: #{gt_forward.9} parent=0 // pred_region
    _
  $region13: #{gt_forward.9} parent=0 // pred_fallthru
    _
  %v18 = vld [vmem:[%s0] sm:$0xff]
  %v19 = vld [vmem:[%s0 + $0x8] sm:$0xff]
  %v20 = vld [vmem:[%s0 + $0x10] sm:$0xff]
  %v21 = vld [vmem:[%s0 + $0x18] sm:$0xff]
  %v22 = vld [vmem:[%s1] sm:$0xff]
  %v23 = vld [vmem:[%s1 + $0x8] sm:$0xff]
  %v24 = vld [vmem:[%s1 + $0x10] sm:$0xff]
  %v25 = vld [vmem:[%s1 + $0x18] sm:$0xff]
  %v26 = vpack.c.bf16 %v19, %v18
  %v27 = vpack.c.bf16 %v21, %v20
  %v28 = vpack.c.bf16 %v23, %v22
  %v29 = vpack.c.bf16 %v25, %v24
  %v30 = vld [vmem:[%s2] sm:$0x1]
  %v32 = vperm.slane %v30, 0
  %vm34 = vcmask 261120
  %v36 = vsel %vm34, %v26, 0
  %v39 = vsel %vm34, %v27, 0
  %41 = vmatpush.bf16.msra.mxu0 0
  %42 = vmatpush.bf16.msra.mxu0 0
  %43 = vmatpush.bf16.msra.mxu0 0
  %44 = vmatpush.bf16.msra.mxu0 0
  %45 = vmatpush.bf16.msra.mxu0 0
  %46 = vmatpush.bf16.msra.mxu0 0
  %47 = vmatpush.bf16.msra.mxu0 %v29
  %48 = vmatpush.bf16.msra.mxu0 %v28
  %49 = vmatmul.bf16.gmra.mxu0 %v36
  %v50 = vpop.f32.mrf.mxu0
  %v51 = vadd.f32 %v32, %v50
  %v52 = vpop.f32.mrf.mxu0
  %v53 = vadd.f32 %v32, %v52
  %54 = vmatmul.bf16.gmra.mxu0 %v39
  %v55 = vpop.f32.mrf.mxu0
  %v56 = vadd.f32 %v32, %v55
  %v57 = vpop.f32.mrf.mxu0
  %v58 = vadd.f32 %v32, %v57
  %59 = vdwg.mxu0
  %60 = vst.msk [vmem:[%s3] sm:$0xff] %vm34, %v51
  %61 = vst.msk [vmem:[%s3 + $0x8] sm:$0xff] %vm34, %v53
  %62 = vst.msk [vmem:[%s3 + $0x10] sm:$0xff] %vm34, %v56
  %63 = vst.msk [vmem:[%s3 + $0x18] sm:$0xff] %vm34, %v58
  %v64 = vsel %vm34, %v51, 0.0
  %v65 = vsel %vm34, %v53, 0.0
  %v66 = vadd.f32 %v64, %v65
  %v67 = vsel %vm34, %v56, 0.0
  %v68 = vadd.f32 %v66, %v67
  %v69 = vsel %vm34, %v58, 0.0
  %v70 = vadd.f32 %v68, %v69
  %v71 = vrot.slane %v70, 4
  %v72 = vadd.f32 %v70, %v71
  %v73 = vrot.slane %v72, 2
  %v74 = vadd.f32 %v72, %v73
  %v75 = vrot.slane %v74, 1
  %v76 = vadd.f32 %v74, %v75
  %vm77 = vcmask 253952
  %78 = vst.msk [vmem:[%s4] sm:$0x1] %vm77, %v76
  %v79 = vmul.f32 %v51, %v51
  %v80 = vmul.f32 %v53, %v53
  %v81 = vmul.f32 %v56, %v56
  %v82 = vmul.f32 %v58, %v58
  %v83 = vsel %vm34, %v79, 0.0
  %v84 = vsel %vm34, %v80, 0.0
  %v85 = vadd.f32 %v83, %v84
  %v86 = vsel %vm34, %v81, 0.0
  %v87 = vadd.f32 %v85, %v86
  %v88 = vsel %vm34, %v82, 0.0
  %v89 = vadd.f32 %v87, %v88
  %v90 = vrot.slane %v89, 4
  %v91 = vadd.f32 %v89, %v90
  %v92 = vrot.slane %v91, 2
  %v93 = vadd.f32 %v91, %v92
  %v94 = vrot.slane %v93, 1
  %v95 = vadd.f32 %v93, %v94
  %96 = vst.msk [vmem:[%s5] sm:$0x1] %vm77, %v95
  // Predicated region
  $region14: #{gt_forward.9} parent=0 // pred_check
    _
  $region15: #{gt_forward.9} parent=0 // pred_check_branch
    %98 = sbr.rel (0) target = $region17
  $region16: #{gt_forward.9} parent=0 // pred_region
    _
  $region17: #{gt_forward.9} parent=0 // pred_fallthru
    _
  // Predicated region
  $region18: #{gt_forward.9} parent=0 // pred_check
    _
  $region19: #{gt_forward.9} parent=0 // pred_check_branch
    %100 = sbr.rel (0) target = $region21
  $region20: #{gt_forward.9} parent=0 // pred_region
    _
  $region21: #{gt_forward.9} parent=0 // pred_fallthru
    _
  // Predicated region
  $region22: #{gt_forward.9} parent=0 // pred_check
    _
  $region23: #{gt_forward.9} parent=0 // pred_check_branch
    %102 = sbr.rel (0) target = $region25
  $region24: #{gt_forward.9} parent=0 // pred_region
    _
  $region25: #{gt_forward.9} parent=0 // pred_fallthru
    _
  // Predicated region
  $region26: #{gt_forward.9} parent=0 // pred_check
    _
  $region27: #{gt_forward.9} parent=0 // pred_check_branch
    %104 = sbr.rel (0) target = $region29
  $region28: #{gt_forward.9} parent=0 // pred_region
    _
  $region29: #{gt_forward.9} parent=0 // pred_fallthru
    _
  // Predicated region
  $region30: #{gt_forward.9} parent=0 // pred_check
    _
  $region31: #{gt_forward.9} parent=0 // pred_check_branch
    %106 = sbr.rel (0) target = $region33
  $region32: #{gt_forward.9} parent=0 // pred_region
    _
  $region33: #{gt_forward.9} parent=0 // pred_fallthru
    _
  // Predicated region
  $region34: #{gt_forward.9} parent=0 // pred_check
    _
  $region35: #{gt_forward.9} parent=0 // pred_check_branch
    %108 = sbr.rel (0) target = $region37
  $region36: #{gt_forward.9} parent=0 // pred_region
    _
  $region37: #{gt_forward.9} parent=0 // pred_fallthru
    _

// kernel: gt_forward.8
$region0: #{gt_forward.8}
  #allocation0 [shape = 'u32[]', space=smem, size = 0x4, offset = 0x4, fixed_abs, tag = 'smem constant byte address 0x4 - core index']
  #allocation1 [shape = 'u32[72,128]{1,0:T(1,128)}', space=vmem, size = 0x9000, scoped, tag = 'internal scratch']
  %s0 = inlined_call_operand.vmem [shape: f32[2,16,32], index: 0, kind: input, shape index: {}]
  %s1 = inlined_call_operand.vmem [shape: f32[2,16,8,32], index: 1, kind: input, shape index: {}]
  %s2 = inlined_call_operand.vmem [shape: f32[2,16,8,32], index: 2, kind: input, shape index: {}]
  %s3 = inlined_call_operand.vmem [shape: f32[2,16,8,12], index: 3, kind: input, shape index: {}]
  %s4 = inlined_call_operand.vmem [shape: f32[12,32], index: 4, kind: input, shape index: {}]
  %s5 = inlined_call_operand.vmem [shape: f32[1,32], index: 5, kind: input, shape index: {}]
  %s6 = inlined_call_operand.vmem [shape: f32[32,32], index: 6, kind: input, shape index: {}]
  %s7 = inlined_call_operand.vmem [shape: f32[1,32], index: 7, kind: input, shape index: {}]
  %s8 = inlined_call_operand.vmem [shape: f32[32,32], index: 8, kind: input, shape index: {}]
  %s9 = inlined_call_operand.vmem [shape: f32[1,32], index: 9, kind: input, shape index: {}]
  %s10 = inlined_call_operand.vmem [shape: f32[32,32], index: 10, kind: input, shape index: {}]
  %s11 = inlined_call_operand.vmem [shape: f32[1,32], index: 11, kind: input, shape index: {}]
  %s12 = inlined_call_operand.hbm [shape: bf16[2,16,8,32], index: 12, kind: output, shape index: {0}]
  %s13 = inlined_call_operand.vmem [shape: f32[2,16,32], index: 13, kind: output, shape index: {1}]
  %14 = xla_tuple %s12, %s13
  %s15 = sld [smem:[#allocation0]]
  $region89: #{gt_forward.8} parent=0
    _
  %s17 = ssub.s32 1, %s15
  %s18 = scalar_select 0, %s17, %s15
  $region1: #{gt_forward.8} parent=0
    #allocation2 [shape = 'u8[65536]{0}', space=vmem, size = 0x10000, scoped, tag = 'output window, operand 0']
    #allocation3 [shape = 's32[2]{0}', space=sflag, size = 0x8, scoped, tag = 'scoped memory for gt_forward.8']
    %19 = vsyncpa [#allocation3], 0
    %s20 = scalar_lea.sflag [#allocation3], 1
    %21 = vsyncpa %s20, 0
    loop: start=0, step=1, limit=4
    $region2: #{gt_forward.8} parent=1 // loop_pre_header
      _
    $region3: #{gt_forward.8} parent=1 // loop_header
      %s23 = sphi 0, %s27
      %p24 = scmp.ge.s32.totalorder %s23, 4
      %s30 = sphi 0, %s42
      %s31 = sphi 0, %s38
      %s32 = sphi 0, %s30
      %s33 = sphi 0, %s31
      %s34 = sphi 0, %s32
      %s35 = sphi 0, %s33
      %s47 = sphi 0, %s49
      %s50 = sphi 0, %s47
      %s51 = sphi 0, %s50
      %s67 = sphi 0, %s51
      %s75 = sphi 0, %s77
      %s78 = sphi 0, %s75
      %s79 = sphi 0, %s78
      %s95 = sphi 0, %s79
      %s103 = sphi 0, %s105
      %s106 = sphi 0, %s103
      %s107 = sphi 0, %s106
      %s123 = sphi 0, %s107
      %s131 = sphi 0, %s133
      %s134 = sphi 0, %s131
      %s135 = sphi 0, %s134
      %s151 = sphi 0, %s135
      %s155 = sphi 0, %s155
      %s157 = sphi 0, %s155
      %s158 = sphi 0, %s157
      %s172 = sphi 0, %s158
      %s176 = sphi 0, %s176
      %s178 = sphi 0, %s176
      %s179 = sphi 0, %s178
      %s193 = sphi 0, %s179
      %s197 = sphi 0, %s197
      %s199 = sphi 0, %s197
      %s200 = sphi 0, %s199
      %s214 = sphi 0, %s200
      %s218 = sphi 0, %s218
      %s220 = sphi 0, %s218
      %s221 = sphi 0, %s220
      %s235 = sphi 0, %s221
      %s239 = sphi 0, %s239
      %s241 = sphi 0, %s239
      %s242 = sphi 0, %s241
      %s256 = sphi 0, %s242
      %s260 = sphi 0, %s260
      %s262 = sphi 0, %s260
      %s263 = sphi 0, %s262
      %s277 = sphi 0, %s263
      %s281 = sphi 0, %s281
      %s283 = sphi 0, %s281
      %s284 = sphi 0, %s283
      %s298 = sphi 0, %s284
      %s302 = sphi 0, %s302
      %s304 = sphi 0, %s302
      %s305 = sphi 0, %s304
      %s319 = sphi 0, %s305
      %s327 = sphi 0, %s329
      %s330 = sphi 0, %s327
      %s331 = sphi 0, %s330
      %s347 = sphi 0, %s331
      %s355 = sphi 0, %s357
      %s358 = sphi 0, %s355
      %s359 = sphi 0, %s358
      %s375 = sphi 0, %s359
    $region4: #{gt_forward.8} parent=1 // loop_header_branch
      %26 = sbr.rel (%p24) target = $region8
    $region5: #{gt_forward.8} parent=1 // loop_body
      %s28 = ssub.s32 %s23, 1
      %s29 = ssub.s32 %s23, 2
      %s36 = sadd.s32 1, %s31
      %p37 = scmp.ge.s32.totalorder %s36, 1
      %s38 = scalar_select %p37, 0, %s36
      %s39 = sadd.s32 1, %s30
      %s40 = scalar_select %p37, %s39, %s30
      %p41 = scmp.ge.s32.totalorder %s40, 2
      %s42 = scalar_select %p41, 0, %s40
      %s43 = ssub.s32 %s30, %s42
      %s44 = ssub.s32 %s31, %s38
      %s45 = sor.u32 %s43, %s44
      %p46 = scmp.eq.s32.totalorder %s45, 0
      %s48 = sadd.s32 %s47, 1
      %s49 = scalar_select %p46, %s47, %s48
      %p52 = pneg %p46
      %p53 = scmp.eq.s32.totalorder %s23, 1
      %p54 = por %p52, %p53
      %p55 = scmp.ne.s32.totalorder %s47, %s50
      %p56 = scmp.eq.s32.totalorder %s23, 0
      %p57 = por %p55, %p56
      %p58 = scmp.ne.s32.totalorder %s47, %s50
      %p59 = scmp.eq.s32.totalorder %s28, 1
      %p60 = por %p58, %p59
      %p61 = scmp.ne.s32.totalorder %s50, %s51
      %p62 = scmp.eq.s32.totalorder %s28, 0
      %p63 = por %p61, %p62
      %p64 = scmp.ne.s32.totalorder %s50, %s51
      %p65 = scmp.eq.s32.totalorder %s29, 1
      %p66 = por %p64, %p65
      %p68 = scmp.ne.s32.totalorder %s51, %s67
      %p69 = scmp.eq.s32.totalorder %s29, 0
      %p70 = por %p68, %p69
      %s71 = ssub.s32 %s30, %s42
      %s72 = ssub.s32 %s31, %s38
      %s73 = sor.u32 %s71, %s72
      %p74 = scmp.eq.s32.totalorder %s73, 0
      %s76 = sadd.s32 %s75, 1
      %s77 = scalar_select %p74, %s75, %s76
      %p80 = pneg %p74
      %p81 = scmp.eq.s32.totalorder %s23, 1
      %p82 = por %p80, %p81
      %p83 = scmp.ne.s32.totalorder %s75, %s78
      %p84 = scmp.eq.s32.totalorder %s23, 0
      %p85 = por %p83, %p84
      %p86 = scmp.ne.s32.totalorder %s75, %s78
      %p87 = scmp.eq.s32.totalorder %s28, 1
      %p88 = por %p86, %p87
      %p89 = scmp.ne.s32.totalorder %s78, %s79
      %p90 = scmp.eq.s32.totalorder %s28, 0
      %p91 = por %p89, %p90
      %p92 = scmp.ne.s32.totalorder %s78, %s79
      %p93 = scmp.eq.s32.totalorder %s29, 1
      %p94 = por %p92, %p93
      %p96 = scmp.ne.s32.totalorder %s79, %s95
      %p97 = scmp.eq.s32.totalorder %s29, 0
      %p98 = por %p96, %p97
      %s99 = ssub.s32 %s30, %s42
      %s100 = ssub.s32 %s31, %s38
      %s101 = sor.u32 %s99, %s100
      %p102 = scmp.eq.s32.totalorder %s101, 0
      %s104 = sadd.s32 %s103, 1
      %s105 = scalar_select %p102, %s103, %s104
      %p108 = pneg %p102
      %p109 = scmp.eq.s32.totalorder %s23, 1
      %p110 = por %p108, %p109
      %p111 = scmp.ne.s32.totalorder %s103, %s106
      %p112 = scmp.eq.s32.totalorder %s23, 0
      %p113 = por %p111, %p112
      %p114 = scmp.ne.s32.totalorder %s103, %s106
      %p115 = scmp.eq.s32.totalorder %s28, 1
      %p116 = por %p114, %p115
      %p117 = scmp.ne.s32.totalorder %s106, %s107
      %p118 = scmp.eq.s32.totalorder %s28, 0
      %p119 = por %p117, %p118
      %p120 = scmp.ne.s32.totalorder %s106, %s107
      %p121 = scmp.eq.s32.totalorder %s29, 1
      %p122 = por %p120, %p121
      %p124 = scmp.ne.s32.totalorder %s107, %s123
      %p125 = scmp.eq.s32.totalorder %s29, 0
      %p126 = por %p124, %p125
      %s127 = ssub.s32 %s30, %s42
      %s128 = ssub.s32 %s31, %s38
      %s129 = sor.u32 %s127, %s128
      %p130 = scmp.eq.s32.totalorder %s129, 0
      %s132 = sadd.s32 %s131, 1
      %s133 = scalar_select %p130, %s131, %s132
      %p136 = pneg %p130
      %p137 = scmp.eq.s32.totalorder %s23, 1
      %p138 = por %p136, %p137
      %p139 = scmp.ne.s32.totalorder %s131, %s134
      %p140 = scmp.eq.s32.totalorder %s23, 0
      %p141 = por %p139, %p140
      %p142 = scmp.ne.s32.totalorder %s131, %s134
      %p143 = scmp.eq.s32.totalorder %s28, 1
      %p144 = por %p142, %p143
      %p145 = scmp.ne.s32.totalorder %s134, %s135
      %p146 = scmp.eq.s32.totalorder %s28, 0
      %p147 = por %p145, %p146
      %p148 = scmp.ne.s32.totalorder %s134, %s135
      %p149 = scmp.eq.s32.totalorder %s29, 1
      %p150 = por %p148, %p149
      %p152 = scmp.ne.s32.totalorder %s135, %s151
      %p153 = scmp.eq.s32.totalorder %s29, 0
      %p154 = por %p152, %p153
      %s156 = sadd.s32 %s155, 1
      %p159 = scmp.eq.s32.totalorder %s23, 1
      %p160 = scmp.ne.s32.totalorder %s155, %s157
      %p161 = scmp.eq.s32.totalorder %s23, 0
      %p162 = por %p160, %p161
      %p163 = scmp.ne.s32.totalorder %s155, %s157
      %p164 = scmp.eq.s32.totalorder %s28, 1
      %p165 = por %p163, %p164
      %p166 = scmp.ne.s32.totalorder %s157, %s158
      %p167 = scmp.eq.s32.totalorder %s28, 0
      %p168 = por %p166, %p167
      %p169 = scmp.ne.s32.totalorder %s157, %s158
      %p170 = scmp.eq.s32.totalorder %s29, 1
      %p171 = por %p169, %p170
      %p173 = scmp.ne.s32.totalorder %s158, %s172
      %p174 = scmp.eq.s32.totalorder %s29, 0
      %p175 = por %p173, %p174
      %s177 = sadd.s32 %s176, 1
      %p180 = scmp.eq.s32.totalorder %s23, 1
      %p181 = scmp.ne.s32.totalorder %s176, %s178
      %p182 = scmp.eq.s32.totalorder %s23, 0
      %p183 = por %p181, %p182
      %p184 = scmp.ne.s32.totalorder %s176, %s178
      %p185 = scmp.eq.s32.totalorder %s28, 1
      %p186 = por %p184, %p185
      %p187 = scmp.ne.s32.totalorder %s178, %s179
      %p188 = scmp.eq.s32.totalorder %s28, 0
      %p189 = por %p187, %p188
      %p190 = scmp.ne.s32.totalorder %s178, %s179
      %p191 = scmp.eq.s32.totalorder %s29, 1
      %p192 = por %p190, %p191
      %p194 = scmp.ne.s32.totalorder %s179, %s193
      %p195 = scmp.eq.s32.totalorder %s29, 0
      %p196 = por %p194, %p195
      %s198 = sadd.s32 %s197, 1
      %p201 = scmp.eq.s32.totalorder %s23, 1
      %p202 = scmp.ne.s32.totalorder %s197, %s199
      %p203 = scmp.eq.s32.totalorder %s23, 0
      %p204 = por %p202, %p203
      %p205 = scmp.ne.s32.totalorder %s197, %s199
      %p206 = scmp.eq.s32.totalorder %s28, 1
      %p207 = por %p205, %p206
      %p208 = scmp.ne.s32.totalorder %s199, %s200
      %p209 = scmp.eq.s32.totalorder %s28, 0
      %p210 = por %p208, %p209
      %p211 = scmp.ne.s32.totalorder %s199, %s200
      %p212 = scmp.eq.s32.totalorder %s29, 1
      %p213 = por %p211, %p212
      %p215 = scmp.ne.s32.totalorder %s200, %s214
      %p216 = scmp.eq.s32.totalorder %s29, 0
      %p217 = por %p215, %p216
      %s219 = sadd.s32 %s218, 1
      %p222 = scmp.eq.s32.totalorder %s23, 1
      %p223 = scmp.ne.s32.totalorder %s218, %s220
      %p224 = scmp.eq.s32.totalorder %s23, 0
      %p225 = por %p223, %p224
      %p226 = scmp.ne.s32.totalorder %s218, %s220
      %p227 = scmp.eq.s32.totalorder %s28, 1
      %p228 = por %p226, %p227
      %p229 = scmp.ne.s32.totalorder %s220, %s221
      %p230 = scmp.eq.s32.totalorder %s28, 0
      %p231 = por %p229, %p230
      %p232 = scmp.ne.s32.totalorder %s220, %s221
      %p233 = scmp.eq.s32.totalorder %s29, 1
      %p234 = por %p232, %p233
      %p236 = scmp.ne.s32.totalorder %s221, %s235
      %p237 = scmp.eq.s32.totalorder %s29, 0
      %p238 = por %p236, %p237
      %s240 = sadd.s32 %s239, 1
      %p243 = scmp.eq.s32.totalorder %s23, 1
      %p244 = scmp.ne.s32.totalorder %s239, %s241
      %p245 = scmp.eq.s32.totalorder %s23, 0
      %p246 = por %p244, %p245
      %p247 = scmp.ne.s32.totalorder %s239, %s241
      %p248 = scmp.eq.s32.totalorder %s28, 1
      %p249 = por %p247, %p248
      %p250 = scmp.ne.s32.totalorder %s241, %s242
      %p251 = scmp.eq.s32.totalorder %s28, 0
      %p252 = por %p250, %p251
      %p253 = scmp.ne.s32.totalorder %s241, %s242
      %p254 = scmp.eq.s32.totalorder %s29, 1
      %p255 = por %p253, %p254
      %p257 = scmp.ne.s32.totalorder %s242, %s256
      %p258 = scmp.eq.s32.totalorder %s29, 0
      %p259 = por %p257, %p258
      %s261 = sadd.s32 %s260, 1
      %p264 = scmp.eq.s32.totalorder %s23, 1
      %p265 = scmp.ne.s32.totalorder %s260, %s262
      %p266 = scmp.eq.s32.totalorder %s23, 0
      %p267 = por %p265, %p266
      %p268 = scmp.ne.s32.totalorder %s260, %s262
      %p269 = scmp.eq.s32.totalorder %s28, 1
      %p270 = por %p268, %p269
      %p271 = scmp.ne.s32.totalorder %s262, %s263
      %p272 = scmp.eq.s32.totalorder %s28, 0
      %p273 = por %p271, %p272
      %p274 = scmp.ne.s32.totalorder %s262, %s263
      %p275 = scmp.eq.s32.totalorder %s29, 1
      %p276 = por %p274, %p275
      %p278 = scmp.ne.s32.totalorder %s263, %s277
      %p279 = scmp.eq.s32.totalorder %s29, 0
      %p280 = por %p278, %p279
      %s282 = sadd.s32 %s281, 1
      %p285 = scmp.eq.s32.totalorder %s23, 1
      %p286 = scmp.ne.s32.totalorder %s281, %s283
      %p287 = scmp.eq.s32.totalorder %s23, 0
      %p288 = por %p286, %p287
      %p289 = scmp.ne.s32.totalorder %s281, %s283
      %p290 = scmp.eq.s32.totalorder %s28, 1
      %p291 = por %p289, %p290
      %p292 = scmp.ne.s32.totalorder %s283, %s284
      %p293 = scmp.eq.s32.totalorder %s28, 0
      %p294 = por %p292, %p293
      %p295 = scmp.ne.s32.totalorder %s283, %s284
      %p296 = scmp.eq.s32.totalorder %s29, 1
      %p297 = por %p295, %p296
      %p299 = scmp.ne.s32.totalorder %s284, %s298
      %p300 = scmp.eq.s32.totalorder %s29, 0
      %p301 = por %p299, %p300
      %s303 = sadd.s32 %s302, 1
      %p306 = scmp.eq.s32.totalorder %s23, 1
      %p307 = scmp.ne.s32.totalorder %s302, %s304
      %p308 = scmp.eq.s32.totalorder %s23, 0
      %p309 = por %p307, %p308
      %p310 = scmp.ne.s32.totalorder %s302, %s304
      %p311 = scmp.eq.s32.totalorder %s28, 1
      %p312 = por %p310, %p311
      %p313 = scmp.ne.s32.totalorder %s304, %s305
      %p314 = scmp.eq.s32.totalorder %s28, 0
      %p315 = por %p313, %p314
      %p316 = scmp.ne.s32.totalorder %s304, %s305
      %p317 = scmp.eq.s32.totalorder %s29, 1
      %p318 = por %p316, %p317
      %p320 = scmp.ne.s32.totalorder %s305, %s319
      %p321 = scmp.eq.s32.totalorder %s29, 0
      %p322 = por %p320, %p321
      %s323 = ssub.s32 %s30, %s42
      %s324 = ssub.s32 %s31, %s38
      %s325 = sor.u32 %s323, %s324
      %p326 = scmp.eq.s32.totalorder %s325, 0
      %s328 = sadd.s32 %s327, 1
      %s329 = scalar_select %p326, %s327, %s328
      %p332 = pneg %p326
      %p333 = scmp.eq.s32.totalorder %s23, 1
      %p334 = por %p332, %p333
      %p335 = scmp.ne.s32.totalorder %s327, %s330
      %p336 = scmp.eq.s32.totalorder %s23, 0
      %p337 = por %p335, %p336
      %p338 = scmp.ne.s32.totalorder %s327, %s330
      %p339 = scmp.eq.s32.totalorder %s28, 1
      %p340 = por %p338, %p339
      %p341 = scmp.ne.s32.totalorder %s330, %s331
      %p342 = scmp.eq.s32.totalorder %s28, 0
      %p343 = por %p341, %p342
      %p344 = scmp.ne.s32.totalorder %s330, %s331
      %p345 = scmp.eq.s32.totalorder %s29, 1
      %p346 = por %p344, %p345
      %p348 = scmp.ne.s32.totalorder %s331, %s347
      %p349 = scmp.eq.s32.totalorder %s29, 0
      %p350 = por %p348, %p349
      %s351 = ssub.s32 %s30, %s42
      %s352 = ssub.s32 %s31, %s38
      %s353 = sor.u32 %s351, %s352
      %p354 = scmp.eq.s32.totalorder %s353, 0
      %s356 = sadd.s32 %s355, 1
      %s357 = scalar_select %p354, %s355, %s356
      %p360 = pneg %p354
      %p361 = scmp.eq.s32.totalorder %s23, 1
      %p362 = por %p360, %p361
      %p363 = scmp.ne.s32.totalorder %s355, %s358
      %p364 = scmp.eq.s32.totalorder %s23, 0
      %p365 = por %p363, %p364
      %p366 = scmp.ne.s32.totalorder %s355, %s358
      %p367 = scmp.eq.s32.totalorder %s28, 1
      %p368 = por %p366, %p367
      %p369 = scmp.ne.s32.totalorder %s358, %s359
      %p370 = scmp.eq.s32.totalorder %s28, 0
      %p371 = por %p369, %p370
      %p372 = scmp.ne.s32.totalorder %s358, %s359
      %p373 = scmp.eq.s32.totalorder %s29, 1
      %p374 = por %p372, %p373
      %p376 = scmp.ne.s32.totalorder %s359, %s375
      %p377 = scmp.eq.s32.totalorder %s29, 0
      %p378 = por %p376, %p377
      %p379 = scmp.le.s32.totalorder 1, %s23
      %p380 = scmp.lt.s32.totalorder %s23, 3
      %p381 = pnand %p379, %p380
      %p382 = pneg %p381
      // Predicated region
      $region9: #{gt_forward.8} parent=5 // pred_check
        _
      $region10: #{gt_forward.8} parent=5 // pred_check_branch
        %384 = sbr.rel (%p381) target = $region12
      $region11: #{gt_forward.8} parent=5 // pred_region
        %s385 = ssub.s32 %s23, 1
        // Predicated region
        $region13: #{gt_forward.8} parent=11 // pred_check
          %p386 = pneg %p168
        $region14: #{gt_forward.8} parent=11 // pred_check_branch
          %388 = sbr.rel (%p386) target = $region16
        $region15: #{gt_forward.8} parent=11 // pred_region
          _
        $region16: #{gt_forward.8} parent=11 // pred_fallthru
          _
        // Predicated region
        $region17: #{gt_forward.8} parent=11 // pred_check
          %p389 = pneg %p189
        $region18: #{gt_forward.8} parent=11 // pred_check_branch
          %391 = sbr.rel (%p389) target = $region20
        $region19: #{gt_forward.8} parent=11 // pred_region
          _
        $region20: #{gt_forward.8} parent=11 // pred_fallthru
          _
        // Predicated region
        $region21: #{gt_forward.8} parent=11 // pred_check
          %p392 = pneg %p210
        $region22: #{gt_forward.8} parent=11 // pred_check_branch
          %394 = sbr.rel (%p392) target = $region24
        $region23: #{gt_forward.8} parent=11 // pred_region
          _
        $region24: #{gt_forward.8} parent=11 // pred_fallthru
          _
        // Predicated region
        $region25: #{gt_forward.8} parent=11 // pred_check
          %p395 = pneg %p231
        $region26: #{gt_forward.8} parent=11 // pred_check_branch
          %397 = sbr.rel (%p395) target = $region28
        $region27: #{gt_forward.8} parent=11 // pred_region
          _
        $region28: #{gt_forward.8} parent=11 // pred_fallthru
          _
        // Predicated region
        $region29: #{gt_forward.8} parent=11 // pred_check
          %p398 = pneg %p252
        $region30: #{gt_forward.8} parent=11 // pred_check_branch
          %400 = sbr.rel (%p398) target = $region32
        $region31: #{gt_forward.8} parent=11 // pred_region
          _
        $region32: #{gt_forward.8} parent=11 // pred_fallthru
          _
        // Predicated region
        $region33: #{gt_forward.8} parent=11 // pred_check
          %p401 = pneg %p273
        $region34: #{gt_forward.8} parent=11 // pred_check_branch
          %403 = sbr.rel (%p401) target = $region36
        $region35: #{gt_forward.8} parent=11 // pred_region
          _
        $region36: #{gt_forward.8} parent=11 // pred_fallthru
          _
        // Predicated region
        $region37: #{gt_forward.8} parent=11 // pred_check
          %p404 = pneg %p294
        $region38: #{gt_forward.8} parent=11 // pred_check_branch
          %406 = sbr.rel (%p404) target = $region40
        $region39: #{gt_forward.8} parent=11 // pred_region
          _
        $region40: #{gt_forward.8} parent=11 // pred_fallthru
          _
        // Predicated region
        $region41: #{gt_forward.8} parent=11 // pred_check
          %p407 = pneg %p315
        $region42: #{gt_forward.8} parent=11 // pred_check_branch
          %409 = sbr.rel (%p407) target = $region44
        $region43: #{gt_forward.8} parent=11 // pred_region
          _
        $region44: #{gt_forward.8} parent=11 // pred_fallthru
          _
      $region12: #{gt_forward.8} parent=5 // pred_fallthru
        _
      %p410 = scmp.lt.s32.totalorder %s23, 2
      // Predicated region
      $region45: #{gt_forward.8} parent=5 // pred_check
        %p411 = pneg %p410
      $region46: #{gt_forward.8} parent=5 // pred_check_branch
        %413 = sbr.rel (%p411) target = $region48
      $region47: #{gt_forward.8} parent=5 // pred_region
        // Predicated region
        $region49: #{gt_forward.8} parent=47 // pred_check
          %p414 = pneg %p57
        $region50: #{gt_forward.8} parent=47 // pred_check_branch
          %416 = sbr.rel (%p414) target = $region52
        $region51: #{gt_forward.8} parent=47 // pred_region
          %s417 = smul.u32 2, %s31
          %p418 = scmp.lt.s32.totalorder %s30, 1
          %s419 = scalar_select %p418, %s30, 1
          %p420 = scmp.lt.s32.totalorder %s417, 1
          %s421 = scalar_select %p420, %s417, 1
          %s422 = smul.addr %s419, 2
          %s423 = sadd.s32 %s421, %s422
          %s424 = smul.addr %s423, 8
          %s425 = scalar_lea.vmem %s0, %s424
          %s426 = smul.u32 2, %s31
        $region52: #{gt_forward.8} parent=47 // pred_fallthru
          _
        // Predicated region
        $region53: #{gt_forward.8} parent=47 // pred_check
          %p427 = pneg %p85
        $region54: #{gt_forward.8} parent=47 // pred_check_branch
          %429 = sbr.rel (%p427) target = $region56
        $region55: #{gt_forward.8} parent=47 // pred_region
          %s430 = smul.u32 16, %s31
          %p431 = scmp.lt.s32.totalorder %s30, 1
          %s432 = scalar_select %p431, %s30, 1
          %p433 = scmp.lt.s32.totalorder %s430, 15
          %s434 = scalar_select %p433, %s430, 15
          %s435 = smul.addr %s432, 16
          %s436 = sadd.s32 %s434, %s435
          %s437 = smul.addr %s436, 8
          %s438 = scalar_lea.vmem %s1, %s437
          %s439 = smul.u32 16, %s31
        $region56: #{gt_forward.8} parent=47 // pred_fallthru
          _
        // Predicated region
        $region57: #{gt_forward.8} parent=47 // pred_check
          %p440 = pneg %p113
        $region58: #{gt_forward.8} parent=47 // pred_check_branch
          %442 = sbr.rel (%p440) target = $region60
        $region59: #{gt_forward.8} parent=47 // pred_region
          %s443 = smul.u32 16, %s31
          %p444 = scmp.lt.s32.totalorder %s30, 1
          %s445 = scalar_select %p444, %s30, 1
          %p446 = scmp.lt.s32.totalorder %s443, 15
          %s447 = scalar_select %p446, %s443, 15
          %s448 = smul.addr %s445, 16
          %s449 = sadd.s32 %s447, %s448
          %s450 = smul.addr %s449, 8
          %s451 = scalar_lea.vmem %s2, %s450
          %s452 = smul.u32 16, %s31
        $region60: #{gt_forward.8} parent=47 // pred_fallthru
          _
        // Predicated region
        $region61: #{gt_forward.8} parent=47 // pred_check
          %p453 = pneg %p141
        $region62: #{gt_forward.8} parent=47 // pred_check_branch
          %455 = sbr.rel (%p453) target = $region64
        $region63: #{gt_forward.8} parent=47 // pred_region
          %s456 = smul.u32 16, %s31
          %p457 = scmp.lt.s32.totalorder %s30, 1
          %s458 = scalar_select %p457, %s30, 1
          %p459 = scmp.lt.s32.totalorder %s456, 15
          %s460 = scalar_select %p459, %s456, 15
          %s461 = smul.addr %s458, 16
          %s462 = sadd.s32 %s460, %s461
          %s463 = smul.addr %s462, 8
          %s464 = scalar_lea.vmem %s3, %s463
          %s465 = smul.u32 16, %s31
        $region64: #{gt_forward.8} parent=47 // pred_fallthru
          _
      $region48: #{gt_forward.8} parent=5 // pred_fallthru
        _
      %p466 = scmp.le.s32.totalorder 1, %s23
      %p467 = scmp.lt.s32.totalorder %s23, 3
      %p468 = pnand %p466, %p467
      %p469 = pneg %p468
      // Predicated region
      $region65: #{gt_forward.8} parent=5 // pred_check
        _
      $region66: #{gt_forward.8} parent=5 // pred_check_branch
        %471 = sbr.rel (%p468) target = $region68
      $region67: #{gt_forward.8} parent=5 // pred_region
        %s472 = ssub.s32 %s23, 1
        %s473 = smul.u32 2, %s33
        %p474 = scmp.lt.s32.totalorder %s32, 1
        %s475 = scalar_select %p474, %s32, 1
        %p476 = scmp.lt.s32.totalorder %s473, 1
        %s477 = scalar_select %p476, %s473, 1
        %s478 = smul.addr %s475, 2
        %s479 = sadd.s32 %s477, %s478
        %s480 = smul.addr %s479, 8
        %s481 = scalar_lea.vmem %s0, %s480
        %p482 = pneg %p63
        %p483 = pneg %p60
        %s484 = smul.u32 16, %s33
        %p485 = scmp.lt.s32.totalorder %s32, 1
        %s486 = scalar_select %p485, %s32, 1
        %p487 = scmp.lt.s32.totalorder %s484, 15
        %s488 = scalar_select %p487, %s484, 15
        %s489 = smul.addr %s486, 16
        %s490 = sadd.s32 %s488, %s489
        %s491 = smul.addr %s490, 8
        %s492 = scalar_lea.vmem %s1, %s491
        %p493 = pneg %p91
        %p494 = pneg %p88
        %s495 = smul.u32 16, %s33
        %p496 = scmp.lt.s32.totalorder %s32, 1
        %s497 = scalar_select %p496, %s32, 1
        %p498 = scmp.lt.s32.totalorder %s495, 15
        %s499 = scalar_select %p498, %s495, 15
        %s500 = smul.addr %s497, 16
        %s501 = sadd.s32 %s499, %s500
        %s502 = smul.addr %s501, 8
        %s503 = scalar_lea.vmem %s2, %s502
        %p504 = pneg %p119
        %p505 = pneg %p116
        %s506 = smul.u32 16, %s33
        %p507 = scmp.lt.s32.totalorder %s32, 1
        %s508 = scalar_select %p507, %s32, 1
        %p509 = scmp.lt.s32.totalorder %s506, 15
        %s510 = scalar_select %p509, %s506, 15
        %s511 = smul.addr %s508, 16
        %s512 = sadd.s32 %s510, %s511
        %s513 = smul.addr %s512, 8
        %s514 = scalar_lea.vmem %s3, %s513
        %p515 = pneg %p147
        %p516 = pneg %p144
        %p517 = pneg %p168
        %p518 = pneg %p165
        %p519 = pneg %p189
        %p520 = pneg %p186
        %p521 = pneg %p210
        %p522 = pneg %p207
        %p523 = pneg %p231
        %p524 = pneg %p228
        %p525 = pneg %p252
        %p526 = pneg %p249
        %p527 = pneg %p273
        %p528 = pneg %p270
        %p529 = pneg %p294
        %p530 = pneg %p291
        %p531 = pneg %p315
        %p532 = pneg %p312
        %p533 = pneg %p343
        %p534 = pneg %p340
        %s535 = sand.u32 %s330, 1
        %s536 = scalar_lea.sflag [#allocation3], %s535
        %s537 = sand.u32 %s330, 1
        %s538 = smul.addr %s537, 64
        %s539 = scalar_lea.vmem [#allocation2], %s538
        %p540 = pneg %p371
        %p541 = pneg %p368
        %s542 = smul.u32 2, %s33
        %p543 = scmp.lt.s32.totalorder %s32, 1
        %s544 = scalar_select %p543, %s32, 1
        %p545 = scmp.lt.s32.totalorder %s542, 1
        %s546 = scalar_select %p545, %s542, 1
        %s547 = smul.addr %s544, 2
        %s548 = sadd.s32 %s546, %s547
        %s549 = smul.addr %s548, 8
        %s550 = scalar_lea.vmem %s13, %s549
        %s551 = smul.u32 2, %s33
        %p552 = scmp.lt.s32.totalorder %s32, 1
        %s553 = scalar_select %p552, %s32, 1
        %p554 = scmp.lt.s32.totalorder %s551, 1
        %s555 = scalar_select %p554, %s551, 1
        %s556 = smul.addr %s553, 2
        %s557 = sadd.s32 %s555, %s556
        %s558 = smul.addr %s557, 8
        %s559 = scalar_lea.vmem %s0, %s558
        %s560 = smul.u32 2, %s33
        %s561 = smul.u32 16, %s33
        %p562 = scmp.lt.s32.totalorder %s32, 1
        %s563 = scalar_select %p562, %s32, 1
        %p564 = scmp.lt.s32.totalorder %s561, 15
        %s565 = scalar_select %p564, %s561, 15
        %s566 = smul.addr %s563, 16
        %s567 = sadd.s32 %s565, %s566
        %s568 = smul.addr %s567, 8
        %s569 = scalar_lea.vmem %s1, %s568
        %s570 = smul.u32 16, %s33
        %s571 = smul.u32 16, %s33
        %p572 = scmp.lt.s32.totalorder %s32, 1
        %s573 = scalar_select %p572, %s32, 1
        %p574 = scmp.lt.s32.totalorder %s571, 15
        %s575 = scalar_select %p574, %s571, 15
        %s576 = smul.addr %s573, 16
        %s577 = sadd.s32 %s575, %s576
        %s578 = smul.addr %s577, 8
        %s579 = scalar_lea.vmem %s2, %s578
        %s580 = smul.u32 16, %s33
        %s581 = smul.u32 16, %s33
        %p582 = scmp.lt.s32.totalorder %s32, 1
        %s583 = scalar_select %p582, %s32, 1
        %p584 = scmp.lt.s32.totalorder %s581, 15
        %s585 = scalar_select %p584, %s581, 15
        %s586 = smul.addr %s583, 16
        %s587 = sadd.s32 %s585, %s586
        %s588 = smul.addr %s587, 8
        %s589 = scalar_lea.vmem %s3, %s588
        %s590 = smul.u32 16, %s33
        %s591 = smul.u32 16, %s33
        %s592 = smul.u32 2, %s33
        %p593 = scmp.lt.s32.totalorder %s32, 1
        %s594 = scalar_select %p593, %s32, 1
        %p595 = scmp.lt.s32.totalorder %s592, 1
        %s596 = scalar_select %p595, %s592, 1
        %s597 = smul.addr %s594, 2
        %s598 = sadd.s32 %s596, %s597
        %s599 = smul.addr %s598, 8
        %s600 = scalar_lea.vmem %s13, %s599
        %s601 = smul.u32 2, %s33
        %v603 = vld [vmem:[%s589] sm:$0xff]
        %v604 = vld [vmem:[%s589 + $0x8] sm:$0xff]
        %v605 = vld [vmem:[%s589 + $0x10] sm:$0xff]
        %v606 = vld [vmem:[%s589 + $0x18] sm:$0xff]
        %v607 = vld [vmem:[%s589 + $0x20] sm:$0xff]
        %v608 = vld [vmem:[%s589 + $0x28] sm:$0xff]
        %v609 = vld [vmem:[%s589 + $0x30] sm:$0xff]
        %v610 = vld [vmem:[%s589 + $0x38] sm:$0xff]
        %v611 = vld [vmem:[%s589 + $0x40] sm:$0xff]
        %v612 = vld [vmem:[%s589 + $0x48] sm:$0xff]
        %v613 = vld [vmem:[%s589 + $0x50] sm:$0xff]
        %v614 = vld [vmem:[%s589 + $0x58] sm:$0xff]
        %v615 = vld [vmem:[%s589 + $0x60] sm:$0xff]
        %v616 = vld [vmem:[%s589 + $0x68] sm:$0xff]
        %v617 = vld [vmem:[%s589 + $0x70] sm:$0xff]
        %v618 = vld [vmem:[%s589 + $0x78] sm:$0xff]
        %v619 = vld [vmem:[%s4] sm:$0xff]
        %v620 = vld [vmem:[%s4 + $0x8] sm:$0xf]
        %v621 = vpack.c.bf16 %v604, %v603
        %v622 = vpack.c.bf16 %v606, %v605
        %v623 = vpack.c.bf16 %v608, %v607
        %v624 = vpack.c.bf16 %v610, %v609
        %v625 = vpack.c.bf16 %v612, %v611
        %v626 = vpack.c.bf16 %v614, %v613
        %v627 = vpack.c.bf16 %v616, %v615
        %v628 = vpack.c.bf16 %v618, %v617
        %v629 = vpack.c.bf16 %v620, %v619
        %v630 = vld [vmem:[%s5] sm:$0x1]
        %v632 = vperm.slane %v630, 0
        %vm634 = vcmask 97280
        %v636 = vsel %vm634, %v621, 0
        %v639 = vsel %vm634, %v622, 0
        %v642 = vsel %vm634, %v623, 0
        %v645 = vsel %vm634, %v624, 0
        %v648 = vsel %vm634, %v625, 0
        %v651 = vsel %vm634, %v626, 0
        %v654 = vsel %vm634, %v627, 0
        %v657 = vsel %vm634, %v628, 0
        %vm659 = vcmask 1045504
        %v661 = vsel %vm659, %v629, 0
        %663 = vmatpush.bf16.msra.mxu0 0
        %664 = vmatpush.bf16.msra.mxu0 0
        %665 = vmatpush.bf16.msra.mxu0 0
        %666 = vmatpush.bf16.msra.mxu0 0
        %667 = vmatpush.bf16.msra.mxu0 0
        %668 = vmatpush.bf16.msra.mxu0 0
        %669 = vmatpush.bf16.msra.mxu0 0
        %670 = vmatpush.bf16.msra.mxu0 %v661
        %671 = vmatmul.bf16.gmra.mxu0 %v636
        %v672 = vpop.f32.mrf.mxu0
        %v673 = vadd.f32 %v632, %v672
        %v674 = vpop.f32.mrf.mxu0
        %v675 = vadd.f32 %v632, %v674
        %676 = vmatmul.bf16.gmra.mxu0 %v639
        %v677 = vpop.f32.mrf.mxu0
        %v678 = vadd.f32 %v632, %v677
        %v679 = vpop.f32.mrf.mxu0
        %v680 = vadd.f32 %v632, %v679
        %681 = vmatmul.bf16.gmra.mxu0 %v642
        %v682 = vpop.f32.mrf.mxu0
        %v683 = vadd.f32 %v632, %v682
        %v684 = vpop.f32.mrf.mxu0
        %v685 = vadd.f32 %v632, %v684
        %686 = vmatmul.bf16.gmra.mxu0 %v645
        %v687 = vpop.f32.mrf.mxu0
        %v688 = vadd.f32 %v632, %v687
        %v689 = vpop.f32.mrf.mxu0
        %v690 = vadd.f32 %v632, %v689
        %691 = vmatmul.bf16.gmra.mxu0 %v648
        %v692 = vpop.f32.mrf.mxu0
        %v693 = vadd.f32 %v632, %v692
        %v694 = vpop.f32.mrf.mxu0
        %v695 = vadd.f32 %v632, %v694
        %696 = vmatmul.bf16.gmra.mxu0 %v651
        %v697 = vpop.f32.mrf.mxu0
        %v698 = vadd.f32 %v632, %v697
        %v699 = vpop.f32.mrf.mxu0
        %v700 = vadd.f32 %v632, %v699
        %701 = vmatmul.bf16.gmra.mxu0 %v654
        %v702 = vpop.f32.mrf.mxu0
        %v703 = vadd.f32 %v632, %v702
        %v704 = vpop.f32.mrf.mxu0
        %v705 = vadd.f32 %v632, %v704
        %706 = vmatmul.bf16.gmra.mxu0 %v657
        %v707 = vpop.f32.mrf.mxu0
        %v708 = vadd.f32 %v632, %v707
        %v709 = vpop.f32.mrf.mxu0
        %v710 = vadd.f32 %v632, %v709
        %711 = vdwg.mxu0
        %v712 = vmax.f32 %v673, 0.0
        %v713 = vmax.f32 %v675, 0.0
        %v714 = vmax.f32 %v678, 0.0
        %v715 = vmax.f32 %v680, 0.0
        %v716 = vmax.f32 %v683, 0.0
        %v717 = vmax.f32 %v685, 0.0
        %v718 = vmax.f32 %v688, 0.0
        %v719 = vmax.f32 %v690, 0.0
        %v720 = vmax.f32 %v693, 0.0
        %v721 = vmax.f32 %v695, 0.0
        %v722 = vmax.f32 %v698, 0.0
        %v723 = vmax.f32 %v700, 0.0
        %v724 = vmax.f32 %v703, 0.0
        %v725 = vmax.f32 %v705, 0.0
        %v726 = vmax.f32 %v708, 0.0
        %v727 = vmax.f32 %v710, 0.0
        %v728 = vld [vmem:[%s6] sm:$0xff]
        %v729 = vld [vmem:[%s6 + $0x8] sm:$0xff]
        %v730 = vld [vmem:[%s6 + $0x10] sm:$0xff]
        %v731 = vld [vmem:[%s6 + $0x18] sm:$0xff]
        %v732 = vpack.c.bf16 %v713, %v712
        %v733 = vpack.c.bf16 %v715, %v714
        %v734 = vpack.c.bf16 %v717, %v716
        %v735 = vpack.c.bf16 %v719, %v718
        %v736 = vpack.c.bf16 %v721, %v720
        %v737 = vpack.c.bf16 %v723, %v722
        %v738 = vpack.c.bf16 %v725, %v724
        %v739 = vpack.c.bf16 %v727, %v726
        %v740 = vpack.c.bf16 %v729, %v728
        %v741 = vpack.c.bf16 %v731, %v730
        %v742 = vld [vmem:[%s7] sm:$0x1]
        %v744 = vperm.slane %v742, 0
        %vm746 = vcmask 261120
        %v748 = vsel %vm746, %v732, 0
        %v751 = vsel %vm746, %v733, 0
        %v754 = vsel %vm746, %v734, 0
        %v757 = vsel %vm746, %v735, 0
        %v760 = vsel %vm746, %v736, 0
        %v763 = vsel %vm746, %v737, 0
        %v766 = vsel %vm746, %v738, 0
        %v769 = vsel %vm746, %v739, 0
        %771 = vmatpush.bf16.msra.mxu0 0
        %772 = vmatpush.bf16.msra.mxu0 0
        %773 = vmatpush.bf16.msra.mxu0 0
        %774 = vmatpush.bf16.msra.mxu0 0
        %775 = vmatpush.bf16.msra.mxu0 0
        %776 = vmatpush.bf16.msra.mxu0 0
        %777 = vmatpush.bf16.msra.mxu0 %v741
        %778 = vmatpush.bf16.msra.mxu0 %v740
        %779 = vmatmul.bf16.gmra.mxu0 %v748
        %v780 = vpop.f32.mrf.mxu0
        %v781 = vadd.f32 %v744, %v780
        %v782 = vpop.f32.mrf.mxu0
        %v783 = vadd.f32 %v744, %v782
        %784 = vmatmul.bf16.gmra.mxu0 %v751
        %v785 = vpop.f32.mrf.mxu0
        %v786 = vadd.f32 %v744, %v785
        %v787 = vpop.f32.mrf.mxu0
        %v788 = vadd.f32 %v744, %v787
        %789 = vmatmul.bf16.gmra.mxu0 %v754
        %v790 = vpop.f32.mrf.mxu0
        %v791 = vadd.f32 %v744, %v790
        %v792 = vpop.f32.mrf.mxu0
        %v793 = vadd.f32 %v744, %v792
        %794 = vmatmul.bf16.gmra.mxu0 %v757
        %v795 = vpop.f32.mrf.mxu0
        %v796 = vadd.f32 %v744, %v795
        %v797 = vpop.f32.mrf.mxu0
        %v798 = vadd.f32 %v744, %v797
        %799 = vmatmul.bf16.gmra.mxu0 %v760
        %v800 = vpop.f32.mrf.mxu0
        %v801 = vadd.f32 %v744, %v800
        %v802 = vpop.f32.mrf.mxu0
        %v803 = vadd.f32 %v744, %v802
        %804 = vmatmul.bf16.gmra.mxu0 %v763
        %v805 = vpop.f32.mrf.mxu0
        %v806 = vadd.f32 %v744, %v805
        %v807 = vpop.f32.mrf.mxu0
        %v808 = vadd.f32 %v744, %v807
        %809 = vmatmul.bf16.gmra.mxu0 %v766
        %v810 = vpop.f32.mrf.mxu0
        %v811 = vadd.f32 %v744, %v810
        %v812 = vpop.f32.mrf.mxu0
        %v813 = vadd.f32 %v744, %v812
        %814 = vmatmul.bf16.gmra.mxu0 %v769
        %v815 = vpop.f32.mrf.mxu0
        %v816 = vadd.f32 %v744, %v815
        %v817 = vpop.f32.mrf.mxu0
        %v818 = vadd.f32 %v744, %v817
        %819 = vdwg.mxu0
        %v820 = vld [vmem:[%s559] sm:$0xff]
        %v821 = vld [vmem:[%s559 + $0x8] sm:$0xff]
        %v824 = vrot.slane %v820, 1
        %v825 = vrot.slane %v820, 2
        %v826 = vrot.slane %v820, 3
        %v827 = vrot.slane %v820, 4
        %v828 = vrot.slane %v820, 5
        %v829 = vrot.slane %v820, 6
        %v830 = vrot.slane %v820, 7
        %v831 = vrot.slane %v821, 1
        %v832 = vrot.slane %v821, 2
        %v833 = vrot.slane %v821, 3
        %v834 = vrot.slane %v821, 4
        %v835 = vrot.slane %v821, 5
        %v836 = vrot.slane %v821, 6
        %v837 = vrot.slane %v821, 7
        %v838 = vld [vmem:[%s569] sm:$0xff]
        %v839 = vld [vmem:[%s569 + $0x8] sm:$0xff]
        %v840 = vld [vmem:[%s569 + $0x10] sm:$0xff]
        %v841 = vld [vmem:[%s569 + $0x18] sm:$0xff]
        %v842 = vld [vmem:[%s569 + $0x20] sm:$0xff]
        %v843 = vld [vmem:[%s569 + $0x28] sm:$0xff]
        %v844 = vld [vmem:[%s569 + $0x30] sm:$0xff]
        %v845 = vld [vmem:[%s569 + $0x38] sm:$0xff]
        %v846 = vld [vmem:[%s569 + $0x40] sm:$0xff]
        %v847 = vld [vmem:[%s569 + $0x48] sm:$0xff]
        %v848 = vld [vmem:[%s569 + $0x50] sm:$0xff]
        %v849 = vld [vmem:[%s569 + $0x58] sm:$0xff]
        %v850 = vld [vmem:[%s569 + $0x60] sm:$0xff]
        %v851 = vld [vmem:[%s569 + $0x68] sm:$0xff]
        %v852 = vld [vmem:[%s569 + $0x70] sm:$0xff]
        %v853 = vld [vmem:[%s569 + $0x78] sm:$0xff]
        %v854 = vperm.slane %v820, 0
        %v855 = vperm.slane %v824, 0
        %v856 = vperm.slane %v825, 0
        %v857 = vperm.slane %v826, 0
        %v858 = vperm.slane %v827, 0
        %v859 = vperm.slane %v828, 0
        %v860 = vperm.slane %v829, 0
        %v861 = vperm.slane %v830, 0
        %v862 = vperm.slane %v821, 0
        %v863 = vperm.slane %v831, 0
        %v864 = vperm.slane %v832, 0
        %v865 = vperm.slane %v833, 0
        %v866 = vperm.slane %v834, 0
        %v867 = vperm.slane %v835, 0
        %v868 = vperm.slane %v836, 0
        %v869 = vperm.slane %v837, 0
        %v886 = vsub.f32 %v854, %v838
        %v887 = vsub.f32 %v855, %v839
        %v888 = vsub.f32 %v856, %v840
        %v889 = vsub.f32 %v857, %v841
        %v890 = vsub.f32 %v858, %v842
        %v891 = vsub.f32 %v859, %v843
        %v892 = vsub.f32 %v860, %v844
        %v893 = vsub.f32 %v861, %v845
        %v894 = vsub.f32 %v862, %v846
        %v895 = vsub.f32 %v863, %v847
        %v896 = vsub.f32 %v864, %v848
        %v897 = vsub.f32 %v865, %v849
        %v898 = vsub.f32 %v866, %v850
        %v899 = vsub.f32 %v867, %v851
        %v900 = vsub.f32 %v868, %v852
        %v901 = vsub.f32 %v869, %v853
        %v902 = vadd.f32 %v886, %v781
        %v903 = vadd.f32 %v887, %v783
        %v904 = vadd.f32 %v888, %v786
        %v905 = vadd.f32 %v889, %v788
        %v906 = vadd.f32 %v890, %v791
        %v907 = vadd.f32 %v891, %v793
        %v908 = vadd.f32 %v892, %v796
        %v909 = vadd.f32 %v893, %v798
        %v910 = vadd.f32 %v894, %v801
        %v911 = vadd.f32 %v895, %v803
        %v912 = vadd.f32 %v896, %v806
        %v913 = vadd.f32 %v897, %v808
        %v914 = vadd.f32 %v898, %v811
        %v915 = vadd.f32 %v899, %v813
        %v916 = vadd.f32 %v900, %v816
        %v917 = vadd.f32 %v901, %v818
        %v918 = vld [vmem:[%s8] sm:$0xff]
        %v919 = vld [vmem:[%s8 + $0x8] sm:$0xff]
        %v920 = vld [vmem:[%s8 + $0x10] sm:$0xff]
        %v921 = vld [vmem:[%s8 + $0x18] sm:$0xff]
        %v922 = vpack.c.bf16 %v903, %v902
        %v923 = vpack.c.bf16 %v905, %v904
        %v924 = vpack.c.bf16 %v907, %v906
        %v925 = vpack.c.bf16 %v909, %v908
        %v926 = vpack.c.bf16 %v911, %v910
        %v927 = vpack.c.bf16 %v913, %v912
        %v928 = vpack.c.bf16 %v915, %v914
        %v929 = vpack.c.bf16 %v917, %v916
        %v930 = vpack.c.bf16 %v919, %v918
        %v931 = vpack.c.bf16 %v921, %v920
        %v932 = vld [vmem:[%s9] sm:$0x1]
        %v934 = vperm.slane %v932, 0
        %v937 = vsel %vm746, %v922, 0
        %v940 = vsel %vm746, %v923, 0
        %v943 = vsel %vm746, %v924, 0
        %v946 = vsel %vm746, %v925, 0
        %v949 = vsel %vm746, %v926, 0
        %v952 = vsel %vm746, %v927, 0
        %v955 = vsel %vm746, %v928, 0
        %v958 = vsel %vm746, %v929, 0
        %960 = vmatpush.bf16.msra.mxu0 0
        %961 = vmatpush.bf16.msra.mxu0 0
        %962 = vmatpush.bf16.msra.mxu0 0
        %963 = vmatpush.bf16.msra.mxu0 0
        %964 = vmatpush.bf16.msra.mxu0 0
        %965 = vmatpush.bf16.msra.mxu0 0
        %966 = vmatpush.bf16.msra.mxu0 %v931
        %967 = vmatpush.bf16.msra.mxu0 %v930
        %968 = vmatmul.bf16.gmra.mxu0 %v937
        %v969 = vpop.f32.mrf.mxu0
        %v970 = vadd.f32 %v934, %v969
        %v971 = vpop.f32.mrf.mxu0
        %v972 = vadd.f32 %v934, %v971
        %973 = vmatmul.bf16.gmra.mxu0 %v940
        %v974 = vpop.f32.mrf.mxu0
        %v975 = vadd.f32 %v934, %v974
        %v976 = vpop.f32.mrf.mxu0
        %v977 = vadd.f32 %v934, %v976
        %978 = vmatmul.bf16.gmra.mxu0 %v943
        %v979 = vpop.f32.mrf.mxu0
        %v980 = vadd.f32 %v934, %v979
        %v981 = vpop.f32.mrf.mxu0
        %v982 = vadd.f32 %v934, %v981
        %983 = vmatmul.bf16.gmra.mxu0 %v946
        %v984 = vpop.f32.mrf.mxu0
        %v985 = vadd.f32 %v934, %v984
        %v986 = vpop.f32.mrf.mxu0
        %v987 = vadd.f32 %v934, %v986
        %988 = vmatmul.bf16.gmra.mxu0 %v949
        %v989 = vpop.f32.mrf.mxu0
        %v990 = vadd.f32 %v934, %v989
        %v991 = vpop.f32.mrf.mxu0
        %v992 = vadd.f32 %v934, %v991
        %993 = vmatmul.bf16.gmra.mxu0 %v952
        %v994 = vpop.f32.mrf.mxu0
        %v995 = vadd.f32 %v934, %v994
        %v996 = vpop.f32.mrf.mxu0
        %v997 = vadd.f32 %v934, %v996
        %998 = vmatmul.bf16.gmra.mxu0 %v955
        %v999 = vpop.f32.mrf.mxu0
        %v1000 = vadd.f32 %v934, %v999
        %v1001 = vpop.f32.mrf.mxu0
        %v1002 = vadd.f32 %v934, %v1001
        %1003 = vmatmul.bf16.gmra.mxu0 %v958
        %v1004 = vpop.f32.mrf.mxu0
        %v1005 = vadd.f32 %v934, %v1004
        %v1006 = vpop.f32.mrf.mxu0
        %v1007 = vadd.f32 %v934, %v1006
        %1008 = vdwg.mxu0
        %v1009 = vmax.f32 %v970, 0.0
        %v1010 = vmax.f32 %v972, 0.0
        %v1011 = vmax.f32 %v975, 0.0
        %v1012 = vmax.f32 %v977, 0.0
        %v1013 = vmax.f32 %v980, 0.0
        %v1014 = vmax.f32 %v982, 0.0
        %v1015 = vmax.f32 %v985, 0.0
        %v1016 = vmax.f32 %v987, 0.0
        %v1017 = vmax.f32 %v990, 0.0
        %v1018 = vmax.f32 %v992, 0.0
        %v1019 = vmax.f32 %v995, 0.0
        %v1020 = vmax.f32 %v997, 0.0
        %v1021 = vmax.f32 %v1000, 0.0
        %v1022 = vmax.f32 %v1002, 0.0
        %v1023 = vmax.f32 %v1005, 0.0
        %v1024 = vmax.f32 %v1007, 0.0
        %v1025 = vld [vmem:[%s10] sm:$0xff]
        %v1026 = vld [vmem:[%s10 + $0x8] sm:$0xff]
        %v1027 = vld [vmem:[%s10 + $0x10] sm:$0xff]
        %v1028 = vld [vmem:[%s10 + $0x18] sm:$0xff]
        %v1029 = vpack.c.bf16 %v1010, %v1009
        %v1030 = vpack.c.bf16 %v1012, %v1011
        %v1031 = vpack.c.bf16 %v1014, %v1013
        %v1032 = vpack.c.bf16 %v1016, %v1015
        %v1033 = vpack.c.bf16 %v1018, %v1017
        %v1034 = vpack.c.bf16 %v1020, %v1019
        %v1035 = vpack.c.bf16 %v1022, %v1021
        %v1036 = vpack.c.bf16 %v1024, %v1023
        %v1037 = vpack.c.bf16 %v1026, %v1025
        %v1038 = vpack.c.bf16 %v1028, %v1027
        %v1039 = vld [vmem:[%s11] sm:$0x1]
        %v1041 = vperm.slane %v1039, 0
        %v1044 = vsel %vm746, %v1029, 0
        %v1047 = vsel %vm746, %v1030, 0
        %v1050 = vsel %vm746, %v1031, 0
        %v1053 = vsel %vm746, %v1032, 0
        %v1056 = vsel %vm746, %v1033, 0
        %v1059 = vsel %vm746, %v1034, 0
        %v1062 = vsel %vm746, %v1035, 0
        %v1065 = vsel %vm746, %v1036, 0
        %1067 = vmatpush.bf16.msra.mxu0 0
        %1068 = vmatpush.bf16.msra.mxu0 0
        %1069 = vmatpush.bf16.msra.mxu0 0
        %1070 = vmatpush.bf16.msra.mxu0 0
        %1071 = vmatpush.bf16.msra.mxu0 0
        %1072 = vmatpush.bf16.msra.mxu0 0
        %1073 = vmatpush.bf16.msra.mxu0 %v1038
        %1074 = vmatpush.bf16.msra.mxu0 %v1037
        %1075 = vmatmul.bf16.gmra.mxu0 %v1044
        %v1076 = vpop.f32.mrf.mxu0
        %v1077 = vadd.f32 %v1041, %v1076
        %v1078 = vpop.f32.mrf.mxu0
        %v1079 = vadd.f32 %v1041, %v1078
        %1080 = vmatmul.bf16.gmra.mxu0 %v1047
        %v1081 = vpop.f32.mrf.mxu0
        %v1082 = vadd.f32 %v1041, %v1081
        %v1083 = vpop.f32.mrf.mxu0
        %v1084 = vadd.f32 %v1041, %v1083
        %1085 = vmatmul.bf16.gmra.mxu0 %v1050
        %v1086 = vpop.f32.mrf.mxu0
        %v1087 = vadd.f32 %v1041, %v1086
        %v1088 = vpop.f32.mrf.mxu0
        %v1089 = vadd.f32 %v1041, %v1088
        %1090 = vmatmul.bf16.gmra.mxu0 %v1053
        %v1091 = vpop.f32.mrf.mxu0
        %v1092 = vadd.f32 %v1041, %v1091
        %v1093 = vpop.f32.mrf.mxu0
        %v1094 = vadd.f32 %v1041, %v1093
        %1095 = vmatmul.bf16.gmra.mxu0 %v1056
        %v1096 = vpop.f32.mrf.mxu0
        %v1097 = vadd.f32 %v1041, %v1096
        %v1098 = vpop.f32.mrf.mxu0
        %v1099 = vadd.f32 %v1041, %v1098
        %1100 = vmatmul.bf16.gmra.mxu0 %v1059
        %v1101 = vpop.f32.mrf.mxu0
        %v1102 = vadd.f32 %v1041, %v1101
        %v1103 = vpop.f32.mrf.mxu0
        %v1104 = vadd.f32 %v1041, %v1103
        %1105 = vmatmul.bf16.gmra.mxu0 %v1062
        %v1106 = vpop.f32.mrf.mxu0
        %v1107 = vadd.f32 %v1041, %v1106
        %v1108 = vpop.f32.mrf.mxu0
        %v1109 = vadd.f32 %v1041, %v1108
        %1110 = vmatmul.bf16.gmra.mxu0 %v1065
        %v1111 = vpop.f32.mrf.mxu0
        %v1112 = vadd.f32 %v1041, %v1111
        %v1113 = vpop.f32.mrf.mxu0
        %v1114 = vadd.f32 %v1041, %v1113
        %1115 = vdwg.mxu0
        %v1116 = vmul.f32 %v1077, 0.17677669
        %v1117 = vmul.f32 %v1079, 0.17677669
        %v1118 = vmul.f32 %v1082, 0.17677669
        %v1119 = vmul.f32 %v1084, 0.17677669
        %v1120 = vmul.f32 %v1087, 0.17677669
        %v1121 = vmul.f32 %v1089, 0.17677669
        %v1122 = vmul.f32 %v1092, 0.17677669
        %v1123 = vmul.f32 %v1094, 0.17677669
        %v1124 = vmul.f32 %v1097, 0.17677669
        %v1125 = vmul.f32 %v1099, 0.17677669
        %v1126 = vmul.f32 %v1102, 0.17677669
        %v1127 = vmul.f32 %v1104, 0.17677669
        %v1128 = vmul.f32 %v1107, 0.17677669
        %v1129 = vmul.f32 %v1109, 0.17677669
        %v1130 = vmul.f32 %v1112, 0.17677669
        %v1131 = vmul.f32 %v1114, 0.17677669
        %v1132 = vsel %vm746, %v1116, -inf
        %v1133 = vrot.slane %v1132, 4
        %v1134 = vmax.f32 %v1132, %v1133
        %v1135 = vrot.slane %v1134, 2
        %v1136 = vmax.f32 %v1134, %v1135
        %v1137 = vrot.slane %v1136, 1
        %v1138 = vmax.f32 %v1136, %v1137
        %v1139 = vsel %vm746, %v1117, -inf
        %v1140 = vrot.slane %v1139, 4
        %v1141 = vmax.f32 %v1139, %v1140
        %v1142 = vrot.slane %v1141, 2
        %v1143 = vmax.f32 %v1141, %v1142
        %v1144 = vrot.slane %v1143, 1
        %v1145 = vmax.f32 %v1143, %v1144
        %v1146 = vsel %vm746, %v1118, -inf
        %v1147 = vrot.slane %v1146, 4
        %v1148 = vmax.f32 %v1146, %v1147
        %v1149 = vrot.slane %v1148, 2
        %v1150 = vmax.f32 %v1148, %v1149
        %v1151 = vrot.slane %v1150, 1
        %v1152 = vmax.f32 %v1150, %v1151
        %v1153 = vsel %vm746, %v1119, -inf
        %v1154 = vrot.slane %v1153, 4
        %v1155 = vmax.f32 %v1153, %v1154
        %v1156 = vrot.slane %v1155, 2
        %v1157 = vmax.f32 %v1155, %v1156
        %v1158 = vrot.slane %v1157, 1
        %v1159 = vmax.f32 %v1157, %v1158
        %v1160 = vsel %vm746, %v1120, -inf
        %v1161 = vrot.slane %v1160, 4
        %v1162 = vmax.f32 %v1160, %v1161
        %v1163 = vrot.slane %v1162, 2
        %v1164 = vmax.f32 %v1162, %v1163
        %v1165 = vrot.slane %v1164, 1
        %v1166 = vmax.f32 %v1164, %v1165
        %v1167 = vsel %vm746, %v1121, -inf
        %v1168 = vrot.slane %v1167, 4
        %v1169 = vmax.f32 %v1167, %v1168
        %v1170 = vrot.slane %v1169, 2
        %v1171 = vmax.f32 %v1169, %v1170
        %v1172 = vrot.slane %v1171, 1
        %v1173 = vmax.f32 %v1171, %v1172
        %v1174 = vsel %vm746, %v1122, -inf
        %v1175 = vrot.slane %v1174, 4
        %v1176 = vmax.f32 %v1174, %v1175
        %v1177 = vrot.slane %v1176, 2
        %v1178 = vmax.f32 %v1176, %v1177
        %v1179 = vrot.slane %v1178, 1
        %v1180 = vmax.f32 %v1178, %v1179
        %v1181 = vsel %vm746, %v1123, -inf
        %v1182 = vrot.slane %v1181, 4
        %v1183 = vmax.f32 %v1181, %v1182
        %v1184 = vrot.slane %v1183, 2
        %v1185 = vmax.f32 %v1183, %v1184
        %v1186 = vrot.slane %v1185, 1
        %v1187 = vmax.f32 %v1185, %v1186
        %v1188 = vsel %vm746, %v1124, -inf
        %v1189 = vrot.slane %v1188, 4
        %v1190 = vmax.f32 %v1188, %v1189
        %v1191 = vrot.slane %v1190, 2
        %v1192 = vmax.f32 %v1190, %v1191
        %v1193 = vrot.slane %v1192, 1
        %v1194 = vmax.f32 %v1192, %v1193
        %v1195 = vsel %vm746, %v1125, -inf
        %v1196 = vrot.slane %v1195, 4
        %v1197 = vmax.f32 %v1195, %v1196
        %v1198 = vrot.slane %v1197, 2
        %v1199 = vmax.f32 %v1197, %v1198
        %v1200 = vrot.slane %v1199, 1
        %v1201 = vmax.f32 %v1199, %v1200
        %v1202 = vsel %vm746, %v1126, -inf
        %v1203 = vrot.slane %v1202, 4
        %v1204 = vmax.f32 %v1202, %v1203
        %v1205 = vrot.slane %v1204, 2
        %v1206 = vmax.f32 %v1204, %v1205
        %v1207 = vrot.slane %v1206, 1
        %v1208 = vmax.f32 %v1206, %v1207
        %v1209 = vsel %vm746, %v1127, -inf
        %v1210 = vrot.slane %v1209, 4
        %v1211 = vmax.f32 %v1209, %v1210
        %v1212 = vrot.slane %v1211, 2
        %v1213 = vmax.f32 %v1211, %v1212
        %v1214 = vrot.slane %v1213, 1
        %v1215 = vmax.f32 %v1213, %v1214
        %v1216 = vsel %vm746, %v1128, -inf
        %v1217 = vrot.slane %v1216, 4
        %v1218 = vmax.f32 %v1216, %v1217
        %v1219 = vrot.slane %v1218, 2
        %v1220 = vmax.f32 %v1218, %v1219
        %v1221 = vrot.slane %v1220, 1
        %v1222 = vmax.f32 %v1220, %v1221
        %v1223 = vsel %vm746, %v1129, -inf
        %v1224 = vrot.slane %v1223, 4
        %v1225 = vmax.f32 %v1223, %v1224
        %v1226 = vrot.slane %v1225, 2
        %v1227 = vmax.f32 %v1225, %v1226
        %v1228 = vrot.slane %v1227, 1
        %v1229 = vmax.f32 %v1227, %v1228
        %v1230 = vsel %vm746, %v1130, -inf
        %v1231 = vrot.slane %v1230, 4
        %v1232 = vmax.f32 %v1230, %v1231
        %v1233 = vrot.slane %v1232, 2
        %v1234 = vmax.f32 %v1232, %v1233
        %v1235 = vrot.slane %v1234, 1
        %v1236 = vmax.f32 %v1234, %v1235
        %v1237 = vsel %vm746, %v1131, -inf
        %v1238 = vrot.slane %v1237, 4
        %v1239 = vmax.f32 %v1237, %v1238
        %v1240 = vrot.slane %v1239, 2
        %v1241 = vmax.f32 %v1239, %v1240
        %v1242 = vrot.slane %v1241, 1
        %v1243 = vmax.f32 %v1241, %v1242
        %v1244 = vsub.f32 %v1116, %v1138
        %v1245 = vsub.f32 %v1117, %v1145
        %v1246 = vsub.f32 %v1118, %v1152
        %v1247 = vsub.f32 %v1119, %v1159
        %v1248 = vsub.f32 %v1120, %v1166
        %v1249 = vsub.f32 %v1121, %v1173
        %v1250 = vsub.f32 %v1122, %v1180
        %v1251 = vsub.f32 %v1123, %v1187
        %v1252 = vsub.f32 %v1124, %v1194
        %v1253 = vsub.f32 %v1125, %v1201
        %v1254 = vsub.f32 %v1126, %v1208
        %v1255 = vsub.f32 %v1127, %v1215
        %v1256 = vsub.f32 %v1128, %v1222
        %v1257 = vsub.f32 %v1129, %v1229
        %v1258 = vsub.f32 %v1130, %v1236
        %v1259 = vsub.f32 %v1131, %v1243
        %v1260 = vmul.f32 %v1244, 1.442695
        %v1261 = vpow.pop %v1260
        %v1262 = vmul.f32 %v1245, 1.442695
        %v1263 = vpow.pop %v1262
        %v1264 = vmul.f32 %v1246, 1.442695
        %v1265 = vpow.pop %v1264
        %v1266 = vmul.f32 %v1247, 1.442695
        %v1267 = vpow.pop %v1266
        %v1268 = vmul.f32 %v1248, 1.442695
        %v1269 = vpow.pop %v1268
        %v1270 = vmul.f32 %v1249, 1.442695
        %v1271 = vpow.pop %v1270
        %v1272 = vmul.f32 %v1250, 1.442695
        %v1273 = vpow.pop %v1272
        %v1274 = vmul.f32 %v1251, 1.442695
        %v1275 = vpow.pop %v1274
        %v1276 = vmul.f32 %v1252, 1.442695
        %v1277 = vpow.pop %v1276
        %v1278 = vmul.f32 %v1253, 1.442695
        %v1279 = vpow.pop %v1278
        %v1280 = vmul.f32 %v1254, 1.442695
        %v1281 = vpow.pop %v1280
        %v1282 = vmul.f32 %v1255, 1.442695
        %v1283 = vpow.pop %v1282
        %v1284 = vmul.f32 %v1256, 1.442695
        %v1285 = vpow.pop %v1284
        %v1286 = vmul.f32 %v1257, 1.442695
        %v1287 = vpow.pop %v1286
        %v1288 = vmul.f32 %v1258, 1.442695
        %v1289 = vpow.pop %v1288
        %v1290 = vmul.f32 %v1259, 1.442695
        %v1291 = vpow.pop %v1290
        %v1292 = vsel %vm746, %v1261, 0.0
        %v1293 = vrot.slane %v1292, 4
        %v1294 = vadd.f32 %v1292, %v1293
        %v1295 = vrot.slane %v1294, 2
        %v1296 = vadd.f32 %v1294, %v1295
        %v1297 = vrot.slane %v1296, 1
        %v1298 = vadd.f32 %v1296, %v1297
        %v1299 = vsel %vm746, %v1263, 0.0
        %v1300 = vrot.slane %v1299, 4
        %v1301 = vadd.f32 %v1299, %v1300
        %v1302 = vrot.slane %v1301, 2
        %v1303 = vadd.f32 %v1301, %v1302
        %v1304 = vrot.slane %v1303, 1
        %v1305 = vadd.f32 %v1303, %v1304
        %v1306 = vsel %vm746, %v1265, 0.0
        %v1307 = vrot.slane %v1306, 4
        %v1308 = vadd.f32 %v1306, %v1307
        %v1309 = vrot.slane %v1308, 2
        %v1310 = vadd.f32 %v1308, %v1309
        %v1311 = vrot.slane %v1310, 1
        %v1312 = vadd.f32 %v1310, %v1311
        %v1313 = vsel %vm746, %v1267, 0.0
        %v1314 = vrot.slane %v1313, 4
        %v1315 = vadd.f32 %v1313, %v1314
        %v1316 = vrot.slane %v1315, 2
        %v1317 = vadd.f32 %v1315, %v1316
        %v1318 = vrot.slane %v1317, 1
        %v1319 = vadd.f32 %v1317, %v1318
        %v1320 = vsel %vm746, %v1269, 0.0
        %v1321 = vrot.slane %v1320, 4
        %v1322 = vadd.f32 %v1320, %v1321
        %v1323 = vrot.slane %v1322, 2
        %v1324 = vadd.f32 %v1322, %v1323
        %v1325 = vrot.slane %v1324, 1
        %v1326 = vadd.f32 %v1324, %v1325
        %v1327 = vsel %vm746, %v1271, 0.0
        %v1328 = vrot.slane %v1327, 4
        %v1329 = vadd.f32 %v1327, %v1328
        %v1330 = vrot.slane %v1329, 2
        %v1331 = vadd.f32 %v1329, %v1330
        %v1332 = vrot.slane %v1331, 1
        %v1333 = vadd.f32 %v1331, %v1332
        %v1334 = vsel %vm746, %v1273, 0.0
        %v1335 = vrot.slane %v1334, 4
        %v1336 = vadd.f32 %v1334, %v1335
        %v1337 = vrot.slane %v1336, 2
        %v1338 = vadd.f32 %v1336, %v1337
        %v1339 = vrot.slane %v1338, 1
        %v1340 = vadd.f32 %v1338, %v1339
        %v1341 = vsel %vm746, %v1275, 0.0
        %v1342 = vrot.slane %v1341, 4
        %v1343 = vadd.f32 %v1341, %v1342
        %v1344 = vrot.slane %v1343, 2
        %v1345 = vadd.f32 %v1343, %v1344
        %v1346 = vrot.slane %v1345, 1
        %v1347 = vadd.f32 %v1345, %v1346
        %v1348 = vsel %vm746, %v1277, 0.0
        %v1349 = vrot.slane %v1348, 4
        %v1350 = vadd.f32 %v1348, %v1349
        %v1351 = vrot.slane %v1350, 2
        %v1352 = vadd.f32 %v1350, %v1351
        %v1353 = vrot.slane %v1352, 1
        %v1354 = vadd.f32 %v1352, %v1353
        %v1355 = vsel %vm746, %v1279, 0.0
        %v1356 = vrot.slane %v1355, 4
        %v1357 = vadd.f32 %v1355, %v1356
        %v1358 = vrot.slane %v1357, 2
        %v1359 = vadd.f32 %v1357, %v1358
        %v1360 = vrot.slane %v1359, 1
        %v1361 = vadd.f32 %v1359, %v1360
        %v1362 = vsel %vm746, %v1281, 0.0
        %v1363 = vrot.slane %v1362, 4
        %v1364 = vadd.f32 %v1362, %v1363
        %v1365 = vrot.slane %v1364, 2
        %v1366 = vadd.f32 %v1364, %v1365
        %v1367 = vrot.slane %v1366, 1
        %v1368 = vadd.f32 %v1366, %v1367
        %v1369 = vsel %vm746, %v1283, 0.0
        %v1370 = vrot.slane %v1369, 4
        %v1371 = vadd.f32 %v1369, %v1370
        %v1372 = vrot.slane %v1371, 2
        %v1373 = vadd.f32 %v1371, %v1372
        %v1374 = vrot.slane %v1373, 1
        %v1375 = vadd.f32 %v1373, %v1374
        %v1376 = vsel %vm746, %v1285, 0.0
        %v1377 = vrot.slane %v1376, 4
        %v1378 = vadd.f32 %v1376, %v1377
        %v1379 = vrot.slane %v1378, 2
        %v1380 = vadd.f32 %v1378, %v1379
        %v1381 = vrot.slane %v1380, 1
        %v1382 = vadd.f32 %v1380, %v1381
        %v1383 = vsel %vm746, %v1287, 0.0
        %v1384 = vrot.slane %v1383, 4
        %v1385 = vadd.f32 %v1383, %v1384
        %v1386 = vrot.slane %v1385, 2
        %v1387 = vadd.f32 %v1385, %v1386
        %v1388 = vrot.slane %v1387, 1
        %v1389 = vadd.f32 %v1387, %v1388
        %v1390 = vsel %vm746, %v1289, 0.0
        %v1391 = vrot.slane %v1390, 4
        %v1392 = vadd.f32 %v1390, %v1391
        %v1393 = vrot.slane %v1392, 2
        %v1394 = vadd.f32 %v1392, %v1393
        %v1395 = vrot.slane %v1394, 1
        %v1396 = vadd.f32 %v1394, %v1395
        %v1397 = vsel %vm746, %v1291, 0.0
        %v1398 = vrot.slane %v1397, 4
        %v1399 = vadd.f32 %v1397, %v1398
        %v1400 = vrot.slane %v1399, 2
        %v1401 = vadd.f32 %v1399, %v1400
        %v1402 = vrot.slane %v1401, 1
        %v1403 = vadd.f32 %v1401, %v1402
        %v1404 = vlog2.pop %v1298
        %v1405 = vmul.f32 %v1404, 0.6931472
        %v1406 = vlog2.pop %v1305
        %v1407 = vmul.f32 %v1406, 0.6931472
        %v1408 = vlog2.pop %v1312
        %v1409 = vmul.f32 %v1408, 0.6931472
        %v1410 = vlog2.pop %v1319
        %v1411 = vmul.f32 %v1410, 0.6931472
        %v1412 = vlog2.pop %v1326
        %v1413 = vmul.f32 %v1412, 0.6931472
        %v1414 = vlog2.pop %v1333
        %v1415 = vmul.f32 %v1414, 0.6931472
        %v1416 = vlog2.pop %v1340
        %v1417 = vmul.f32 %v1416, 0.6931472
        %v1418 = vlog2.pop %v1347
        %v1419 = vmul.f32 %v1418, 0.6931472
        %v1420 = vlog2.pop %v1354
        %v1421 = vmul.f32 %v1420, 0.6931472
        %v1422 = vlog2.pop %v1361
        %v1423 = vmul.f32 %v1422, 0.6931472
        %v1424 = vlog2.pop %v1368
        %v1425 = vmul.f32 %v1424, 0.6931472
        %v1426 = vlog2.pop %v1375
        %v1427 = vmul.f32 %v1426, 0.6931472
        %v1428 = vlog2.pop %v1382
        %v1429 = vmul.f32 %v1428, 0.6931472
        %v1430 = vlog2.pop %v1389
        %v1431 = vmul.f32 %v1430, 0.6931472
        %v1432 = vlog2.pop %v1396
        %v1433 = vmul.f32 %v1432, 0.6931472
        %v1434 = vlog2.pop %v1403
        %v1435 = vmul.f32 %v1434, 0.6931472
        %v1436 = vsub.f32 %v1244, %v1405
        %v1437 = vsub.f32 %v1245, %v1407
        %v1438 = vsub.f32 %v1246, %v1409
        %v1439 = vsub.f32 %v1247, %v1411
        %v1440 = vsub.f32 %v1248, %v1413
        %v1441 = vsub.f32 %v1249, %v1415
        %v1442 = vsub.f32 %v1250, %v1417
        %v1443 = vsub.f32 %v1251, %v1419
        %v1444 = vsub.f32 %v1252, %v1421
        %v1445 = vsub.f32 %v1253, %v1423
        %v1446 = vsub.f32 %v1254, %v1425
        %v1447 = vsub.f32 %v1255, %v1427
        %v1448 = vsub.f32 %v1256, %v1429
        %v1449 = vsub.f32 %v1257, %v1431
        %v1450 = vsub.f32 %v1258, %v1433
        %v1451 = vsub.f32 %v1259, %v1435
        %v1452 = vpack.c.bf16 %v1436, %v1436
        %v1453 = vpack.c.bf16 %v1437, %v1437
        %v1454 = vpack.c.bf16 %v1438, %v1438
        %v1455 = vpack.c.bf16 %v1439, %v1439
        %v1456 = vpack.c.bf16 %v1440, %v1440
        %v1457 = vpack.c.bf16 %v1441, %v1441
        %v1458 = vpack.c.bf16 %v1442, %v1442
        %v1459 = vpack.c.bf16 %v1443, %v1443
        %v1460 = vpack.c.bf16 %v1444, %v1444
        %v1461 = vpack.c.bf16 %v1445, %v1445
        %v1462 = vpack.c.bf16 %v1446, %v1446
        %v1463 = vpack.c.bf16 %v1447, %v1447
        %v1464 = vpack.c.bf16 %v1448, %v1448
        %v1465 = vpack.c.bf16 %v1449, %v1449
        %v1466 = vpack.c.bf16 %v1450, %v1450
        %v1467 = vpack.c.bf16 %v1451, %v1451
        %vm1468 = vcmask 257024
        %1469 = vst.msk [vmem:[%s539] sm:$0xf] %vm1468, %v1452
        %1470 = vst.msk [vmem:[%s539 + $0x4] sm:$0xf] %vm1468, %v1453
        %1471 = vst.msk [vmem:[%s539 + $0x8] sm:$0xf] %vm1468, %v1454
        %1472 = vst.msk [vmem:[%s539 + $0xc] sm:$0xf] %vm1468, %v1455
        %1473 = vst.msk [vmem:[%s539 + $0x10] sm:$0xf] %vm1468, %v1456
        %1474 = vst.msk [vmem:[%s539 + $0x14] sm:$0xf] %vm1468, %v1457
        %1475 = vst.msk [vmem:[%s539 + $0x18] sm:$0xf] %vm1468, %v1458
        %1476 = vst.msk [vmem:[%s539 + $0x1c] sm:$0xf] %vm1468, %v1459
        %1477 = vst.msk [vmem:[%s539 + $0x20] sm:$0xf] %vm1468, %v1460
        %1478 = vst.msk [vmem:[%s539 + $0x24] sm:$0xf] %vm1468, %v1461
        %1479 = vst.msk [vmem:[%s539 + $0x28] sm:$0xf] %vm1468, %v1462
        %1480 = vst.msk [vmem:[%s539 + $0x2c] sm:$0xf] %vm1468, %v1463
        %1481 = vst.msk [vmem:[%s539 + $0x30] sm:$0xf] %vm1468, %v1464
        %1482 = vst.msk [vmem:[%s539 + $0x34] sm:$0xf] %vm1468, %v1465
        %1483 = vst.msk [vmem:[%s539 + $0x38] sm:$0xf] %vm1468, %v1466
        %1484 = vst.msk [vmem:[%s539 + $0x3c] sm:$0xf] %vm1468, %v1467
        %v1485 = vld [vmem:[%s579] sm:$0xff]
        %v1486 = vld [vmem:[%s579 + $0x8] sm:$0xff]
        %v1487 = vld [vmem:[%s579 + $0x10] sm:$0xff]
        %v1488 = vld [vmem:[%s579 + $0x18] sm:$0xff]
        %v1489 = vld [vmem:[%s579 + $0x20] sm:$0xff]
        %v1490 = vld [vmem:[%s579 + $0x28] sm:$0xff]
        %v1491 = vld [vmem:[%s579 + $0x30] sm:$0xff]
        %v1492 = vld [vmem:[%s579 + $0x38] sm:$0xff]
        %v1493 = vld [vmem:[%s579 + $0x40] sm:$0xff]
        %v1494 = vld [vmem:[%s579 + $0x48] sm:$0xff]
        %v1495 = vld [vmem:[%s579 + $0x50] sm:$0xff]
        %v1496 = vld [vmem:[%s579 + $0x58] sm:$0xff]
        %v1497 = vld [vmem:[%s579 + $0x60] sm:$0xff]
        %v1498 = vld [vmem:[%s579 + $0x68] sm:$0xff]
        %v1499 = vld [vmem:[%s579 + $0x70] sm:$0xff]
        %v1500 = vld [vmem:[%s579 + $0x78] sm:$0xff]
        %v1501 = vadd.f32 %v1485, %v781
        %v1502 = vadd.f32 %v1486, %v783
        %v1503 = vadd.f32 %v1487, %v786
        %v1504 = vadd.f32 %v1488, %v788
        %v1505 = vadd.f32 %v1489, %v791
        %v1506 = vadd.f32 %v1490, %v793
        %v1507 = vadd.f32 %v1491, %v796
        %v1508 = vadd.f32 %v1492, %v798
        %v1509 = vadd.f32 %v1493, %v801
        %v1510 = vadd.f32 %v1494, %v803
        %v1511 = vadd.f32 %v1495, %v806
        %v1512 = vadd.f32 %v1496, %v808
        %v1513 = vadd.f32 %v1497, %v811
        %v1514 = vadd.f32 %v1498, %v813
        %v1515 = vadd.f32 %v1499, %v816
        %v1516 = vadd.f32 %v1500, %v818
        %v1517 = vmul.f32 %v1436, %v1501
        %v1518 = vmul.f32 %v1437, %v1502
        %v1519 = vmul.f32 %v1438, %v1503
        %v1520 = vmul.f32 %v1439, %v1504
        %v1521 = vmul.f32 %v1440, %v1505
        %v1522 = vmul.f32 %v1441, %v1506
        %v1523 = vmul.f32 %v1442, %v1507
        %v1524 = vmul.f32 %v1443, %v1508
        %v1525 = vmul.f32 %v1444, %v1509
        %v1526 = vmul.f32 %v1445, %v1510
        %v1527 = vmul.f32 %v1446, %v1511
        %v1528 = vmul.f32 %v1447, %v1512
        %v1529 = vmul.f32 %v1448, %v1513
        %v1530 = vmul.f32 %v1449, %v1514
        %v1531 = vmul.f32 %v1450, %v1515
        %v1532 = vmul.f32 %v1451, %v1516
        %v1533 = vsel %vm746, %v1517, 0.0
        %v1534 = vrot.slane %v1533, 4
        %v1535 = vadd.f32 %v1533, %v1534
        %v1536 = vrot.slane %v1535, 2
        %v1537 = vadd.f32 %v1535, %v1536
        %v1538 = vrot.slane %v1537, 1
        %v1539 = vadd.f32 %v1537, %v1538
        %v1540 = vsel %vm746, %v1518, 0.0
        %v1541 = vrot.slane %v1540, 4
        %v1542 = vadd.f32 %v1540, %v1541
        %v1543 = vrot.slane %v1542, 2
        %v1544 = vadd.f32 %v1542, %v1543
        %v1545 = vrot.slane %v1544, 1
        %v1546 = vadd.f32 %v1544, %v1545
        %v1547 = vsel %vm746, %v1519, 0.0
        %v1548 = vrot.slane %v1547, 4
        %v1549 = vadd.f32 %v1547, %v1548
        %v1550 = vrot.slane %v1549, 2
        %v1551 = vadd.f32 %v1549, %v1550
        %v1552 = vrot.slane %v1551, 1
        %v1553 = vadd.f32 %v1551, %v1552
        %v1554 = vsel %vm746, %v1520, 0.0
        %v1555 = vrot.slane %v1554, 4
        %v1556 = vadd.f32 %v1554, %v1555
        %v1557 = vrot.slane %v1556, 2
        %v1558 = vadd.f32 %v1556, %v1557
        %v1559 = vrot.slane %v1558, 1
        %v1560 = vadd.f32 %v1558, %v1559
        %v1561 = vsel %vm746, %v1521, 0.0
        %v1562 = vrot.slane %v1561, 4
        %v1563 = vadd.f32 %v1561, %v1562
        %v1564 = vrot.slane %v1563, 2
        %v1565 = vadd.f32 %v1563, %v1564
        %v1566 = vrot.slane %v1565, 1
        %v1567 = vadd.f32 %v1565, %v1566
        %v1568 = vsel %vm746, %v1522, 0.0
        %v1569 = vrot.slane %v1568, 4
        %v1570 = vadd.f32 %v1568, %v1569
        %v1571 = vrot.slane %v1570, 2
        %v1572 = vadd.f32 %v1570, %v1571
        %v1573 = vrot.slane %v1572, 1
        %v1574 = vadd.f32 %v1572, %v1573
        %v1575 = vsel %vm746, %v1523, 0.0
        %v1576 = vrot.slane %v1575, 4
        %v1577 = vadd.f32 %v1575, %v1576
        %v1578 = vrot.slane %v1577, 2
        %v1579 = vadd.f32 %v1577, %v1578
        %v1580 = vrot.slane %v1579, 1
        %v1581 = vadd.f32 %v1579, %v1580
        %v1582 = vsel %vm746, %v1524, 0.0
        %v1583 = vrot.slane %v1582, 4
        %v1584 = vadd.f32 %v1582, %v1583
        %v1585 = vrot.slane %v1584, 2
        %v1586 = vadd.f32 %v1584, %v1585
        %v1587 = vrot.slane %v1586, 1
        %v1588 = vadd.f32 %v1586, %v1587
        %v1589 = vsel %vm746, %v1525, 0.0
        %v1590 = vrot.slane %v1589, 4
        %v1591 = vadd.f32 %v1589, %v1590
        %v1592 = vrot.slane %v1591, 2
        %v1593 = vadd.f32 %v1591, %v1592
        %v1594 = vrot.slane %v1593, 1
        %v1595 = vadd.f32 %v1593, %v1594
        %v1596 = vsel %vm746, %v1526, 0.0
        %v1597 = vrot.slane %v1596, 4
        %v1598 = vadd.f32 %v1596, %v1597
        %v1599 = vrot.slane %v1598, 2
        %v1600 = vadd.f32 %v1598, %v1599
        %v1601 = vrot.slane %v1600, 1
        %v1602 = vadd.f32 %v1600, %v1601
        %v1603 = vsel %vm746, %v1527, 0.0
        %v1604 = vrot.slane %v1603, 4
        %v1605 = vadd.f32 %v1603, %v1604
        %v1606 = vrot.slane %v1605, 2
        %v1607 = vadd.f32 %v1605, %v1606
        %v1608 = vrot.slane %v1607, 1
        %v1609 = vadd.f32 %v1607, %v1608
        %v1610 = vsel %vm746, %v1528, 0.0
        %v1611 = vrot.slane %v1610, 4
        %v1612 = vadd.f32 %v1610, %v1611
        %v1613 = vrot.slane %v1612, 2
        %v1614 = vadd.f32 %v1612, %v1613
        %v1615 = vrot.slane %v1614, 1
        %v1616 = vadd.f32 %v1614, %v1615
        %v1617 = vsel %vm746, %v1529, 0.0
        %v1618 = vrot.slane %v1617, 4
        %v1619 = vadd.f32 %v1617, %v1618
        %v1620 = vrot.slane %v1619, 2
        %v1621 = vadd.f32 %v1619, %v1620
        %v1622 = vrot.slane %v1621, 1
        %v1623 = vadd.f32 %v1621, %v1622
        %v1624 = vsel %vm746, %v1530, 0.0
        %v1625 = vrot.slane %v1624, 4
        %v1626 = vadd.f32 %v1624, %v1625
        %v1627 = vrot.slane %v1626, 2
        %v1628 = vadd.f32 %v1626, %v1627
        %v1629 = vrot.slane %v1628, 1
        %v1630 = vadd.f32 %v1628, %v1629
        %v1631 = vsel %vm746, %v1531, 0.0
        %v1632 = vrot.slane %v1631, 4
        %v1633 = vadd.f32 %v1631, %v1632
        %v1634 = vrot.slane %v1633, 2
        %v1635 = vadd.f32 %v1633, %v1634
        %v1636 = vrot.slane %v1635, 1
        %v1637 = vadd.f32 %v1635, %v1636
        %v1638 = vsel %vm746, %v1532, 0.0
        %v1639 = vrot.slane %v1638, 4
        %v1640 = vadd.f32 %v1638, %v1639
        %v1641 = vrot.slane %v1640, 2
        %v1642 = vadd.f32 %v1640, %v1641
        %v1643 = vrot.slane %v1642, 1
        %v1644 = vadd.f32 %v1642, %v1643
        %vm1661 = vcmask 1041409
        %v1662 = vsel %vm1661, %v1546, %v1539
        %vm1663 = vcmask 1042434
        %v1664 = vsel %vm1663, %v1553, %v1662
        %vm1665 = vcmask 1043459
        %v1666 = vsel %vm1665, %v1560, %v1664
        %vm1667 = vcmask 1044484
        %v1668 = vsel %vm1667, %v1567, %v1666
        %vm1669 = vcmask 1045509
        %v1670 = vsel %vm1669, %v1574, %v1668
        %vm1671 = vcmask 1046534
        %v1672 = vsel %vm1671, %v1581, %v1670
        %vm1673 = vcmask 1047559
        %v1674 = vsel %vm1673, %v1588, %v1672
        %v1675 = vsel %vm1661, %v1602, %v1595
        %v1676 = vsel %vm1663, %v1609, %v1675
        %v1677 = vsel %vm1665, %v1616, %v1676
        %v1678 = vsel %vm1667, %v1623, %v1677
        %v1679 = vsel %vm1669, %v1630, %v1678
        %v1680 = vsel %vm1671, %v1637, %v1679
        %v1681 = vsel %vm1673, %v1644, %v1680
        %1684 = vst.msk [vmem:[%s600] sm:$0xff] %vm746, %v1674
        %1685 = vst.msk [vmem:[%s600 + $0x8] sm:$0xff] %vm746, %v1681
        %s1686 = sand.u32 %s330, 1
        %s1687 = scalar_lea.sflag [#allocation3], %s1686
        %s1688 = sand.u32 %s330, 1
        %s1689 = smul.addr %s1688, 64
        %s1690 = scalar_lea.vmem [#allocation2], %s1689
        %s1691 = smul.u32 2, %s33
        %p1692 = scmp.lt.s32.totalorder %s32, 1
        %s1693 = scalar_select %p1692, %s32, 1
        %p1694 = scmp.lt.s32.totalorder %s1691, 1
        %s1695 = scalar_select %p1694, %s1691, 1
        %s1696 = smul.addr %s1693, 2
        %s1697 = sadd.s32 %s1695, %s1696
        %s1698 = smul.addr %s1697, 8
        %s1699 = scalar_lea.vmem %s13, %s1698
        // Predicated region
        $region69: #{gt_forward.8} parent=67 // pred_check
          %p1700 = pneg %p340
        $region70: #{gt_forward.8} parent=67 // pred_check_branch
          %1702 = sbr.rel (%p1700) target = $region72
        $region71: #{gt_forward.8} parent=67 // pred_region
          %s1703 = smul.u32 16, %s33
          %1705 = vsyncadd %s1687, 0
          %s1706 = smul.addr %s32, 16
          %s1707 = sadd.s32 %s1703, %s1706
          %s1708 = smul.addr %s1707, 4
          %s1709 = scalar_lea.hbm %s12, %s1708
          %s1710 = sshll.u32 %s1690, 4
          %s1711 = int_to_ptr.vmem [resolvable:$true] %s1710
          %s1712 = sshll.u32 %s1709, 4
          %s1713 = int_to_ptr.hbm [resolvable:$true] %s1712
          %1718 = dma.vmem_to_hbm [thread:$0]  %s1711, 1024, %s1713, %s1687, 64, 64, 4
        $region72: #{gt_forward.8} parent=67 // pred_fallthru
          _
        // Predicated region
        $region73: #{gt_forward.8} parent=67 // pred_check
          %p1719 = pneg %p368
        $region74: #{gt_forward.8} parent=67 // pred_check_branch
          %1721 = sbr.rel (%p1719) target = $region76
        $region75: #{gt_forward.8} parent=67 // pred_region
          %s1722 = smul.u32 2, %s33
        $region76: #{gt_forward.8} parent=67 // pred_fallthru
          _
      $region68: #{gt_forward.8} parent=5 // pred_fallthru
        _
      %p1723 = scmp.le.s32.totalorder 2, %s23
      // Predicated region
      $region77: #{gt_forward.8} parent=5 // pred_check
        %p1724 = pneg %p1723
      $region78: #{gt_forward.8} parent=5 // pred_check_branch
        %1726 = sbr.rel (%p1724) target = $region80
      $region79: #{gt_forward.8} parent=5 // pred_region
        %s1727 = ssub.s32 %s23, 2
        // Predicated region
        $region81: #{gt_forward.8} parent=79 // pred_check
          %p1728 = pneg %p346
        $region82: #{gt_forward.8} parent=79 // pred_check_branch
          %1730 = sbr.rel (%p1728) target = $region84
        $region83: #{gt_forward.8} parent=79 // pred_region
          %s1731 = sand.u32 %s331, 1
          %s1732 = scalar_lea.sflag [#allocation3], %s1731
          %s1733 = sand.u32 %s331, 1
          %s1734 = smul.addr %s1733, 64
          %s1735 = scalar_lea.vmem [#allocation2], %s1734
          %1737 = dma.done %s1732, 1024
        $region84: #{gt_forward.8} parent=79 // pred_fallthru
          _
        // Predicated region
        $region85: #{gt_forward.8} parent=79 // pred_check
          %p1738 = pneg %p374
        $region86: #{gt_forward.8} parent=79 // pred_check_branch
          %1740 = sbr.rel (%p1738) target = $region88
        $region87: #{gt_forward.8} parent=79 // pred_region
          %s1741 = smul.u32 2, %s35
          %p1742 = scmp.lt.s32.totalorder %s34, 1
          %s1743 = scalar_select %p1742, %s34, 1
          %p1744 = scmp.lt.s32.totalorder %s1741, 1
          %s1745 = scalar_select %p1744, %s1741, 1
          %s1746 = smul.addr %s1743, 2
          %s1747 = sadd.s32 %s1745, %s1746
          %s1748 = smul.addr %s1747, 8
          %s1749 = scalar_lea.vmem %s13, %s1748
        $region88: #{gt_forward.8} parent=79 // pred_fallthru
          _
      $region80: #{gt_forward.8} parent=5 // pred_fallthru
        _
    $region6: #{gt_forward.8} parent=1 // loop_footer
      %s27 = sadd.s32 1, %s23
    $region7: #{gt_forward.8} parent=1 // loop_footer_branch
      %22 = sbr.rel target = $region3
    $region8: #{gt_forward.8} parent=1 // loop_exit
      _
    %1750 = vsyncpa [#allocation3], 1
    %s1751 = scalar_lea.sflag [#allocation3], 1
    %1752 = vsyncpa %s1751, 1

// kernel: gt_forward.12
$region0: #{gt_forward.12}
  #allocation0 [shape = 'u32[]', space=smem, size = 0x4, offset = 0x4, fixed_abs, tag = 'smem constant byte address 0x4 - core index']
  #allocation1 [shape = 'u32[72,128]{1,0:T(1,128)}', space=vmem, size = 0x9000, scoped, tag = 'internal scratch']
  %s0 = inlined_call_operand.vmem [shape: f32[32,32], index: 0, kind: input, shape index: {}]
  %s1 = inlined_call_operand.vmem [shape: f32[32,32], index: 1, kind: input, shape index: {}]
  %s2 = inlined_call_operand.vmem [shape: f32[32,32], index: 2, kind: input, shape index: {}]
  %s3 = inlined_call_operand.vmem [shape: f32[1,32], index: 3, kind: input, shape index: {}]
  %s4 = inlined_call_operand.vmem [shape: f32[32,32], index: 4, kind: output, shape index: {0}]
  %s5 = inlined_call_operand.vmem [shape: f32[1,32], index: 5, kind: output, shape index: {1}]
  %s6 = inlined_call_operand.vmem [shape: f32[1,32], index: 6, kind: output, shape index: {2}]
  %7 = xla_tuple %s4, %s5, %s6
  %s8 = sld [smem:[#allocation0]]
  $region42: #{gt_forward.12} parent=0
    _
  %s10 = ssub.s32 1, %s8
  %s11 = scalar_select 0, %s10, %s8
  // Predicated region
  $region2: #{gt_forward.12} parent=0 // pred_check
    _
  $region3: #{gt_forward.12} parent=0 // pred_check_branch
    %13 = sbr.rel (0) target = $region5
  $region4: #{gt_forward.12} parent=0 // pred_region
    _
  $region5: #{gt_forward.12} parent=0 // pred_fallthru
    _
  // Predicated region
  $region6: #{gt_forward.12} parent=0 // pred_check
    _
  $region7: #{gt_forward.12} parent=0 // pred_check_branch
    %15 = sbr.rel (0) target = $region9
  $region8: #{gt_forward.12} parent=0 // pred_region
    _
  $region9: #{gt_forward.12} parent=0 // pred_fallthru
    _
  // Predicated region
  $region10: #{gt_forward.12} parent=0 // pred_check
    _
  $region11: #{gt_forward.12} parent=0 // pred_check_branch
    %17 = sbr.rel (0) target = $region13
  $region12: #{gt_forward.12} parent=0 // pred_region
    _
  $region13: #{gt_forward.12} parent=0 // pred_fallthru
    _
  // Predicated region
  $region14: #{gt_forward.12} parent=0 // pred_check
    _
  $region15: #{gt_forward.12} parent=0 // pred_check_branch
    %19 = sbr.rel (0) target = $region17
  $region16: #{gt_forward.12} parent=0 // pred_region
    _
  $region17: #{gt_forward.12} parent=0 // pred_fallthru
    _
  %v21 = vld [vmem:[%s0] sm:$0xff]
  %v22 = vld [vmem:[%s0 + $0x8] sm:$0xff]
  %v23 = vld [vmem:[%s0 + $0x10] sm:$0xff]
  %v24 = vld [vmem:[%s0 + $0x18] sm:$0xff]
  %v25 = vld [vmem:[%s1] sm:$0xff]
  %v26 = vld [vmem:[%s1 + $0x8] sm:$0xff]
  %v27 = vld [vmem:[%s1 + $0x10] sm:$0xff]
  %v28 = vld [vmem:[%s1 + $0x18] sm:$0xff]
  %v29 = vsub.f32 %v21, %v25
  %v30 = vsub.f32 %v22, %v26
  %v31 = vsub.f32 %v23, %v27
  %v32 = vsub.f32 %v24, %v28
  %v33 = vld [vmem:[%s2] sm:$0xff]
  %v34 = vld [vmem:[%s2 + $0x8] sm:$0xff]
  %v35 = vld [vmem:[%s2 + $0x10] sm:$0xff]
  %v36 = vld [vmem:[%s2 + $0x18] sm:$0xff]
  %v37 = vpack.c.bf16 %v30, %v29
  %v38 = vpack.c.bf16 %v32, %v31
  %v39 = vpack.c.bf16 %v34, %v33
  %v40 = vpack.c.bf16 %v36, %v35
  %v41 = vld [vmem:[%s3] sm:$0x1]
  %v43 = vperm.slane %v41, 0
  %vm45 = vcmask 261120
  %v47 = vsel %vm45, %v37, 0
  %v50 = vsel %vm45, %v38, 0
  %52 = vmatpush.bf16.msra.mxu0 0
  %53 = vmatpush.bf16.msra.mxu0 0
  %54 = vmatpush.bf16.msra.mxu0 0
  %55 = vmatpush.bf16.msra.mxu0 0
  %56 = vmatpush.bf16.msra.mxu0 0
  %57 = vmatpush.bf16.msra.mxu0 0
  %58 = vmatpush.bf16.msra.mxu0 %v40
  %59 = vmatpush.bf16.msra.mxu0 %v39
  %60 = vmatmul.bf16.gmra.mxu0 %v47
  %v61 = vpop.f32.mrf.mxu0
  %v62 = vadd.f32 %v43, %v61
  %v63 = vpop.f32.mrf.mxu0
  %v64 = vadd.f32 %v43, %v63
  %65 = vmatmul.bf16.gmra.mxu0 %v50
  %v66 = vpop.f32.mrf.mxu0
  %v67 = vadd.f32 %v43, %v66
  %v68 = vpop.f32.mrf.mxu0
  %v69 = vadd.f32 %v43, %v68
  %70 = vdwg.mxu0
  %71 = vst.msk [vmem:[%s4] sm:$0xff] %vm45, %v62
  %72 = vst.msk [vmem:[%s4 + $0x8] sm:$0xff] %vm45, %v64
  %73 = vst.msk [vmem:[%s4 + $0x10] sm:$0xff] %vm45, %v67
  %74 = vst.msk [vmem:[%s4 + $0x18] sm:$0xff] %vm45, %v69
  %v75 = vsel %vm45, %v62, 0.0
  %v76 = vsel %vm45, %v64, 0.0
  %v77 = vadd.f32 %v75, %v76
  %v78 = vsel %vm45, %v67, 0.0
  %v79 = vadd.f32 %v77, %v78
  %v80 = vsel %vm45, %v69, 0.0
  %v81 = vadd.f32 %v79, %v80
  %v82 = vrot.slane %v81, 4
  %v83 = vadd.f32 %v81, %v82
  %v84 = vrot.slane %v83, 2
  %v85 = vadd.f32 %v83, %v84
  %v86 = vrot.slane %v85, 1
  %v87 = vadd.f32 %v85, %v86
  %vm88 = vcmask 253952
  %89 = vst.msk [vmem:[%s5] sm:$0x1] %vm88, %v87
  %v90 = vmul.f32 %v62, %v62
  %v91 = vmul.f32 %v64, %v64
  %v92 = vmul.f32 %v67, %v67
  %v93 = vmul.f32 %v69, %v69
  %v94 = vsel %vm45, %v90, 0.0
  %v95 = vsel %vm45, %v91, 0.0
  %v96 = vadd.f32 %v94, %v95
  %v97 = vsel %vm45, %v92, 0.0
  %v98 = vadd.f32 %v96, %v97
  %v99 = vsel %vm45, %v93, 0.0
  %v100 = vadd.f32 %v98, %v99
  %v101 = vrot.slane %v100, 4
  %v102 = vadd.f32 %v100, %v101
  %v103 = vrot.slane %v102, 2
  %v104 = vadd.f32 %v102, %v103
  %v105 = vrot.slane %v104, 1
  %v106 = vadd.f32 %v104, %v105
  %107 = vst.msk [vmem:[%s6] sm:$0x1] %vm88, %v106
  // Predicated region
  $region18: #{gt_forward.12} parent=0 // pred_check
    _
  $region19: #{gt_forward.12} parent=0 // pred_check_branch
    %109 = sbr.rel (0) target = $region21
  $region20: #{gt_forward.12} parent=0 // pred_region
    _
  $region21: #{gt_forward.12} parent=0 // pred_fallthru
    _
  // Predicated region
  $region22: #{gt_forward.12} parent=0 // pred_check
    _
  $region23: #{gt_forward.12} parent=0 // pred_check_branch
    %111 = sbr.rel (0) target = $region25
  $region24: #{gt_forward.12} parent=0 // pred_region
    _
  $region25: #{gt_forward.12} parent=0 // pred_fallthru
    _
  // Predicated region
  $region26: #{gt_forward.12} parent=0 // pred_check
    _
  $region27: #{gt_forward.12} parent=0 // pred_check_branch
    %113 = sbr.rel (0) target = $region29
  $region28: #{gt_forward.12} parent=0 // pred_region
    _
  $region29: #{gt_forward.12} parent=0 // pred_fallthru
    _
  // Predicated region
  $region30: #{gt_forward.12} parent=0 // pred_check
    _
  $region31: #{gt_forward.12} parent=0 // pred_check_branch
    %115 = sbr.rel (0) target = $region33
  $region32: #{gt_forward.12} parent=0 // pred_region
    _
  $region33: #{gt_forward.12} parent=0 // pred_fallthru
    _
  // Predicated region
  $region34: #{gt_forward.12} parent=0 // pred_check
    _
  $region35: #{gt_forward.12} parent=0 // pred_check_branch
    %117 = sbr.rel (0) target = $region37
  $region36: #{gt_forward.12} parent=0 // pred_region
    _
  $region37: #{gt_forward.12} parent=0 // pred_fallthru
    _
  // Predicated region
  $region38: #{gt_forward.12} parent=0 // pred_check
    _
  $region39: #{gt_forward.12} parent=0 // pred_check_branch
    %119 = sbr.rel (0) target = $region41
  $region40: #{gt_forward.12} parent=0 // pred_region
    _
  $region41: #{gt_forward.12} parent=0 // pred_fallthru
    _

// kernel: gt_forward.11
$region0: #{gt_forward.11}
  #allocation0 [shape = 'u32[]', space=smem, size = 0x4, offset = 0x4, fixed_abs, tag = 'smem constant byte address 0x4 - core index']
  #allocation1 [shape = 'u32[72,128]{1,0:T(1,128)}', space=vmem, size = 0x9000, scoped, tag = 'internal scratch']
  #allocation2 [shape = 'f32[16,1]{1,0:T(8,128)}', space=vmem, size = 0x2000, scoped, tag = 'scratch operand']
  %s0 = inlined_call_operand.vmem [shape: f32[2,16,8], index: 0, kind: input, shape index: {}, may-alias: {0,1}]
  %s1 = inlined_call_operand.vmem [shape: f32[2,16,8], index: 1, kind: input, shape index: {}, may-alias: {0,1}]
  %s2 = inlined_call_operand.vmem [shape: f32[2,16,32], index: 2, kind: input, shape index: {}]
  %s3 = inlined_call_operand.vmem [shape: f32[2,16,32], index: 3, kind: output, shape index: {}]
  %s4 = sld [smem:[#allocation0]]
  $region53: #{gt_forward.11} parent=0
    _
  %s6 = ssub.s32 1, %s4
  %s7 = scalar_select 0, %s6, %s4
  loop: start=0, step=1, limit=4
  $region2: #{gt_forward.11} parent=0 // loop_pre_header
    _
  $region3: #{gt_forward.11} parent=0 // loop_header
    %s9 = sphi 0, %s13
    %p10 = scmp.ge.s32.totalorder %s9, 4
    %s16 = sphi 0, %s28
    %s17 = sphi 0, %s24
    %s18 = sphi 0, %s16
    %s19 = sphi 0, %s17
    %s20 = sphi 0, %s18
    %s21 = sphi 0, %s19
    %s33 = sphi 0, %s35
    %s36 = sphi 0, %s33
    %s37 = sphi 0, %s36
    %s53 = sphi 0, %s37
    %s59 = sphi 0, %s61
    %s62 = sphi 0, %s59
    %s63 = sphi 0, %s62
    %s79 = sphi 0, %s63
    %s87 = sphi 0, %s89
    %s90 = sphi 0, %s87
    %s91 = sphi 0, %s90
    %s107 = sphi 0, %s91
    %s113 = sphi 0, %s115
    %s116 = sphi 0, %s113
    %s117 = sphi 0, %s116
    %s133 = sphi 0, %s117
  $region4: #{gt_forward.11} parent=0 // loop_header_branch
    %12 = sbr.rel (%p10) target = $region8
  $region5: #{gt_forward.11} parent=0 // loop_body
    %s14 = ssub.s32 %s9, 1
    %s15 = ssub.s32 %s9, 2
    %s22 = sadd.s32 1, %s17
    %p23 = scmp.ge.s32.totalorder %s22, 1
    %s24 = scalar_select %p23, 0, %s22
    %s25 = sadd.s32 1, %s16
    %s26 = scalar_select %p23, %s25, %s16
    %p27 = scmp.ge.s32.totalorder %s26, 2
    %s28 = scalar_select %p27, 0, %s26
    %s29 = ssub.s32 %s16, %s28
    %s30 = ssub.s32 %s17, %s24
    %s31 = sor.u32 %s29, %s30
    %p32 = scmp.eq.s32.totalorder %s31, 0
    %s34 = sadd.s32 %s33, 1
    %s35 = scalar_select %p32, %s33, %s34
    %p38 = pneg %p32
    %p39 = scmp.eq.s32.totalorder %s9, 1
    %p40 = por %p38, %p39
    %p41 = scmp.ne.s32.totalorder %s33, %s36
    %p42 = scmp.eq.s32.totalorder %s9, 0
    %p43 = por %p41, %p42
    %p44 = scmp.ne.s32.totalorder %s33, %s36
    %p45 = scmp.eq.s32.totalorder %s14, 1
    %p46 = por %p44, %p45
    %p47 = scmp.ne.s32.totalorder %s36, %s37
    %p48 = scmp.eq.s32.totalorder %s14, 0
    %p49 = por %p47, %p48
    %p50 = scmp.ne.s32.totalorder %s36, %s37
    %p51 = scmp.eq.s32.totalorder %s15, 1
    %p52 = por %p50, %p51
    %p54 = scmp.ne.s32.totalorder %s37, %s53
    %p55 = scmp.eq.s32.totalorder %s15, 0
    %p56 = por %p54, %p55
    %s57 = ssub.s32 %s16, %s28
    %p58 = scmp.eq.s32.totalorder %s57, 0
    %s60 = sadd.s32 %s59, 1
    %s61 = scalar_select %p58, %s59, %s60
    %p64 = pneg %p58
    %p65 = scmp.eq.s32.totalorder %s9, 1
    %p66 = por %p64, %p65
    %p67 = scmp.ne.s32.totalorder %s59, %s62
    %p68 = scmp.eq.s32.totalorder %s9, 0
    %p69 = por %p67, %p68
    %p70 = scmp.ne.s32.totalorder %s59, %s62
    %p71 = scmp.eq.s32.totalorder %s14, 1
    %p72 = por %p70, %p71
    %p73 = scmp.ne.s32.totalorder %s62, %s63
    %p74 = scmp.eq.s32.totalorder %s14, 0
    %p75 = por %p73, %p74
    %p76 = scmp.ne.s32.totalorder %s62, %s63
    %p77 = scmp.eq.s32.totalorder %s15, 1
    %p78 = por %p76, %p77
    %p80 = scmp.ne.s32.totalorder %s63, %s79
    %p81 = scmp.eq.s32.totalorder %s15, 0
    %p82 = por %p80, %p81
    %s83 = ssub.s32 %s16, %s28
    %s84 = ssub.s32 %s17, %s24
    %s85 = sor.u32 %s83, %s84
    %p86 = scmp.eq.s32.totalorder %s85, 0
    %s88 = sadd.s32 %s87, 1
    %s89 = scalar_select %p86, %s87, %s88
    %p92 = pneg %p86
    %p93 = scmp.eq.s32.totalorder %s9, 1
    %p94 = por %p92, %p93
    %p95 = scmp.ne.s32.totalorder %s87, %s90
    %p96 = scmp.eq.s32.totalorder %s9, 0
    %p97 = por %p95, %p96
    %p98 = scmp.ne.s32.totalorder %s87, %s90
    %p99 = scmp.eq.s32.totalorder %s14, 1
    %p100 = por %p98, %p99
    %p101 = scmp.ne.s32.totalorder %s90, %s91
    %p102 = scmp.eq.s32.totalorder %s14, 0
    %p103 = por %p101, %p102
    %p104 = scmp.ne.s32.totalorder %s90, %s91
    %p105 = scmp.eq.s32.totalorder %s15, 1
    %p106 = por %p104, %p105
    %p108 = scmp.ne.s32.totalorder %s91, %s107
    %p109 = scmp.eq.s32.totalorder %s15, 0
    %p110 = por %p108, %p109
    %s111 = ssub.s32 %s16, %s28
    %p112 = scmp.eq.s32.totalorder %s111, 0
    %s114 = sadd.s32 %s113, 1
    %s115 = scalar_select %p112, %s113, %s114
    %p118 = pneg %p112
    %p119 = scmp.eq.s32.totalorder %s9, 1
    %p120 = por %p118, %p119
    %p121 = scmp.ne.s32.totalorder %s113, %s116
    %p122 = scmp.eq.s32.totalorder %s9, 0
    %p123 = por %p121, %p122
    %p124 = scmp.ne.s32.totalorder %s113, %s116
    %p125 = scmp.eq.s32.totalorder %s14, 1
    %p126 = por %p124, %p125
    %p127 = scmp.ne.s32.totalorder %s116, %s117
    %p128 = scmp.eq.s32.totalorder %s14, 0
    %p129 = por %p127, %p128
    %p130 = scmp.ne.s32.totalorder %s116, %s117
    %p131 = scmp.eq.s32.totalorder %s15, 1
    %p132 = por %p130, %p131
    %p134 = scmp.ne.s32.totalorder %s117, %s133
    %p135 = scmp.eq.s32.totalorder %s15, 0
    %p136 = por %p134, %p135
    %p137 = scmp.le.s32.totalorder 1, %s9
    %p138 = scmp.lt.s32.totalorder %s9, 3
    %p139 = pnand %p137, %p138
    %p140 = pneg %p139
    // Predicated region
    $region9: #{gt_forward.11} parent=5 // pred_check
      _
    $region10: #{gt_forward.11} parent=5 // pred_check_branch
      %142 = sbr.rel (%p139) target = $region12
    $region11: #{gt_forward.11} parent=5 // pred_region
      %s143 = ssub.s32 %s9, 1
    $region12: #{gt_forward.11} parent=5 // pred_fallthru
      _
    %p144 = scmp.lt.s32.totalorder %s9, 2
    // Predicated region
    $region13: #{gt_forward.11} parent=5 // pred_check
      %p145 = pneg %p144
    $region14: #{gt_forward.11} parent=5 // pred_check_branch
      %147 = sbr.rel (%p145) target = $region16
    $region15: #{gt_forward.11} parent=5 // pred_region
      // Predicated region
      $region17: #{gt_forward.11} parent=15 // pred_check
        %p148 = pneg %p43
      $region18: #{gt_forward.11} parent=15 // pred_check_branch
        %150 = sbr.rel (%p148) target = $region20
      $region19: #{gt_forward.11} parent=15 // pred_region
        %s151 = smul.u32 2, %s17
        %p152 = scmp.lt.s32.totalorder %s16, 1
        %s153 = scalar_select %p152, %s16, 1
        %p154 = scmp.lt.s32.totalorder %s151, 1
        %s155 = scalar_select %p154, %s151, 1
        %s156 = smul.addr %s153, 2
        %s157 = sadd.s32 %s155, %s156
        %s158 = smul.addr %s157, 8
        %s159 = scalar_lea.vmem %s0, %s158
        %s160 = smul.u32 2, %s17
      $region20: #{gt_forward.11} parent=15 // pred_fallthru
        _
      // Predicated region
      $region21: #{gt_forward.11} parent=15 // pred_check
        %p161 = pneg %p69
      $region22: #{gt_forward.11} parent=15 // pred_check_branch
        %163 = sbr.rel (%p161) target = $region24
      $region23: #{gt_forward.11} parent=15 // pred_region
        %p164 = scmp.lt.s32.totalorder %s16, 1
        %s165 = scalar_select %p164, %s16, 1
        %s166 = smul.addr %s165, 2
        %s167 = smul.addr %s166, 8
        %s168 = scalar_lea.vmem %s1, %s167
      $region24: #{gt_forward.11} parent=15 // pred_fallthru
        _
      // Predicated region
      $region25: #{gt_forward.11} parent=15 // pred_check
        %p169 = pneg %p97
      $region26: #{gt_forward.11} parent=15 // pred_check_branch
        %171 = sbr.rel (%p169) target = $region28
      $region27: #{gt_forward.11} parent=15 // pred_region
        %s172 = smul.u32 2, %s17
        %p173 = scmp.lt.s32.totalorder %s16, 1
        %s174 = scalar_select %p173, %s16, 1
        %p175 = scmp.lt.s32.totalorder %s172, 1
        %s176 = scalar_select %p175, %s172, 1
        %s177 = smul.addr %s174, 2
        %s178 = sadd.s32 %s176, %s177
        %s179 = smul.addr %s178, 8
        %s180 = scalar_lea.vmem %s2, %s179
        %s181 = smul.u32 2, %s17
      $region28: #{gt_forward.11} parent=15 // pred_fallthru
        _
    $region16: #{gt_forward.11} parent=5 // pred_fallthru
      _
    %p182 = scmp.le.s32.totalorder 1, %s9
    %p183 = scmp.lt.s32.totalorder %s9, 3
    %p184 = pnand %p182, %p183
    %p185 = pneg %p184
    // Predicated region
    $region29: #{gt_forward.11} parent=5 // pred_check
      _
    $region30: #{gt_forward.11} parent=5 // pred_check_branch
      %187 = sbr.rel (%p184) target = $region32
    $region31: #{gt_forward.11} parent=5 // pred_region
      %s188 = ssub.s32 %s9, 1
      %s189 = smul.u32 2, %s19
      %p190 = scmp.lt.s32.totalorder %s18, 1
      %s191 = scalar_select %p190, %s18, 1
      %p192 = scmp.lt.s32.totalorder %s189, 1
      %s193 = scalar_select %p192, %s189, 1
      %s194 = smul.addr %s191, 2
      %s195 = sadd.s32 %s193, %s194
      %s196 = smul.addr %s195, 8
      %s197 = scalar_lea.vmem %s0, %s196
      %p198 = pneg %p49
      %p199 = pneg %p46
      %p200 = scmp.lt.s32.totalorder %s18, 1
      %s201 = scalar_select %p200, %s18, 1
      %s202 = smul.addr %s201, 2
      %s203 = smul.addr %s202, 8
      %s204 = scalar_lea.vmem %s1, %s203
      %p205 = pneg %p75
      %p206 = pneg %p72
      %s207 = smul.u32 2, %s19
      %p208 = scmp.lt.s32.totalorder %s18, 1
      %s209 = scalar_select %p208, %s18, 1
      %p210 = scmp.lt.s32.totalorder %s207, 1
      %s211 = scalar_select %p210, %s207, 1
      %s212 = smul.addr %s209, 2
      %s213 = sadd.s32 %s211, %s212
      %s214 = smul.addr %s213, 8
      %s215 = scalar_lea.vmem %s2, %s214
      %p216 = pneg %p103
      %p217 = pneg %p100
      %p218 = pneg %p129
      %p219 = pneg %p126
      %p220 = scmp.lt.s32.totalorder %s18, 1
      %s221 = scalar_select %p220, %s18, 1
      %s222 = smul.addr %s221, 2
      %s223 = smul.addr %s222, 8
      %s224 = scalar_lea.vmem %s3, %s223
      %s225 = smul.u32 2, %s19
      %p226 = scmp.lt.s32.totalorder %s18, 1
      %s227 = scalar_select %p226, %s18, 1
      %p228 = scmp.lt.s32.totalorder %s225, 1
      %s229 = scalar_select %p228, %s225, 1
      %s230 = smul.addr %s227, 2
      %s231 = sadd.s32 %s229, %s230
      %s232 = smul.addr %s231, 8
      %s233 = scalar_lea.vmem %s0, %s232
      %s234 = smul.u32 2, %s19
      %p235 = scmp.lt.s32.totalorder %s18, 1
      %s236 = scalar_select %p235, %s18, 1
      %s237 = smul.addr %s236, 2
      %s238 = smul.addr %s237, 8
      %s239 = scalar_lea.vmem %s1, %s238
      %s240 = smul.u32 2, %s19
      %p241 = scmp.lt.s32.totalorder %s18, 1
      %s242 = scalar_select %p241, %s18, 1
      %p243 = scmp.lt.s32.totalorder %s240, 1
      %s244 = scalar_select %p243, %s240, 1
      %s245 = smul.addr %s242, 2
      %s246 = sadd.s32 %s244, %s245
      %s247 = smul.addr %s246, 8
      %s248 = scalar_lea.vmem %s2, %s247
      %s249 = smul.u32 2, %s19
      %p250 = scmp.lt.s32.totalorder %s18, 1
      %s251 = scalar_select %p250, %s18, 1
      %s252 = smul.addr %s251, 2
      %s253 = smul.addr %s252, 8
      %s254 = scalar_lea.vmem %s3, %s253
      %p256 = scmp.eq.s32.totalorder %s19, 0
      // Predicated region
      $region33: #{gt_forward.11} parent=31 // pred_check
        %p257 = pneg %p256
      $region34: #{gt_forward.11} parent=31 // pred_check_branch
        %259 = sbr.rel (%p257) target = $region36
      $region35: #{gt_forward.11} parent=31 // pred_region
        %vm260 = vcmask 261120
        %261 = vst.msk [vmem:[%s254] sm:$0xff] %vm260, 0.0
        %262 = vst.msk [vmem:[%s254 + $0x8] sm:$0xff] %vm260, 0.0
        %vm263 = vcmask 7168
        %264 = vst.msk [vmem:[#allocation2] sm:$0xff] %vm263, 0.0
        %265 = vst.msk [vmem:[#allocation2 + $0x8] sm:$0xff] %vm263, 0.0
      $region36: #{gt_forward.11} parent=31 // pred_fallthru
        _
      %v266 = vld [vmem:[%s233] sm:$0xff]
      %v267 = vld [vmem:[%s233 + $0x8] sm:$0xff]
      %v268 = vld [vmem:[%s239] sm:$0xff]
      %v269 = vld [vmem:[%s239 + $0x8] sm:$0xff]
      %v270 = vpack.c.bf16 %v267, %v266
      %v271 = vpack.c.bf16 %v269, %v268
      %vm272 = vcmask 64512
      %v274 = vsel %vm272, %v270, 0
      %v277 = vsel %vm272, %v271, 0
      %279 = vmatpush.bf16.xpose.msra.mxu0 0
      %280 = vmatpush.bf16.xpose.msra.mxu0 0
      %281 = vmatpush.bf16.xpose.msra.mxu0 0
      %282 = vmatpush.bf16.xpose.msra.mxu0 0
      %283 = vmatpush.bf16.xpose.msra.mxu0 0
      %284 = vmatpush.bf16.xpose.msra.mxu0 0
      %285 = vmatpush.bf16.xpose.msra.mxu0 0
      %286 = vmatpush.bf16.xpose.msra.mxu0 %v277
      %287 = vmatmul.bf16.gmra.mxu0 %v274
      %v288 = vpop.f32.mrf.mxu0
      %v289 = vadd.f32 0.0, %v288
      %v290 = vpop.f32.mrf.mxu0
      %v291 = vadd.f32 0.0, %v290
      %292 = vdwg.mxu0
      %vm293 = vcmask 130048
      %v294 = vsel %vm293, %v289, -inf
      %295 = vmax.xlane.f32.xlu0 %v294
      %v296 = vpop.xlane.xlu0 %295
      %v297 = vsel %vm293, %v291, -inf
      %298 = vmax.xlane.f32.xlu0 %v297
      %v299 = vpop.xlane.xlu0 %298
      %v300 = vsub.f32 %v289, %v296
      %v301 = vsub.f32 %v291, %v299
      %v302 = vmul.f32 %v300, 1.442695
      %v303 = vpow.pop %v302
      %v304 = vmul.f32 %v301, 1.442695
      %v305 = vpow.pop %v304
      %v306 = vsel %vm293, %v303, 0.0
      %307 = vadd.xlane.f32.xlu0 %v306
      %v308 = vpop.xlane.xlu0 %307
      %v309 = vsel %vm293, %v305, 0.0
      %310 = vadd.xlane.f32.xlu0 %v309
      %v311 = vpop.xlane.xlu0 %310
      %v312 = vrcp.pop %v308
      %v313 = vmul.f32 %v308, %v312
      %v314 = vsub.f32 1.0, %v313
      %v315 = vmul.f32 %v312, %v314
      %v316 = vadd.f32 %v312, %v315
      %vm317 = vweird.f32 %v308
      %vm318 = vweird.f32 %v312
      %vm319 = vmor %vm317, %vm318
      %v320 = vsel %vm319, %v312, %v316
      %v321 = vand.u32 2147483647, %v308
      %vm322 = vcmp.eq.f32.partialorder %v321, 8.507059e+37
      %v323 = vand.u32 %v308, 2147483648
      %v324 = vor.u32 1.1754944e-38, %v323
      %v325 = vsel %vm322, %v324, %v320
      %v326 = vmul.f32 %v303, %v325
      %v327 = vrcp.pop %v311
      %v328 = vmul.f32 %v311, %v327
      %v329 = vsub.f32 1.0, %v328
      %v330 = vmul.f32 %v327, %v329
      %v331 = vadd.f32 %v327, %v330
      %vm332 = vweird.f32 %v311
      %vm333 = vweird.f32 %v327
      %vm334 = vmor %vm332, %vm333
      %v335 = vsel %vm334, %v327, %v331
      %v336 = vand.u32 2147483647, %v311
      %vm337 = vcmp.eq.f32.partialorder %v336, 8.507059e+37
      %v338 = vand.u32 %v311, 2147483648
      %v339 = vor.u32 1.1754944e-38, %v338
      %v340 = vsel %vm337, %v339, %v335
      %v341 = vmul.f32 %v305, %v340
      %v342 = vld [vmem:[#allocation2] sm:$0xff]
      %v343 = vld [vmem:[#allocation2 + $0x8] sm:$0xff]
      %344 = vxpose.xlu0.b32.start [1/16] %v326, 128
      %345 = vxpose.xlu0.b32.cont [2/16] %v341, 128
      %346 = vxpose.xlu0.b32.cont [3/16] 0.0, 128
      %347 = vxpose.xlu0.b32.cont [4/16] 0.0, 128
      %348 = vxpose.xlu0.b32.cont [5/16] 0.0, 128
      %349 = vxpose.xlu0.b32.cont [6/16] 0.0, 128
      %350 = vxpose.xlu0.b32.cont [7/16] 0.0, 128
      %351 = vxpose.xlu0.b32.cont [8/16] 0.0, 128
      %352 = vxpose.xlu0.b32.cont [9/16] 0.0, 128
      %353 = vxpose.xlu0.b32.cont [10/16] 0.0, 128
      %354 = vxpose.xlu0.b32.cont [11/16] 0.0, 128
      %355 = vxpose.xlu0.b32.cont [12/16] 0.0, 128
      %356 = vxpose.xlu0.b32.cont [13/16] 0.0, 128
      %357 = vxpose.xlu0.b32.cont [14/16] 0.0, 128
      %358 = vxpose.xlu0.b32.cont [15/16] 0.0, 128
      %359 = vxpose.xlu0.b32.end [16/16] 0.0, 128
      %v360 = vpop.trf.xlu0
      %v361 = vpop.trf.xlu0
      %v362 = vpop.trf.xlu0
      %v363 = vpop.trf.xlu0
      %v364 = vpop.trf.xlu0
      %v365 = vpop.trf.xlu0
      %v366 = vpop.trf.xlu0
      %v367 = vpop.trf.xlu0
      %v368 = vpop.trf.xlu0
      %v369 = vpop.trf.xlu0
      %v370 = vpop.trf.xlu0
      %v371 = vpop.trf.xlu0
      %v372 = vpop.trf.xlu0
      %v373 = vpop.trf.xlu0
      %v374 = vpop.trf.xlu0
      %v375 = vpop.trf.xlu0
      %v377 = vsel %vm293, %v360, 0
      %v380 = vsel %vm293, %v361, 0
      %382 = vmatpush.msra.mxu0 0.0
      %383 = vmatpush.msra.mxu0 0.0
      %384 = vmatpush.msra.mxu0 0.0
      %385 = vmatpush.msra.mxu0 0.0
      %386 = vmatpush.msra.mxu0 0.0
      %387 = vmatpush.msra.mxu0 0.0
      %388 = vmatpush.msra.mxu0 0.0
      %389 = vmatpush.msra.mxu0 0.0
      %390 = vmatpush.msra.mxu0 0.0
      %391 = vmatpush.msra.mxu0 0.0
      %392 = vmatpush.msra.mxu0 0.0
      %393 = vmatpush.msra.mxu0 0.0
      %394 = vmatpush.msra.mxu0 0.0
      %395 = vmatpush.msra.mxu0 0.0
      %396 = vmatpush.msra.mxu0 1.0
      %397 = vmatpush.msra.mxu0 1.0
      %398 = vmatmul.f32.gmra.mxu0 %v377
      %v399 = vpop.f32.mrf.mxu0
      %v400 = vadd.f32 0.0, %v399
      %401 = vmatmul.f32.gmra.mxu0 %v380
      %v402 = vpop.f32.mrf.mxu0
      %v403 = vadd.f32 0.0, %v402
      %404 = vdwg.mxu0
      %v405 = vadd.f32 %v342, %v400
      %v406 = vadd.f32 %v343, %v403
      %vm407 = vcmask 7168
      %408 = vst.msk [vmem:[#allocation2] sm:$0xff] %vm407, %v405
      %409 = vst.msk [vmem:[#allocation2 + $0x8] sm:$0xff] %vm407, %v406
      %v410 = vld [vmem:[%s254] sm:$0xff]
      %v411 = vld [vmem:[%s254 + $0x8] sm:$0xff]
      %v412 = vld [vmem:[%s248] sm:$0xff]
      %v413 = vld [vmem:[%s248 + $0x8] sm:$0xff]
      %v414 = vpack.c.bf16 %v341, %v326
      %v415 = vpack.c.bf16 %v413, %v412
      %416 = vxpose.xlu0.c.b16.start [1/8] %v414, 128
      %417 = vxpose.xlu0.c.b16.cont [2/8] 0, 128
      %418 = vxpose.xlu0.c.b16.cont [3/8] 0, 128
      %419 = vxpose.xlu0.c.b16.cont [4/8] 0, 128
      %420 = vxpose.xlu0.c.b16.cont [5/8] 0, 128
      %421 = vxpose.xlu0.c.b16.cont [6/8] 0, 128
      %422 = vxpose.xlu0.c.b16.cont [7/8] 0, 128
      %423 = vxpose.xlu0.c.b16.end [8/8] 0, 128
      %v424 = vpop.trf.xlu0
      %v425 = vpop.trf.xlu0
      %v426 = vpop.trf.xlu0
      %v427 = vpop.trf.xlu0
      %v428 = vpop.trf.xlu0
      %v429 = vpop.trf.xlu0
      %v430 = vpop.trf.xlu0
      %v431 = vpop.trf.xlu0
      %v433 = vsel %vm293, %v424, 0
      %435 = vmatpush.bf16.msra.mxu0 0
      %436 = vmatpush.bf16.msra.mxu0 0
      %437 = vmatpush.bf16.msra.mxu0 0
      %438 = vmatpush.bf16.msra.mxu0 0
      %439 = vmatpush.bf16.msra.mxu0 0
      %440 = vmatpush.bf16.msra.mxu0 0
      %441 = vmatpush.bf16.msra.mxu0 0
      %442 = vmatpush.bf16.msra.mxu0 %v415
      %443 = vmatmul.bf16.gmra.mxu0 %v433
      %v444 = vpop.f32.mrf.mxu0
      %v445 = vadd.f32 0.0, %v444
      %v446 = vpop.f32.mrf.mxu0
      %v447 = vadd.f32 0.0, %v446
      %448 = vdwg.mxu0
      %v449 = vadd.f32 %v410, %v445
      %v450 = vadd.f32 %v411, %v447
      %vm451 = vcmask 261120
      %452 = vst.msk [vmem:[%s254] sm:$0xff] %vm451, %v449
      %453 = vst.msk [vmem:[%s254 + $0x8] sm:$0xff] %vm451, %v450
      // Predicated region
      $region37: #{gt_forward.11} parent=31 // pred_check
        %p454 = pneg %p256
      $region38: #{gt_forward.11} parent=31 // pred_check_branch
        %456 = sbr.rel (%p454) target = $region40
      $region39: #{gt_forward.11} parent=31 // pred_region
        %v457 = vld [vmem:[%s254] sm:$0xff]
        %v458 = vld [vmem:[%s254 + $0x8] sm:$0xff]
        %v459 = vld [vmem:[#allocation2] sm:$0xff]
        %v460 = vld [vmem:[#allocation2 + $0x8] sm:$0xff]
        %v461 = vadd.f32 %v459, 1e-09
        %v462 = vadd.f32 %v460, 1e-09
        %v463 = vrcp.pop %v461
        %v464 = vmul.f32 %v461, %v463
        %v465 = vsub.f32 1.0, %v464
        %v466 = vmul.f32 %v463, %v465
        %v467 = vadd.f32 %v463, %v466
        %vm468 = vweird.f32 %v461
        %vm469 = vweird.f32 %v463
        %vm470 = vmor %vm468, %vm469
        %v471 = vsel %vm470, %v463, %v467
        %v472 = vand.u32 2147483647, %v461
        %vm473 = vcmp.eq.f32.partialorder %v472, 8.507059e+37
        %v474 = vand.u32 %v461, 2147483648
        %v475 = vor.u32 1.1754944e-38, %v474
        %v476 = vsel %vm473, %v475, %v471
        %v477 = vmul.f32 1.0, %v476
        %v478 = vrcp.pop %v462
        %v479 = vmul.f32 %v462, %v478
        %v480 = vsub.f32 1.0, %v479
        %v481 = vmul.f32 %v478, %v480
        %v482 = vadd.f32 %v478, %v481
        %vm483 = vweird.f32 %v462
        %vm484 = vweird.f32 %v478
        %vm485 = vmor %vm483, %vm484
        %v486 = vsel %vm485, %v478, %v482
        %v487 = vand.u32 2147483647, %v462
        %vm488 = vcmp.eq.f32.partialorder %v487, 8.507059e+37
        %v489 = vand.u32 %v462, 2147483648
        %v490 = vor.u32 1.1754944e-38, %v489
        %v491 = vsel %vm488, %v490, %v486
        %v492 = vmul.f32 1.0, %v491
        %494 = vset.pattern.permute.xlu0 0
        %495 = vperm.xlu0 %494, %v477
        %v496 = vpop.permute.xlu0 %495
        %499 = vset.pattern.permute.xlu0 0
        %500 = vperm.xlu0 %499, %v492
        %v501 = vpop.permute.xlu0 %500
        %v503 = vmul.f32 %v457, %v496
        %v504 = vmul.f32 %v458, %v501
        %505 = vst.msk [vmem:[%s254] sm:$0xff] %vm451, %v503
        %506 = vst.msk [vmem:[%s254 + $0x8] sm:$0xff] %vm451, %v504
      $region40: #{gt_forward.11} parent=31 // pred_fallthru
        _
      %p507 = scmp.lt.s32.totalorder %s18, 1
      %s508 = scalar_select %p507, %s18, 1
      %s509 = smul.addr %s508, 2
      %s510 = smul.addr %s509, 8
      %s511 = scalar_lea.vmem %s3, %s510
      // Predicated region
      $region41: #{gt_forward.11} parent=31 // pred_check
        %p512 = pneg %p126
      $region42: #{gt_forward.11} parent=31 // pred_check_branch
        %514 = sbr.rel (%p512) target = $region44
      $region43: #{gt_forward.11} parent=31 // pred_region
        _
      $region44: #{gt_forward.11} parent=31 // pred_fallthru
        _
    $region32: #{gt_forward.11} parent=5 // pred_fallthru
      _
    %p515 = scmp.le.s32.totalorder 2, %s9
    // Predicated region
    $region45: #{gt_forward.11} parent=5 // pred_check
      %p516 = pneg %p515
    $region46: #{gt_forward.11} parent=5 // pred_check_branch
      %518 = sbr.rel (%p516) target = $region48
    $region47: #{gt_forward.11} parent=5 // pred_region
      %s519 = ssub.s32 %s9, 2
      // Predicated region
      $region49: #{gt_forward.11} parent=47 // pred_check
        %p520 = pneg %p132
      $region50: #{gt_forward.11} parent=47 // pred_check_branch
        %522 = sbr.rel (%p520) target = $region52
      $region51: #{gt_forward.11} parent=47 // pred_region
        %p523 = scmp.lt.s32.totalorder %s20, 1
        %s524 = scalar_select %p523, %s20, 1
        %s525 = smul.addr %s524, 2
        %s526 = smul.addr %s525, 8
        %s527 = scalar_lea.vmem %s3, %s526
      $region52: #{gt_forward.11} parent=47 // pred_fallthru
        _
    $region48: #{gt_forward.11} parent=5 // pred_fallthru
      _
  $region6: #{gt_forward.11} parent=0 // loop_footer
    %s13 = sadd.s32 1, %s9
  $region7: #{gt_forward.11} parent=0 // loop_footer_branch
    %8 = sbr.rel target = $region3
  $region8: #{gt_forward.11} parent=0 // loop_exit
    _

// kernel: gt_forward.13
$region0: #{gt_forward.13}
  #allocation0 [shape = 'u32[]', space=smem, size = 0x4, offset = 0x4, fixed_abs, tag = 'smem constant byte address 0x4 - core index']
  #allocation1 [shape = 'u32[72,128]{1,0:T(1,128)}', space=vmem, size = 0x9000, scoped, tag = 'internal scratch']
  %s0 = inlined_call_operand.vmem [shape: f32[32,32], index: 0, kind: input, shape index: {}]
  %s1 = inlined_call_operand.vmem [shape: f32[32,32], index: 1, kind: input, shape index: {}]
  %s2 = inlined_call_operand.vmem [shape: f32[1,32], index: 2, kind: input, shape index: {}]
  %s3 = inlined_call_operand.vmem [shape: f32[1,32], index: 3, kind: input, shape index: {}]
  %s4 = inlined_call_operand.vmem [shape: f32[1,32], index: 4, kind: input, shape index: {}]
  %s5 = inlined_call_operand.vmem [shape: f32[1,32], index: 5, kind: input, shape index: {}]
  %s6 = inlined_call_operand.hbm [shape: f32[32,32], index: 6, kind: output, shape index: {}]
  %s7 = sld [smem:[#allocation0]]
  $region34: #{gt_forward.13} parent=0
    _
  %s9 = ssub.s32 1, %s7
  %s10 = scalar_select 0, %s9, %s7
  $region1: #{gt_forward.13} parent=0
    #allocation2 [shape = 'u8[16384]{0}', space=vmem, size = 0x4000, scoped, tag = 'output window, operand 0, single buffered']
    #allocation3 [shape = 's32[1]{0}', space=sflag, size = 0x4, scoped, tag = 'scoped memory for gt_forward.13']
    %11 = vsyncpa [#allocation3], 0
    // Predicated region
    $region2: #{gt_forward.13} parent=1 // pred_check
      _
    $region3: #{gt_forward.13} parent=1 // pred_check_branch
      %13 = sbr.rel (0) target = $region5
    $region4: #{gt_forward.13} parent=1 // pred_region
      _
    $region5: #{gt_forward.13} parent=1 // pred_fallthru
      _
    // Predicated region
    $region6: #{gt_forward.13} parent=1 // pred_check
      _
    $region7: #{gt_forward.13} parent=1 // pred_check_branch
      %15 = sbr.rel (0) target = $region9
    $region8: #{gt_forward.13} parent=1 // pred_region
      _
    $region9: #{gt_forward.13} parent=1 // pred_fallthru
      _
    // Predicated region
    $region10: #{gt_forward.13} parent=1 // pred_check
      _
    $region11: #{gt_forward.13} parent=1 // pred_check_branch
      %17 = sbr.rel (0) target = $region13
    $region12: #{gt_forward.13} parent=1 // pred_region
      _
    $region13: #{gt_forward.13} parent=1 // pred_fallthru
      _
    // Predicated region
    $region14: #{gt_forward.13} parent=1 // pred_check
      _
    $region15: #{gt_forward.13} parent=1 // pred_check_branch
      %19 = sbr.rel (0) target = $region17
    $region16: #{gt_forward.13} parent=1 // pred_region
      _
    $region17: #{gt_forward.13} parent=1 // pred_fallthru
      _
    // Predicated region
    $region18: #{gt_forward.13} parent=1 // pred_check
      _
    $region19: #{gt_forward.13} parent=1 // pred_check_branch
      %21 = sbr.rel (0) target = $region21
    $region20: #{gt_forward.13} parent=1 // pred_region
      _
    $region21: #{gt_forward.13} parent=1 // pred_fallthru
      _
    // Predicated region
    $region22: #{gt_forward.13} parent=1 // pred_check
      _
    $region23: #{gt_forward.13} parent=1 // pred_check_branch
      %23 = sbr.rel (0) target = $region25
    $region24: #{gt_forward.13} parent=1 // pred_region
      _
    $region25: #{gt_forward.13} parent=1 // pred_fallthru
      _
    %v24 = vld [vmem:[%s4] sm:$0x1]
    %v25 = vld [vmem:[%s5] sm:$0x1]
    %v26 = vld [vmem:[%s2] sm:$0x1]
    %v27 = vld [vmem:[%s3] sm:$0x1]
    %v28 = vadd.f32 %v24, 0.0
    %v29 = vmul.f32 %v28, 0.03125
    %v30 = vadd.f32 %v25, 0.0
    %v31 = vmul.f32 %v30, 0.03125
    %v32 = vmul.f32 %v29, %v29
    %v33 = vsub.f32 %v31, %v32
    %v34 = vmax.f32 %v33, 0.0
    %v35 = vadd.f32 %v34, 1e-05
    %v36 = vrsqrt.pop %v35
    %v37 = vmul.f32 %v36, %v35
    %v38 = vmul.f32 %v37, %v36
    %v39 = vmul.f32 0.5, %v38
    %v40 = vsub.f32 1.5, %v39
    %v41 = vmul.f32 %v36, %v40
    %vm42 = vweird.f32 %v35
    %vm43 = vweird.f32 %v36
    %vm44 = vmor %vm42, %vm43
    %v45 = vsel %vm44, %v36, %v41
    %v46 = vmul.f32 %v45, %v26
    %v47 = vmul.f32 %v29, %v46
    %v48 = vsub.f32 %v27, %v47
    %v49 = vld [vmem:[%s1] sm:$0xff]
    %v50 = vld [vmem:[%s1 + $0x8] sm:$0xff]
    %v51 = vld [vmem:[%s1 + $0x10] sm:$0xff]
    %v52 = vld [vmem:[%s1 + $0x18] sm:$0xff]
    %v53 = vld [vmem:[%s0] sm:$0xff]
    %v54 = vld [vmem:[%s0 + $0x8] sm:$0xff]
    %v55 = vld [vmem:[%s0 + $0x10] sm:$0xff]
    %v56 = vld [vmem:[%s0 + $0x18] sm:$0xff]
    %v58 = vperm.slane %v46, 0
    %v60 = vmul.f32 %v53, %v58
    %v61 = vmul.f32 %v54, %v58
    %v62 = vmul.f32 %v55, %v58
    %v63 = vmul.f32 %v56, %v58
    %v65 = vperm.slane %v48, 0
    %v67 = vadd.f32 %v60, %v65
    %v68 = vadd.f32 %v61, %v65
    %v69 = vadd.f32 %v62, %v65
    %v70 = vadd.f32 %v63, %v65
    %v71 = vmax.f32 %v67, 0.0
    %v72 = vmax.f32 %v68, 0.0
    %v73 = vmax.f32 %v69, 0.0
    %v74 = vmax.f32 %v70, 0.0
    %v75 = vadd.f32 %v49, %v71
    %v76 = vadd.f32 %v50, %v72
    %v77 = vadd.f32 %v51, %v73
    %v78 = vadd.f32 %v52, %v74
    %vm79 = vcmask 261120
    %80 = vst.msk [vmem:[#allocation2] sm:$0xff] %vm79, %v75
    %81 = vst.msk [vmem:[#allocation2 + $0x8] sm:$0xff] %vm79, %v76
    %82 = vst.msk [vmem:[#allocation2 + $0x10] sm:$0xff] %vm79, %v77
    %83 = vst.msk [vmem:[#allocation2 + $0x18] sm:$0xff] %vm79, %v78
    // Predicated region
    $region26: #{gt_forward.13} parent=1 // pred_check
      _
    $region27: #{gt_forward.13} parent=1 // pred_check_branch
      %85 = sbr.rel (0) target = $region29
    $region28: #{gt_forward.13} parent=1 // pred_region
      %87 = vsyncadd [#allocation3], 0
      %s88 = sshll.u32 [#allocation2], 4
      %s89 = int_to_ptr.vmem [resolvable:$true] %s88
      %s90 = sshll.u32 %s6, 4
      %s91 = int_to_ptr.hbm [resolvable:$true] %s90
      %96 = dma.vmem_to_hbm [thread:$0]  %s89, 512, %s91, [#allocation3], 128, 128, 8
    $region29: #{gt_forward.13} parent=1 // pred_fallthru
      _
    // Predicated region
    $region30: #{gt_forward.13} parent=1 // pred_check
      _
    $region31: #{gt_forward.13} parent=1 // pred_check_branch
      %98 = sbr.rel (0) target = $region33
    $region32: #{gt_forward.13} parent=1 // pred_region
      %100 = dma.done [#allocation3], 512
    $region33: #{gt_forward.13} parent=1 // pred_fallthru
      _
    %101 = vsyncpa [#allocation3], 1

</llo_original>
